<compile_context>
chip_gen: v7x
topology: tpu7x:2x2x1
jax: 0.10.0
libtpu: 0.0.40
codegen_flags: <defaults>
</compile_context>

<pallas_src>
import functools
import math

import jax
import jax.numpy as jnp
from jax.experimental import pallas as pl
from jax.experimental.pallas import tpu as pltpu

_HALF_PI = 0.5 * math.pi


# --------------------------------------------------------------------------
# in-kernel acos (cephes asinf-style: only mul/add/sqrt/select -> always lowers)
# max abs error ~1.2e-7 rad; inputs clamped to [-1, 1] to avoid the NaN the
# torch reference can hit when f32 rounding pushes |cosine| slightly above 1.
# --------------------------------------------------------------------------
def _acos(x):
    x = jnp.clip(x, -1.0, 1.0)
    ax = jnp.abs(x)
    big = ax > 0.5
    z = jnp.where(big, 0.5 * (1.0 - ax), ax * ax)
    t = jnp.where(big, jnp.sqrt(z), ax)
    p = ((((4.2163199048e-2 * z + 2.4181311049e-2) * z + 4.5470025998e-2) * z
          + 7.4953002686e-2) * z + 1.6666752422e-1)
    r = t + t * z * p                      # asin of the reduced argument
    asin_ax = jnp.where(big, _HALF_PI - 2.0 * r, r)
    asin_x = jnp.where(x < 0.0, -asin_ax, asin_ax)
    return _HALF_PI - asin_x


# --------------------------------------------------------------------------
# fused SFace kernel
# grid = (batch_tiles, class_tiles); class axis is the reduction ("arbitrary")
# --------------------------------------------------------------------------
def _sface_kernel(x_ref, wn_ref, lbl_ref, out_ref, stats_ref,
                  xn_sc, wyix_sc, inter_sc, wjs_sc,
                  *, s, k, a, b):
    j = pl.program_id(1)
    nj = pl.num_programs(1)
    tm, tn = out_ref.shape

    # ---- per-batch-tile init: normalize x rows once, zero accumulators ----
    @pl.when(j == 0)
    def _init():
        x = x_ref[...].astype(jnp.float32)
        ss = jnp.sum(x * x, axis=-1, keepdims=True)
        xn = x * jax.lax.rsqrt(jnp.maximum(ss, 1e-24))  # F.normalize (eps=1e-12)
        xn_sc[...] = xn.astype(xn_sc.dtype)
        wyix_sc[...] = jnp.zeros_like(wyix_sc)
        inter_sc[...] = jnp.zeros_like(inter_sc)
        wjs_sc[...] = jnp.zeros_like(wjs_sc)

    # ---- cosine for this class tile (W pre-normalized & K-major -> plain NN dot) --
    cos = jnp.dot(xn_sc[...], wn_ref[...],
                  preferred_element_type=jnp.float32)        # (tm, tn) f32
    out_ref[...] = cos * s                                   # output = cosine * s

    # ---- one_hot / zero_hot via label comparison (torch scatter_ equivalent) ----
    col = jax.lax.broadcasted_iota(jnp.int32, (tm, tn), 1) + j * tn
    is_target = col == lbl_ref[...]                          # (tm, tn)
    cos_j = jnp.where(is_target, 0.0, cos)                   # zero_hot * cosine
    cos_yi = cos - cos_j                                     # one_hot  * cosine

    # inter-class re-weighting (no-grad branch in torch):
    #   weight_j = 1 / (1 + exp(k*(acos(cos_j) - b)))
    theta_j = _acos(cos_j)
    z = jnp.minimum(k * (theta_j - b), 30.0)                 # clamp: avoid inf exp
    weight_j = pl.reciprocal(1.0 + jnp.exp(z), approx=True)  # EUP, off the VALU path
    wj_term = weight_j * cos_j

    # lane-dense (tm,128) partial sums: pure VALU adds per 128-lane group now,
    # single cross-lane (XLU) reduction in the finalize.
    wyix_acc = wyix_sc[...]
    inter_acc = inter_sc[...]
    wjs_acc = wjs_sc[...]
    for g in range(tn // 128):
        lo = g * 128
        wyix_acc = wyix_acc + cos_yi[:, lo:lo + 128]
        inter_acc = inter_acc + wj_term[:, lo:lo + 128]
        wjs_acc = wjs_acc + cos_j[:, lo:lo + 128]
    wyix_sc[...] = wyix_acc
    inter_sc[...] = inter_acc
    wjs_sc[...] = wjs_acc

    # ---- finalize: intra branch needs the full-row target cosine -> last tile ----
    @pl.when(j == nj - 1)
    def _finalize():
        cyi = jnp.sum(wyix_sc[...], axis=-1, keepdims=True)       # cos at target
        inter = s * jnp.sum(inter_sc[...], axis=-1, keepdims=True)
        wjsum = jnp.sum(wjs_sc[...], axis=-1, keepdims=True)      # sum_j cos_j
        theta_yi = _acos(cyi)
        weight_yi = 1.0 / (1.0 + jnp.exp(-k * (theta_yi - a)))
        intra = -weight_yi * (s * cyi)
        # lane-dense (tm,128) stats slab; lanes 0..3 carry per-row
        # [intra, inter, cos_yi, sum_j cos_j]; remaining lanes are 0.
        lane = jax.lax.broadcasted_iota(jnp.int32, stats_ref.shape, 1)
        stats_ref[...] = (jnp.where(lane == 0, intra, 0.0)
                          + jnp.where(lane == 1, inter, 0.0)
                          + jnp.where(lane == 2, cyi, 0.0)
                          + jnp.where(lane == 3, wjsum, 0.0))


# --------------------------------------------------------------------------
# wrapper helpers
# --------------------------------------------------------------------------
def _round_up(n, m):
    return ((n + m - 1) // m) * m


def _vmem_capacity_bytes():
    # Per-generation VMEM: 128 MiB on v5e/v6e, 64 MiB per TensorCore on v7x.
    try:
        return int(pltpu.get_tpu_info().vmem_capacity_bytes)
    except Exception:
        return 64 * 1024 * 1024          # conservative fallback (v7x)


def _pick_tm(batch):
    bp = _round_up(batch, 8)
    if bp >= 256:
        return 128                        # >=2 tiles of 128 rows, MXU-friendly
    if bp >= 16:
        # split into two tiles so both v7x TensorCores get work on the
        # "parallel" batch axis; keeps W HBM traffic low (large tm).
        return _round_up((bp + 1) // 2, 8)
    return bp                             # tiny batch: one 8-row tile


def _pick_tn(c, kdim, tm, w_itemsize, budget_bytes):
    cp_min = _round_up(c, 128)
    # cap class-padding waste at ~25% extra columns
    max_cp = max(128, int(cp_min * 1.25))
    for cand in (2048, 1024, 512, 256, 128):
        if cand != 128 and _round_up(c, cand) > max_cp:
            continue
        footprint = (2 * cand * kdim * w_itemsize      # double-buffered W tile
                     + 2 * tm * cand * 4               # double-buffered out tile
                     + 2 * tm * kdim * 4               # double-buffered x tile
                     + 2 * tm * 128 * 4                # stats tile
                     + tm * kdim * 4 + 3 * tm * 128 * 4)   # VMEM scratch
        if footprint <= budget_bytes:
            return cand
    return 128


# --------------------------------------------------------------------------
# wrapper
# --------------------------------------------------------------------------
def sface_forward(x, label, weight, *, s=64.0, k=80.0, a=0.8, b=1.22,
                  mxu_dtype=jnp.float32, interpret=False):
    """SFaceLoss.forward (device_id=None branch) as a single fused Pallas kernel.

    Returns (output, loss, intra_loss.mean(), inter_loss.mean(),
             Wyi_s.mean(), Wj_s.mean()) — same tuple as the PyTorch module.
    """
    x = x.astype(jnp.float32)
    weight = weight.astype(jnp.float32)
    B, K = x.shape
    C, K2 = weight.shape
    assert K == K2, "weight must be (out_features, in_features)"

    # ---- per-generation tile sizing -------------------------------------------
    vmem_cap = _vmem_capacity_bytes()
    vmem_limit = int(min(vmem_cap * 3 // 4, 96 * 1024 * 1024))
    tile_budget = int(vmem_limit * 0.7)           # headroom for compiler scratch

    tm = _pick_tm(B)
    w_itemsize = jnp.dtype(mxu_dtype).itemsize
    tn = _pick_tn(C, K, tm, w_itemsize, tile_budget)

    Bp = _round_up(B, tm)
    Cp = _round_up(C, tn)
    grid = (Bp // tm, Cp // tn)
    # TODO(synk): tile the in_features (K) axis as well for very large embedding
    # dims; typical face-embedding dims (<=1024) fit in one block.

    # ---- prepare inputs (pad only when misaligned) -----------------------------
    lbl = label.astype(jnp.int32).reshape(B, 1)
    if Bp != B:
        x = jnp.pad(x, ((0, Bp - B), (0, 0)))
        lbl = jnp.pad(lbl, ((0, Bp - B), (0, 0)))

    # Pre-normalize W once (outside the kernel), store K-major so the kernel does
    # a plain NN matmul with no per-tile re-normalization / transposition.
    # Zero-padded rows/columns normalize to exactly 0 and contribute 0 everywhere.
    # TODO(synk): in a training loop, cache this normalized/transposed weight.
    wss = jnp.sum(weight * weight, axis=-1, keepdims=True)
    wn = weight * jax.lax.rsqrt(jnp.maximum(wss, 1e-24))
    if Cp != C:
        wn = jnp.pad(wn, ((0, Cp - C), (0, 0)))
    wn_t = wn.T.astype(mxu_dtype)                 # (K, Cp), K-major for the MXU

    kernel = functools.partial(_sface_kernel, s=float(s), k=float(k),
                               a=float(a), b=float(b))

    out, stats = pl.pallas_call(
        kernel,
        grid=grid,
        in_specs=[
            pl.BlockSpec((tm, K), lambda i, j: (i, 0)),     # x rows
            pl.BlockSpec((K, tn), lambda i, j: (0, j)),     # pre-normalized W.T
            pl.BlockSpec((tm, 1), lambda i, j: (i, 0)),     # labels
        ],
        out_specs=(
            pl.BlockSpec((tm, tn), lambda i, j: (i, j)),    # output = s*cosine
            pl.BlockSpec((tm, 128), lambda i, j: (i, 0)),   # per-row stats slab
        ),
        out_shape=(
            jax.ShapeDtypeStruct((Bp, Cp), jnp.float32),
            jax.ShapeDtypeStruct((Bp, 128), jnp.float32),
        ),
        scratch_shapes=[
            pltpu.VMEM((tm, K), mxu_dtype),      # cached normalized x rows
            pltpu.VMEM((tm, 128), jnp.float32),  # target-cos lane partial sums
            pltpu.VMEM((tm, 128), jnp.float32),  # inter-loss lane partial sums
            pltpu.VMEM((tm, 128), jnp.float32),  # sum(cos_j) lane partial sums
        ],
        compiler_params=pltpu.CompilerParams(
            dimension_semantics=("parallel", "arbitrary"),
            vmem_limit_bytes=vmem_limit,
        ),
        interpret=interpret,
    )(x, wn_t, lbl)

    output = out if (Bp == B and Cp == C) else out[:B, :C]
    st = stats if Bp == B else stats[:B]
    # final means: O(B) trivial scalar reductions outside the kernel.
    intra_mean = jnp.mean(st[:, 0])
    inter_mean = jnp.mean(st[:, 1])
    loss = intra_mean + inter_mean
    wyi_s_mean = jnp.mean(st[:, 2])
    wj_s_mean = jnp.sum(st[:, 3]) / (B * C)
    return output, loss, intra_mean, inter_mean, wyi_s_mean, wj_s_mean


# --------------------------------------------------------------------------
# pure-JAX references (for in-script correctness checks)
# --------------------------------------------------------------------------
def _reference_stats(output, label, *, s, k, a, b):
    C = output.shape[1]
    one_hot = jax.nn.one_hot(label, C, dtype=output.dtype)
    zero_hot = 1.0 - one_hot
    WyiX = jnp.sum(one_hot * output, axis=1)
    theta_yi = jnp.arccos(jnp.clip(WyiX / s, -1.0, 1.0))
    weight_yi = 1.0 / (1.0 + jnp.exp(-k * (theta_yi - a)))
    intra = -weight_yi * WyiX
    Wj = zero_hot * output
    theta_j = jnp.arccos(jnp.clip(Wj / s, -1.0, 1.0))
    weight_j = 1.0 / (1.0 + jnp.exp(k * (theta_j - b)))
    inter = jnp.sum(weight_j * Wj, axis=1)
    return (intra.mean() + inter.mean(), intra.mean(), inter.mean(),
            (WyiX / s).mean(), (Wj / s).mean())


def _reference_output(x, weight, *, s):
    xn = x / jnp.maximum(jnp.linalg.norm(x, axis=1, keepdims=True), 1e-12)
    wn = weight / jnp.maximum(jnp.linalg.norm(weight, axis=1, keepdims=True), 1e-12)
    return s * jnp.dot(xn, wn.T, precision=jax.lax.Precision.HIGHEST)


# --------------------------------------------------------------------------
# main
# --------------------------------------------------------------------------
if __name__ == "__main__":
    key = jax.random.PRNGKey(0)
    kx, kw, kl = jax.random.split(key, 3)

    # small but TPU-shaped problem: 16 embeddings of dim 256, 2048 classes
    B, IN_F, OUT_F = 16, 256, 2048
    S, Kp, A, Bb = 64.0, 80.0, 0.8, 1.22

    x = jax.random.normal(kx, (B, IN_F), jnp.float32)
    # xavier_uniform-style init with gain=2 (matches the torch module's intent)
    bound = 2.0 * math.sqrt(6.0 / (IN_F + OUT_F))
    w = jax.random.uniform(kw, (OUT_F, IN_F), jnp.float32, -bound, bound)
    label = jax.random.randint(kl, (B,), 0, OUT_F, jnp.int32)

    fwd = jax.jit(functools.partial(sface_forward, s=S, k=Kp, a=A, b=Bb))
    output, loss, intra_m, inter_m, wyi_s_m, wj_s_m = fwd(x, label, w)
    jax.block_until_ready((output, loss, intra_m, inter_m, wyi_s_m, wj_s_m))

    # shape / finiteness checks
    assert output.shape == (B, OUT_F) and output.dtype == jnp.float32
    for v in (loss, intra_m, inter_m, wyi_s_m, wj_s_m):
        assert v.shape == ()
    assert bool(jnp.all(jnp.isfinite(output)))
    assert bool(jnp.isfinite(loss))

    # 1) loss/statistics path checked against a plain-JAX reference that consumes
    #    the kernel's own logits (isolates acos/sigmoid/reduction math).
    refs = _reference_stats(output, label, s=S, k=Kp, a=A, b=Bb)
    got = (loss, intra_m, inter_m, wyi_s_m, wj_s_m)
    for g, r in zip(got, refs):
        g, r = float(g), float(r)
        assert abs(g - r) <= 2e-3 + 2e-3 * abs(r), f"stat mismatch: {g} vs {r}"

    # 2) cosine/matmul path gross-error check against a full f32 reference.
    ref_out = _reference_output(x, w, s=S)
    max_diff = float(jnp.max(jnp.abs(output - ref_out)))
    assert max_diff < 0.5, f"output mismatch, max abs diff {max_diff}"

    print("KERNEL_OK")
</pallas_src>

<mosaic_0001>
module attributes {stable_mosaic.version = 11 : i64} {
  func.func @_sface_kernel(%arg0: i32, %arg1: i32, %arg2: memref<8x256xf32, #tpu.memory_space<vmem>>, %arg3: memref<256x2048xf32, #tpu.memory_space<vmem>>, %arg4: memref<8x1xi32, #tpu.memory_space<vmem>>, %arg5: memref<8x2048xf32, #tpu.memory_space<vmem>>, %arg6: memref<8x128xf32, #tpu.memory_space<vmem>>, %arg7: memref<8x256xf32, #tpu.memory_space<vmem>>, %arg8: memref<8x128xf32, #tpu.memory_space<vmem>>, %arg9: memref<8x128xf32, #tpu.memory_space<vmem>>, %arg10: memref<8x128xf32, #tpu.memory_space<vmem>>) attributes {dimension_semantics = [#tpu.dimension_semantics<parallel>, #tpu.dimension_semantics<arbitrary>], iteration_bounds = array<i64: 2, 1>, scalar_prefetch = 0 : i64, scratch_operands = 4 : i64, tpu.core_type = #tpu.core_type<tc>, window_params = [{transform_indices = @transform_0, window_bounds = array<i64: 8, 256>}, {transform_indices = @transform_1, window_bounds = array<i64: 256, 2048>}, {transform_indices = @transform_2, window_bounds = array<i64: 8, 1>}, {transform_indices = @transform_3, window_bounds = array<i64: 8, 2048>}, {transform_indices = @transform_4, window_bounds = array<i64: 8, 128>}]} {
    %c0_i32 = arith.constant 0 : i32
    %0 = arith.cmpi eq, %arg1, %c0_i32 : i32
    %1 = arith.extui %0 : i1 to i32
    %c0_i32_0 = arith.constant 0 : i32
    %2 = arith.cmpi ne, %1, %c0_i32_0 : i32
    scf.if %2 {
      %c0_43 = arith.constant 0 : index
      %c0_44 = arith.constant 0 : index
      %178 = vector.load %arg2[%c0_43, %c0_44] : memref<8x256xf32, #tpu.memory_space<vmem>>, vector<8x256xf32>
      %179 = arith.mulf %178, %178 : vector<8x256xf32>
      %cst_45 = arith.constant dense<0.000000e+00> : vector<8xf32>
      %180 = vector.multi_reduction <add>, %179, %cst_45 [1] : vector<8x256xf32> to vector<8xf32>
      %181 = vector.shape_cast %180 : vector<8xf32> to vector<8x1xf32>
      %cst_46 = arith.constant 1.000000e-24 : f32
      %182 = vector.broadcast %cst_46 : f32 to vector<8x1xf32>
      %183 = arith.maximumf %181, %182 : vector<8x1xf32>
      %184 = math.rsqrt %183 : vector<8x1xf32>
      %185 = vector.broadcast %184 : vector<8x1xf32> to vector<8x256xf32>
      %186 = arith.mulf %178, %185 : vector<8x256xf32>
      %c0_47 = arith.constant 0 : index
      %c0_48 = arith.constant 0 : index
      %187 = vector.load %arg7[%c0_47, %c0_48] : memref<8x256xf32, #tpu.memory_space<vmem>>, vector<8x256xf32>
      tpu.vector_store %arg7[%c0_47, %c0_48], %186 {strides = array<i32>} : memref<8x256xf32, #tpu.memory_space<vmem>>, vector<8x256xf32>,
      %cst_49 = arith.constant 0.000000e+00 : f32
      %188 = vector.broadcast %cst_49 : f32 to vector<8x128xf32>
      %c0_50 = arith.constant 0 : index
      %c0_51 = arith.constant 0 : index
      %189 = vector.load %arg8[%c0_50, %c0_51] : memref<8x128xf32, #tpu.memory_space<vmem>>, vector<8x128xf32>
      tpu.vector_store %arg8[%c0_50, %c0_51], %188 {strides = array<i32>} : memref<8x128xf32, #tpu.memory_space<vmem>>, vector<8x128xf32>,
      %cst_52 = arith.constant 0.000000e+00 : f32
      %190 = vector.broadcast %cst_52 : f32 to vector<8x128xf32>
      %c0_53 = arith.constant 0 : index
      %c0_54 = arith.constant 0 : index
      %191 = vector.load %arg9[%c0_53, %c0_54] : memref<8x128xf32, #tpu.memory_space<vmem>>, vector<8x128xf32>
      tpu.vector_store %arg9[%c0_53, %c0_54], %190 {strides = array<i32>} : memref<8x128xf32, #tpu.memory_space<vmem>>, vector<8x128xf32>,
      %cst_55 = arith.constant 0.000000e+00 : f32
      %192 = vector.broadcast %cst_55 : f32 to vector<8x128xf32>
      %c0_56 = arith.constant 0 : index
      %c0_57 = arith.constant 0 : index
      %193 = vector.load %arg10[%c0_56, %c0_57] : memref<8x128xf32, #tpu.memory_space<vmem>>, vector<8x128xf32>
      tpu.vector_store %arg10[%c0_56, %c0_57], %192 {strides = array<i32>} : memref<8x128xf32, #tpu.memory_space<vmem>>, vector<8x128xf32>,
    } else {
    }
    %c0 = arith.constant 0 : index
    %c0_1 = arith.constant 0 : index
    %3 = vector.load %arg7[%c0, %c0_1] : memref<8x256xf32, #tpu.memory_space<vmem>>, vector<8x256xf32>
    %c0_2 = arith.constant 0 : index
    %c0_3 = arith.constant 0 : index
    %4 = vector.load %arg3[%c0_2, %c0_3] : memref<256x2048xf32, #tpu.memory_space<vmem>>, vector<256x2048xf32>
    %cst = arith.constant dense<0.000000e+00> : vector<8x2048xf32>
    %5 = tpu.matmul %3, %4, %cst {dimension_numbers = #tpu.dot_dimension_numbers<[1], [0], [0], [1], [0, 0, 1, 1], [], []>} : vector<8x256xf32>, vector<256x2048xf32>, vector<8x2048xf32> -> vector<8x2048xf32>
    %cst_4 = arith.constant 6.400000e+01 : f32
    %6 = vector.broadcast %cst_4 : f32 to vector<8x2048xf32>
    %7 = arith.mulf %5, %6 : vector<8x2048xf32>
    %c0_5 = arith.constant 0 : index
    %c0_6 = arith.constant 0 : index
    %8 = vector.load %arg5[%c0_5, %c0_6] : memref<8x2048xf32, #tpu.memory_space<vmem>>, vector<8x2048xf32>
    tpu.vector_store %arg5[%c0_5, %c0_6], %7 {strides = array<i32>} : memref<8x2048xf32, #tpu.memory_space<vmem>>, vector<8x2048xf32>,
    %9 = tpu.iota {dimensions = array<i32: 1>} : vector<8x2048xi32>
    %c2048_i32 = arith.constant 2048 : i32
    %10 = arith.muli %arg1, %c2048_i32 : i32
    %11 = vector.broadcast %10 : i32 to vector<8x2048xi32>
    %12 = arith.addi %9, %11 : vector<8x2048xi32>
    %c0_7 = arith.constant 0 : index
    %c0_8 = arith.constant 0 : index
    %13 = vector.load %arg4[%c0_7, %c0_8] : memref<8x1xi32, #tpu.memory_space<vmem>>, vector<8x1xi32>
    %14 = vector.broadcast %13 : vector<8x1xi32> to vector<8x2048xi32>
    %15 = arith.cmpi eq, %12, %14 : vector<8x2048xi32>
    %cst_9 = arith.constant 0.000000e+00 : f32
    %16 = vector.broadcast %cst_9 : f32 to vector<8x2048xf32>
    %17 = arith.select %15, %16, %5 : vector<8x2048xi1>, vector<8x2048xf32>
    %18 = arith.subf %5, %17 : vector<8x2048xf32>
    %cst_10 = arith.constant -1.000000e+00 : f32
    %cst_11 = arith.constant 1.000000e+00 : f32
    %19 = vector.broadcast %cst_10 : f32 to vector<8x2048xf32>
    %20 = arith.maximumf %19, %17 : vector<8x2048xf32>
    %21 = vector.broadcast %cst_11 : f32 to vector<8x2048xf32>
    %22 = arith.minimumf %21, %20 : vector<8x2048xf32>
    %23 = math.absf %22 : vector<8x2048xf32>
    %cst_12 = arith.constant 5.000000e-01 : f32
    %24 = vector.broadcast %cst_12 : f32 to vector<8x2048xf32>
    %25 = arith.cmpf ogt, %23, %24 : vector<8x2048xf32>
    %cst_13 = arith.constant 1.000000e+00 : f32
    %26 = vector.broadcast %cst_13 : f32 to vector<8x2048xf32>
    %27 = arith.subf %26, %23 : vector<8x2048xf32>
    %cst_14 = arith.constant 5.000000e-01 : f32
    %28 = vector.broadcast %cst_14 : f32 to vector<8x2048xf32>
    %29 = arith.mulf %28, %27 : vector<8x2048xf32>
    %30 = arith.mulf %23, %23 : vector<8x2048xf32>
    %31 = arith.select %25, %29, %30 : vector<8x2048xi1>, vector<8x2048xf32>
    %32 = math.sqrt %31 : vector<8x2048xf32>
    %33 = arith.select %25, %32, %23 : vector<8x2048xi1>, vector<8x2048xf32>
    %cst_15 = arith.constant 4.216320e-02 : f32
    %34 = vector.broadcast %cst_15 : f32 to vector<8x2048xf32>
    %35 = arith.mulf %34, %31 : vector<8x2048xf32>
    %cst_16 = arith.constant 0.024181312 : f32
    %36 = vector.broadcast %cst_16 : f32 to vector<8x2048xf32>
    %37 = arith.addf %35, %36 : vector<8x2048xf32>
    %38 = arith.mulf %37, %31 : vector<8x2048xf32>
    %cst_17 = arith.constant 0.0454700254 : f32
    %39 = vector.broadcast %cst_17 : f32 to vector<8x2048xf32>
    %40 = arith.addf %38, %39 : vector<8x2048xf32>
    %41 = arith.mulf %40, %31 : vector<8x2048xf32>
    %cst_18 = arith.constant 0.0749530047 : f32
    %42 = vector.broadcast %cst_18 : f32 to vector<8x2048xf32>
    %43 = arith.addf %41, %42 : vector<8x2048xf32>
    %44 = arith.mulf %43, %31 : vector<8x2048xf32>
    %cst_19 = arith.constant 0.166667521 : f32
    %45 = vector.broadcast %cst_19 : f32 to vector<8x2048xf32>
    %46 = arith.addf %44, %45 : vector<8x2048xf32>
    %47 = arith.mulf %33, %31 : vector<8x2048xf32>
    %48 = arith.mulf %47, %46 : vector<8x2048xf32>
    %49 = arith.addf %33, %48 : vector<8x2048xf32>
    %cst_20 = arith.constant 2.000000e+00 : f32
    %50 = vector.broadcast %cst_20 : f32 to vector<8x2048xf32>
    %51 = arith.mulf %50, %49 : vector<8x2048xf32>
    %cst_21 = arith.constant 1.57079637 : f32
    %52 = vector.broadcast %cst_21 : f32 to vector<8x2048xf32>
    %53 = arith.subf %52, %51 : vector<8x2048xf32>
    %54 = arith.select %25, %53, %49 : vector<8x2048xi1>, vector<8x2048xf32>
    %cst_22 = arith.constant 0.000000e+00 : f32
    %55 = vector.broadcast %cst_22 : f32 to vector<8x2048xf32>
    %56 = arith.cmpf olt, %22, %55 : vector<8x2048xf32>
    %cst_23 = arith.constant 0.000000e+00 : f32
    %57 = vector.broadcast %cst_23 : f32 to vector<8x2048xf32>
    %58 = arith.subf %57, %54 : vector<8x2048xf32>
    %59 = arith.select %56, %58, %54 : vector<8x2048xi1>, vector<8x2048xf32>
    %cst_24 = arith.constant 1.57079637 : f32
    %60 = vector.broadcast %cst_24 : f32 to vector<8x2048xf32>
    %61 = arith.subf %60, %59 : vector<8x2048xf32>
    %cst_25 = arith.constant 1.220000e+00 : f32
    %62 = vector.broadcast %cst_25 : f32 to vector<8x2048xf32>
    %63 = arith.subf %61, %62 : vector<8x2048xf32>
    %cst_26 = arith.constant 8.000000e+01 : f32
    %64 = vector.broadcast %cst_26 : f32 to vector<8x2048xf32>
    %65 = arith.mulf %64, %63 : vector<8x2048xf32>
    %cst_27 = arith.constant 3.000000e+01 : f32
    %66 = vector.broadcast %cst_27 : f32 to vector<8x2048xf32>
    %67 = arith.minimumf %65, %66 : vector<8x2048xf32>
    %68 = math.exp %67 : vector<8x2048xf32>
    %cst_28 = arith.constant 1.000000e+00 : f32
    %69 = vector.broadcast %cst_28 : f32 to vector<8x2048xf32>
    %70 = arith.addf %69, %68 : vector<8x2048xf32>
    %71 = tpu.reciprocal %70 {approx = true} : vector<8x2048xf32> -> vector<8x2048xf32>
    %72 = arith.mulf %71, %17 : vector<8x2048xf32>
    %c0_29 = arith.constant 0 : index
    %c0_30 = arith.constant 0 : index
    %73 = vector.load %arg8[%c0_29, %c0_30] : memref<8x128xf32, #tpu.memory_space<vmem>>, vector<8x128xf32>
    %c0_31 = arith.constant 0 : index
    %c0_32 = arith.constant 0 : index
    %74 = vector.load %arg9[%c0_31, %c0_32] : memref<8x128xf32, #tpu.memory_space<vmem>>, vector<8x128xf32>
    %c0_33 = arith.constant 0 : index
    %c0_34 = arith.constant 0 : index
    %75 = vector.load %arg10[%c0_33, %c0_34] : memref<8x128xf32, #tpu.memory_space<vmem>>, vector<8x128xf32>
    %76 = vector.extract_strided_slice %18 {offsets = [0, 0], sizes = [8, 128], strides = [1, 1]} : vector<8x2048xf32> to vector<8x128xf32>
    %77 = arith.addf %73, %76 : vector<8x128xf32>
    %78 = vector.extract_strided_slice %72 {offsets = [0, 0], sizes = [8, 128], strides = [1, 1]} : vector<8x2048xf32> to vector<8x128xf32>
    %79 = arith.addf %74, %78 : vector<8x128xf32>
    %80 = vector.extract_strided_slice %17 {offsets = [0, 0], sizes = [8, 128], strides = [1, 1]} : vector<8x2048xf32> to vector<8x128xf32>
    %81 = arith.addf %75, %80 : vector<8x128xf32>
    %82 = vector.extract_strided_slice %18 {offsets = [0, 128], sizes = [8, 128], strides = [1, 1]} : vector<8x2048xf32> to vector<8x128xf32>
    %83 = arith.addf %77, %82 : vector<8x128xf32>
    %84 = vector.extract_strided_slice %72 {offsets = [0, 128], sizes = [8, 128], strides = [1, 1]} : vector<8x2048xf32> to vector<8x128xf32>
    %85 = arith.addf %79, %84 : vector<8x128xf32>
    %86 = vector.extract_strided_slice %17 {offsets = [0, 128], sizes = [8, 128], strides = [1, 1]} : vector<8x2048xf32> to vector<8x128xf32>
    %87 = arith.addf %81, %86 : vector<8x128xf32>
    %88 = vector.extract_strided_slice %18 {offsets = [0, 256], sizes = [8, 128], strides = [1, 1]} : vector<8x2048xf32> to vector<8x128xf32>
    %89 = arith.addf %83, %88 : vector<8x128xf32>
    %90 = vector.extract_strided_slice %72 {offsets = [0, 256], sizes = [8, 128], strides = [1, 1]} : vector<8x2048xf32> to vector<8x128xf32>
    %91 = arith.addf %85, %90 : vector<8x128xf32>
    %92 = vector.extract_strided_slice %17 {offsets = [0, 256], sizes = [8, 128], strides = [1, 1]} : vector<8x2048xf32> to vector<8x128xf32>
    %93 = arith.addf %87, %92 : vector<8x128xf32>
    %94 = vector.extract_strided_slice %18 {offsets = [0, 384], sizes = [8, 128], strides = [1, 1]} : vector<8x2048xf32> to vector<8x128xf32>
    %95 = arith.addf %89, %94 : vector<8x128xf32>
    %96 = vector.extract_strided_slice %72 {offsets = [0, 384], sizes = [8, 128], strides = [1, 1]} : vector<8x2048xf32> to vector<8x128xf32>
    %97 = arith.addf %91, %96 : vector<8x128xf32>
    %98 = vector.extract_strided_slice %17 {offsets = [0, 384], sizes = [8, 128], strides = [1, 1]} : vector<8x2048xf32> to vector<8x128xf32>
    %99 = arith.addf %93, %98 : vector<8x128xf32>
    %100 = vector.extract_strided_slice %18 {offsets = [0, 512], sizes = [8, 128], strides = [1, 1]} : vector<8x2048xf32> to vector<8x128xf32>
    %101 = arith.addf %95, %100 : vector<8x128xf32>
    %102 = vector.extract_strided_slice %72 {offsets = [0, 512], sizes = [8, 128], strides = [1, 1]} : vector<8x2048xf32> to vector<8x128xf32>
    %103 = arith.addf %97, %102 : vector<8x128xf32>
    %104 = vector.extract_strided_slice %17 {offsets = [0, 512], sizes = [8, 128], strides = [1, 1]} : vector<8x2048xf32> to vector<8x128xf32>
    %105 = arith.addf %99, %104 : vector<8x128xf32>
    %106 = vector.extract_strided_slice %18 {offsets = [0, 640], sizes = [8, 128], strides = [1, 1]} : vector<8x2048xf32> to vector<8x128xf32>
    %107 = arith.addf %101, %106 : vector<8x128xf32>
    %108 = vector.extract_strided_slice %72 {offsets = [0, 640], sizes = [8, 128], strides = [1, 1]} : vector<8x2048xf32> to vector<8x128xf32>
    %109 = arith.addf %103, %108 : vector<8x128xf32>
    %110 = vector.extract_strided_slice %17 {offsets = [0, 640], sizes = [8, 128], strides = [1, 1]} : vector<8x2048xf32> to vector<8x128xf32>
    %111 = arith.addf %105, %110 : vector<8x128xf32>
    %112 = vector.extract_strided_slice %18 {offsets = [0, 768], sizes = [8, 128], strides = [1, 1]} : vector<8x2048xf32> to vector<8x128xf32>
    %113 = arith.addf %107, %112 : vector<8x128xf32>
    %114 = vector.extract_strided_slice %72 {offsets = [0, 768], sizes = [8, 128], strides = [1, 1]} : vector<8x2048xf32> to vector<8x128xf32>
    %115 = arith.addf %109, %114 : vector<8x128xf32>
    %116 = vector.extract_strided_slice %17 {offsets = [0, 768], sizes = [8, 128], strides = [1, 1]} : vector<8x2048xf32> to vector<8x128xf32>
    %117 = arith.addf %111, %116 : vector<8x128xf32>
    %118 = vector.extract_strided_slice %18 {offsets = [0, 896], sizes = [8, 128], strides = [1, 1]} : vector<8x2048xf32> to vector<8x128xf32>
    %119 = arith.addf %113, %118 : vector<8x128xf32>
    %120 = vector.extract_strided_slice %72 {offsets = [0, 896], sizes = [8, 128], strides = [1, 1]} : vector<8x2048xf32> to vector<8x128xf32>
    %121 = arith.addf %115, %120 : vector<8x128xf32>
    %122 = vector.extract_strided_slice %17 {offsets = [0, 896], sizes = [8, 128], strides = [1, 1]} : vector<8x2048xf32> to vector<8x128xf32>
    %123 = arith.addf %117, %122 : vector<8x128xf32>
    %124 = vector.extract_strided_slice %18 {offsets = [0, 1024], sizes = [8, 128], strides = [1, 1]} : vector<8x2048xf32> to vector<8x128xf32>
    %125 = arith.addf %119, %124 : vector<8x128xf32>
    %126 = vector.extract_strided_slice %72 {offsets = [0, 1024], sizes = [8, 128], strides = [1, 1]} : vector<8x2048xf32> to vector<8x128xf32>
    %127 = arith.addf %121, %126 : vector<8x128xf32>
    %128 = vector.extract_strided_slice %17 {offsets = [0, 1024], sizes = [8, 128], strides = [1, 1]} : vector<8x2048xf32> to vector<8x128xf32>
    %129 = arith.addf %123, %128 : vector<8x128xf32>
    %130 = vector.extract_strided_slice %18 {offsets = [0, 1152], sizes = [8, 128], strides = [1, 1]} : vector<8x2048xf32> to vector<8x128xf32>
    %131 = arith.addf %125, %130 : vector<8x128xf32>
    %132 = vector.extract_strided_slice %72 {offsets = [0, 1152], sizes = [8, 128], strides = [1, 1]} : vector<8x2048xf32> to vector<8x128xf32>
    %133 = arith.addf %127, %132 : vector<8x128xf32>
    %134 = vector.extract_strided_slice %17 {offsets = [0, 1152], sizes = [8, 128], strides = [1, 1]} : vector<8x2048xf32> to vector<8x128xf32>
    %135 = arith.addf %129, %134 : vector<8x128xf32>
    %136 = vector.extract_strided_slice %18 {offsets = [0, 1280], sizes = [8, 128], strides = [1, 1]} : vector<8x2048xf32> to vector<8x128xf32>
    %137 = arith.addf %131, %136 : vector<8x128xf32>
    %138 = vector.extract_strided_slice %72 {offsets = [0, 1280], sizes = [8, 128], strides = [1, 1]} : vector<8x2048xf32> to vector<8x128xf32>
    %139 = arith.addf %133, %138 : vector<8x128xf32>
    %140 = vector.extract_strided_slice %17 {offsets = [0, 1280], sizes = [8, 128], strides = [1, 1]} : vector<8x2048xf32> to vector<8x128xf32>
    %141 = arith.addf %135, %140 : vector<8x128xf32>
    %142 = vector.extract_strided_slice %18 {offsets = [0, 1408], sizes = [8, 128], strides = [1, 1]} : vector<8x2048xf32> to vector<8x128xf32>
    %143 = arith.addf %137, %142 : vector<8x128xf32>
    %144 = vector.extract_strided_slice %72 {offsets = [0, 1408], sizes = [8, 128], strides = [1, 1]} : vector<8x2048xf32> to vector<8x128xf32>
    %145 = arith.addf %139, %144 : vector<8x128xf32>
    %146 = vector.extract_strided_slice %17 {offsets = [0, 1408], sizes = [8, 128], strides = [1, 1]} : vector<8x2048xf32> to vector<8x128xf32>
    %147 = arith.addf %141, %146 : vector<8x128xf32>
    %148 = vector.extract_strided_slice %18 {offsets = [0, 1536], sizes = [8, 128], strides = [1, 1]} : vector<8x2048xf32> to vector<8x128xf32>
    %149 = arith.addf %143, %148 : vector<8x128xf32>
    %150 = vector.extract_strided_slice %72 {offsets = [0, 1536], sizes = [8, 128], strides = [1, 1]} : vector<8x2048xf32> to vector<8x128xf32>
    %151 = arith.addf %145, %150 : vector<8x128xf32>
    %152 = vector.extract_strided_slice %17 {offsets = [0, 1536], sizes = [8, 128], strides = [1, 1]} : vector<8x2048xf32> to vector<8x128xf32>
    %153 = arith.addf %147, %152 : vector<8x128xf32>
    %154 = vector.extract_strided_slice %18 {offsets = [0, 1664], sizes = [8, 128], strides = [1, 1]} : vector<8x2048xf32> to vector<8x128xf32>
    %155 = arith.addf %149, %154 : vector<8x128xf32>
    %156 = vector.extract_strided_slice %72 {offsets = [0, 1664], sizes = [8, 128], strides = [1, 1]} : vector<8x2048xf32> to vector<8x128xf32>
    %157 = arith.addf %151, %156 : vector<8x128xf32>
    %158 = vector.extract_strided_slice %17 {offsets = [0, 1664], sizes = [8, 128], strides = [1, 1]} : vector<8x2048xf32> to vector<8x128xf32>
    %159 = arith.addf %153, %158 : vector<8x128xf32>
    %160 = vector.extract_strided_slice %18 {offsets = [0, 1792], sizes = [8, 128], strides = [1, 1]} : vector<8x2048xf32> to vector<8x128xf32>
    %161 = arith.addf %155, %160 : vector<8x128xf32>
    %162 = vector.extract_strided_slice %72 {offsets = [0, 1792], sizes = [8, 128], strides = [1, 1]} : vector<8x2048xf32> to vector<8x128xf32>
    %163 = arith.addf %157, %162 : vector<8x128xf32>
    %164 = vector.extract_strided_slice %17 {offsets = [0, 1792], sizes = [8, 128], strides = [1, 1]} : vector<8x2048xf32> to vector<8x128xf32>
    %165 = arith.addf %159, %164 : vector<8x128xf32>
    %166 = vector.extract_strided_slice %18 {offsets = [0, 1920], sizes = [8, 128], strides = [1, 1]} : vector<8x2048xf32> to vector<8x128xf32>
    %167 = arith.addf %161, %166 : vector<8x128xf32>
    %168 = vector.extract_strided_slice %72 {offsets = [0, 1920], sizes = [8, 128], strides = [1, 1]} : vector<8x2048xf32> to vector<8x128xf32>
    %169 = arith.addf %163, %168 : vector<8x128xf32>
    %170 = vector.extract_strided_slice %17 {offsets = [0, 1920], sizes = [8, 128], strides = [1, 1]} : vector<8x2048xf32> to vector<8x128xf32>
    %171 = arith.addf %165, %170 : vector<8x128xf32>
    %c0_35 = arith.constant 0 : index
    %c0_36 = arith.constant 0 : index
    %172 = vector.load %arg8[%c0_35, %c0_36] : memref<8x128xf32, #tpu.memory_space<vmem>>, vector<8x128xf32>
    tpu.vector_store %arg8[%c0_35, %c0_36], %167 {strides = array<i32>} : memref<8x128xf32, #tpu.memory_space<vmem>>, vector<8x128xf32>,
    %c0_37 = arith.constant 0 : index
    %c0_38 = arith.constant 0 : index
    %173 = vector.load %arg9[%c0_37, %c0_38] : memref<8x128xf32, #tpu.memory_space<vmem>>, vector<8x128xf32>
    tpu.vector_store %arg9[%c0_37, %c0_38], %169 {strides = array<i32>} : memref<8x128xf32, #tpu.memory_space<vmem>>, vector<8x128xf32>,
    %c0_39 = arith.constant 0 : index
    %c0_40 = arith.constant 0 : index
    %174 = vector.load %arg10[%c0_39, %c0_40] : memref<8x128xf32, #tpu.memory_space<vmem>>, vector<8x128xf32>
    tpu.vector_store %arg10[%c0_39, %c0_40], %171 {strides = array<i32>} : memref<8x128xf32, #tpu.memory_space<vmem>>, vector<8x128xf32>,
    %c0_i32_41 = arith.constant 0 : i32
    %175 = arith.cmpi eq, %arg1, %c0_i32_41 : i32
    %176 = arith.extui %175 : i1 to i32
    %c0_i32_42 = arith.constant 0 : i32
    %177 = arith.cmpi ne, %176, %c0_i32_42 : i32
    scf.if %177 {
      %c0_43 = arith.constant 0 : index
      %c0_44 = arith.constant 0 : index
      %178 = vector.load %arg8[%c0_43, %c0_44] : memref<8x128xf32, #tpu.memory_space<vmem>>, vector<8x128xf32>
      %cst_45 = arith.constant dense<0.000000e+00> : vector<8xf32>
      %179 = vector.multi_reduction <add>, %178, %cst_45 [1] : vector<8x128xf32> to vector<8xf32>
      %180 = vector.shape_cast %179 : vector<8xf32> to vector<8x1xf32>
      %c0_46 = arith.constant 0 : index
      %c0_47 = arith.constant 0 : index
      %181 = vector.load %arg9[%c0_46, %c0_47] : memref<8x128xf32, #tpu.memory_space<vmem>>, vector<8x128xf32>
      %cst_48 = arith.constant dense<0.000000e+00> : vector<8xf32>
      %182 = vector.multi_reduction <add>, %181, %cst_48 [1] : vector<8x128xf32> to vector<8xf32>
      %183 = vector.shape_cast %182 : vector<8xf32> to vector<8x1xf32>
      %cst_49 = arith.constant 6.400000e+01 : f32
      %184 = vector.broadcast %cst_49 : f32 to vector<8x1xf32>
      %185 = arith.mulf %184, %183 : vector<8x1xf32>
      %c0_50 = arith.constant 0 : index
      %c0_51 = arith.constant 0 : index
      %186 = vector.load %arg10[%c0_50, %c0_51] : memref<8x128xf32, #tpu.memory_space<vmem>>, vector<8x128xf32>
      %cst_52 = arith.constant dense<0.000000e+00> : vector<8xf32>
      %187 = vector.multi_reduction <add>, %186, %cst_52 [1] : vector<8x128xf32> to vector<8xf32>
      %188 = vector.shape_cast %187 : vector<8xf32> to vector<8x1xf32>
      %cst_53 = arith.constant -1.000000e+00 : f32
      %cst_54 = arith.constant 1.000000e+00 : f32
      %189 = vector.broadcast %cst_53 : f32 to vector<8x1xf32>
      %190 = arith.maximumf %189, %180 : vector<8x1xf32>
      %191 = vector.broadcast %cst_54 : f32 to vector<8x1xf32>
      %192 = arith.minimumf %191, %190 : vector<8x1xf32>
      %193 = math.absf %192 : vector<8x1xf32>
      %cst_55 = arith.constant 5.000000e-01 : f32
      %194 = vector.broadcast %cst_55 : f32 to vector<8x1xf32>
      %195 = arith.cmpf ogt, %193, %194 : vector<8x1xf32>
      %cst_56 = arith.constant 1.000000e+00 : f32
      %196 = vector.broadcast %cst_56 : f32 to vector<8x1xf32>
      %197 = arith.subf %196, %193 : vector<8x1xf32>
      %cst_57 = arith.constant 5.000000e-01 : f32
      %198 = vector.broadcast %cst_57 : f32 to vector<8x1xf32>
      %199 = arith.mulf %198, %197 : vector<8x1xf32>
      %200 = arith.mulf %193, %193 : vector<8x1xf32>
      %201 = arith.select %195, %199, %200 : vector<8x1xi1>, vector<8x1xf32>
      %202 = math.sqrt %201 : vector<8x1xf32>
      %203 = arith.select %195, %202, %193 : vector<8x1xi1>, vector<8x1xf32>
      %cst_58 = arith.constant 4.216320e-02 : f32
      %204 = vector.broadcast %cst_58 : f32 to vector<8x1xf32>
      %205 = arith.mulf %204, %201 : vector<8x1xf32>
      %cst_59 = arith.constant 0.024181312 : f32
      %206 = vector.broadcast %cst_59 : f32 to vector<8x1xf32>
      %207 = arith.addf %205, %206 : vector<8x1xf32>
      %208 = arith.mulf %207, %201 : vector<8x1xf32>
      %cst_60 = arith.constant 0.0454700254 : f32
      %209 = vector.broadcast %cst_60 : f32 to vector<8x1xf32>
      %210 = arith.addf %208, %209 : vector<8x1xf32>
      %211 = arith.mulf %210, %201 : vector<8x1xf32>
      %cst_61 = arith.constant 0.0749530047 : f32
      %212 = vector.broadcast %cst_61 : f32 to vector<8x1xf32>
      %213 = arith.addf %211, %212 : vector<8x1xf32>
      %214 = arith.mulf %213, %201 : vector<8x1xf32>
      %cst_62 = arith.constant 0.166667521 : f32
      %215 = vector.broadcast %cst_62 : f32 to vector<8x1xf32>
      %216 = arith.addf %214, %215 : vector<8x1xf32>
      %217 = arith.mulf %203, %201 : vector<8x1xf32>
      %218 = arith.mulf %217, %216 : vector<8x1xf32>
      %219 = arith.addf %203, %218 : vector<8x1xf32>
      %cst_63 = arith.constant 2.000000e+00 : f32
      %220 = vector.broadcast %cst_63 : f32 to vector<8x1xf32>
      %221 = arith.mulf %220, %219 : vector<8x1xf32>
      %cst_64 = arith.constant 1.57079637 : f32
      %222 = vector.broadcast %cst_64 : f32 to vector<8x1xf32>
      %223 = arith.subf %222, %221 : vector<8x1xf32>
      %224 = arith.select %195, %223, %219 : vector<8x1xi1>, vector<8x1xf32>
      %cst_65 = arith.constant 0.000000e+00 : f32
      %225 = vector.broadcast %cst_65 : f32 to vector<8x1xf32>
      %226 = arith.cmpf olt, %192, %225 : vector<8x1xf32>
      %cst_66 = arith.constant 0.000000e+00 : f32
      %227 = vector.broadcast %cst_66 : f32 to vector<8x1xf32>
      %228 = arith.subf %227, %224 : vector<8x1xf32>
      %229 = arith.select %226, %228, %224 : vector<8x1xi1>, vector<8x1xf32>
      %cst_67 = arith.constant 1.57079637 : f32
      %230 = vector.broadcast %cst_67 : f32 to vector<8x1xf32>
      %231 = arith.subf %230, %229 : vector<8x1xf32>
      %cst_68 = arith.constant 8.000000e-01 : f32
      %232 = vector.broadcast %cst_68 : f32 to vector<8x1xf32>
      %233 = arith.subf %231, %232 : vector<8x1xf32>
      %cst_69 = arith.constant -8.000000e+01 : f32
      %234 = vector.broadcast %cst_69 : f32 to vector<8x1xf32>
      %235 = arith.mulf %234, %233 : vector<8x1xf32>
      %236 = math.exp %235 : vector<8x1xf32>
      %cst_70 = arith.constant 1.000000e+00 : f32
      %237 = vector.broadcast %cst_70 : f32 to vector<8x1xf32>
      %238 = arith.addf %237, %236 : vector<8x1xf32>
      %cst_71 = arith.constant 1.000000e+00 : f32
      %239 = vector.broadcast %cst_71 : f32 to vector<8x1xf32>
      %240 = arith.divf %239, %238 : vector<8x1xf32>
      %cst_72 = arith.constant 0.000000e+00 : f32
      %241 = vector.broadcast %cst_72 : f32 to vector<8x1xf32>
      %242 = arith.subf %241, %240 : vector<8x1xf32>
      %cst_73 = arith.constant 6.400000e+01 : f32
      %243 = vector.broadcast %cst_73 : f32 to vector<8x1xf32>
      %244 = arith.mulf %243, %180 : vector<8x1xf32>
      %245 = arith.mulf %242, %244 : vector<8x1xf32>
      %246 = tpu.iota {dimensions = array<i32: 1>} : vector<8x128xi32>
      %c0_i32_74 = arith.constant 0 : i32
      %247 = vector.broadcast %c0_i32_74 : i32 to vector<8x128xi32>
      %248 = arith.cmpi eq, %246, %247 : vector<8x128xi32>
      %cst_75 = arith.constant 0.000000e+00 : f32
      %249 = vector.shape_cast %245 : vector<8x1xf32> to vector<8x1xf32>
      %250 = vector.broadcast %249 : vector<8x1xf32> to vector<8x128xf32>
      %251 = vector.broadcast %cst_75 : f32 to vector<8x128xf32>
      %252 = arith.select %248, %250, %251 : vector<8x128xi1>, vector<8x128xf32>
      %c1_i32 = arith.constant 1 : i32
      %253 = vector.broadcast %c1_i32 : i32 to vector<8x128xi32>
      %254 = arith.cmpi eq, %246, %253 : vector<8x128xi32>
      %cst_76 = arith.constant 0.000000e+00 : f32
      %255 = vector.shape_cast %185 : vector<8x1xf32> to vector<8x1xf32>
      %256 = vector.broadcast %255 : vector<8x1xf32> to vector<8x128xf32>
      %257 = vector.broadcast %cst_76 : f32 to vector<8x128xf32>
      %258 = arith.select %254, %256, %257 : vector<8x128xi1>, vector<8x128xf32>
      %259 = arith.addf %252, %258 : vector<8x128xf32>
      %c2_i32 = arith.constant 2 : i32
      %260 = vector.broadcast %c2_i32 : i32 to vector<8x128xi32>
      %261 = arith.cmpi eq, %246, %260 : vector<8x128xi32>
      %cst_77 = arith.constant 0.000000e+00 : f32
      %262 = vector.shape_cast %180 : vector<8x1xf32> to vector<8x1xf32>
      %263 = vector.broadcast %262 : vector<8x1xf32> to vector<8x128xf32>
      %264 = vector.broadcast %cst_77 : f32 to vector<8x128xf32>
      %265 = arith.select %261, %263, %264 : vector<8x128xi1>, vector<8x128xf32>
      %266 = arith.addf %259, %265 : vector<8x128xf32>
      %c3_i32 = arith.constant 3 : i32
      %267 = vector.broadcast %c3_i32 : i32 to vector<8x128xi32>
      %268 = arith.cmpi eq, %246, %267 : vector<8x128xi32>
      %cst_78 = arith.constant 0.000000e+00 : f32
      %269 = vector.shape_cast %188 : vector<8x1xf32> to vector<8x1xf32>
      %270 = vector.broadcast %269 : vector<8x1xf32> to vector<8x128xf32>
      %271 = vector.broadcast %cst_78 : f32 to vector<8x128xf32>
      %272 = arith.select %268, %270, %271 : vector<8x128xi1>, vector<8x128xf32>
      %273 = arith.addf %266, %272 : vector<8x128xf32>
      %c0_79 = arith.constant 0 : index
      %c0_80 = arith.constant 0 : index
      %274 = vector.load %arg6[%c0_79, %c0_80] : memref<8x128xf32, #tpu.memory_space<vmem>>, vector<8x128xf32>
      tpu.vector_store %arg6[%c0_79, %c0_80], %273 {strides = array<i32>} : memref<8x128xf32, #tpu.memory_space<vmem>>, vector<8x128xf32>,
    } else {
    }
    return
  }
  func.func @transform_0(%arg0: i32, %arg1: i32) -> (i32, i32) {
    %c0_i32 = arith.constant 0 : i32
    %c0_i32_0 = arith.constant 0 : i32
    return %arg0, %c0_i32 : i32, i32
  }
  func.func @transform_1(%arg0: i32, %arg1: i32) -> (i32, i32) {
    %c0_i32 = arith.constant 0 : i32
    %c0_i32_0 = arith.constant 0 : i32
    return %c0_i32, %arg1 : i32, i32
  }
  func.func @transform_2(%arg0: i32, %arg1: i32) -> (i32, i32) {
    %c0_i32 = arith.constant 0 : i32
    %c0_i32_0 = arith.constant 0 : i32
    return %arg0, %c0_i32 : i32, i32
  }
  func.func @transform_3(%arg0: i32, %arg1: i32) -> (i32, i32) {
    %c0_i32 = arith.constant 0 : i32
    return %arg0, %arg1 : i32, i32
  }
  func.func @transform_4(%arg0: i32, %arg1: i32) -> (i32, i32) {
    %c0_i32 = arith.constant 0 : i32
    %c0_i32_0 = arith.constant 0 : i32
    return %arg0, %c0_i32 : i32, i32
  }
}

</mosaic_0001>

<llo_original>
// kernel: sface_forward.1
$region0: #{sface_forward.1}
  #allocation0 [shape = 'u32[]', space=smem, size = 0x4, offset = 0x4, fixed_abs, tag = 'smem constant byte address 0x4 - core index']
  #allocation1 [shape = 'u32[144,128]{1,0:T(1,128)}', space=vmem, size = 0x12000, scoped, tag = 'internal scratch']
  #allocation2 [shape = 'f32[8,256]{1,0:T(8,128)}', space=vmem, size = 0x2000, scoped, tag = 'scratch operand']
  #allocation3 [shape = 'f32[8,128]{1,0:T(8,128)}', space=vmem, size = 0x1000, scoped, tag = 'scratch operand']
  #allocation4 [shape = 'f32[8,128]{1,0:T(8,128)}', space=vmem, size = 0x1000, scoped, tag = 'scratch operand']
  #allocation5 [shape = 'f32[8,128]{1,0:T(8,128)}', space=vmem, size = 0x1000, scoped, tag = 'scratch operand']
  %s0 = inlined_call_operand.vmem [shape: f32[16,256], index: 0, kind: input, shape index: {}]
  %s1 = inlined_call_operand.vmem [shape: f32[256,2048], index: 1, kind: input, shape index: {}]
  %s2 = inlined_call_operand.vmem [shape: s32[16,1], index: 2, kind: input, shape index: {}]
  %s3 = inlined_call_operand.hbm [shape: f32[16,2048], index: 3, kind: output, shape index: {0}]
  %s4 = inlined_call_operand.vmem [shape: f32[16,128], index: 4, kind: output, shape index: {1}]
  %5 = xla_tuple %s3, %s4
  %s6 = sld [smem:[#allocation0]]
  $region61: #{sface_forward.1} parent=0
    _
  %s8 = ssub.s32 1, %s6
  %s9 = scalar_select 0, %s8, %s6
  $region1: #{sface_forward.1} parent=0
    #allocation6 [shape = 'u8[131072]{0}', space=vmem, size = 0x20000, scoped, tag = 'output window, operand 0']
    #allocation7 [shape = 's32[2]{0}', space=sflag, size = 0x8, scoped, tag = 'scoped memory for sface_forward.1']
    %10 = vsyncpa [#allocation7], 0
    %s11 = scalar_lea.sflag [#allocation7], 1
    %12 = vsyncpa %s11, 0
    loop: start=0, step=1, limit=4
    $region2: #{sface_forward.1} parent=1 // loop_pre_header
      _
    $region3: #{sface_forward.1} parent=1 // loop_header
      %s14 = sphi 0, %s18
      %p15 = scmp.ge.s32.totalorder %s14, 4
      %s21 = sphi 0, %s33
      %s22 = sphi 0, %s29
      %s23 = sphi 0, %s21
      %s24 = sphi 0, %s22
      %s25 = sphi 0, %s23
      %s26 = sphi 0, %s24
      %s36 = sphi 0, %s38
      %s39 = sphi 0, %s36
      %s40 = sphi 0, %s39
      %s56 = sphi 0, %s40
      %s62 = sphi 0, %s64
      %s65 = sphi 0, %s62
      %s66 = sphi 0, %s65
      %s82 = sphi 0, %s66
      %s88 = sphi 0, %s90
      %s91 = sphi 0, %s88
      %s92 = sphi 0, %s91
      %s108 = sphi 0, %s92
      %s116 = sphi 0, %s118
      %s119 = sphi 0, %s116
      %s120 = sphi 0, %s119
      %s136 = sphi 0, %s120
      %s142 = sphi 0, %s144
      %s145 = sphi 0, %s142
      %s146 = sphi 0, %s145
      %s162 = sphi 0, %s146
    $region4: #{sface_forward.1} parent=1 // loop_header_branch
      %17 = sbr.rel (%p15) target = $region8
    $region5: #{sface_forward.1} parent=1 // loop_body
      %s19 = ssub.s32 %s14, 1
      %s20 = ssub.s32 %s14, 2
      %s27 = sadd.s32 1, %s22
      %p28 = scmp.ge.s32.totalorder %s27, 1
      %s29 = scalar_select %p28, 0, %s27
      %s30 = sadd.s32 1, %s21
      %s31 = scalar_select %p28, %s30, %s21
      %p32 = scmp.ge.s32.totalorder %s31, 2
      %s33 = scalar_select %p32, 0, %s31
      %s34 = ssub.s32 %s21, %s33
      %p35 = scmp.eq.s32.totalorder %s34, 0
      %s37 = sadd.s32 %s36, 1
      %s38 = scalar_select %p35, %s36, %s37
      %p41 = pneg %p35
      %p42 = scmp.eq.s32.totalorder %s14, 1
      %p43 = por %p41, %p42
      %p44 = scmp.ne.s32.totalorder %s36, %s39
      %p45 = scmp.eq.s32.totalorder %s14, 0
      %p46 = por %p44, %p45
      %p47 = scmp.ne.s32.totalorder %s36, %s39
      %p48 = scmp.eq.s32.totalorder %s19, 1
      %p49 = por %p47, %p48
      %p50 = scmp.ne.s32.totalorder %s39, %s40
      %p51 = scmp.eq.s32.totalorder %s19, 0
      %p52 = por %p50, %p51
      %p53 = scmp.ne.s32.totalorder %s39, %s40
      %p54 = scmp.eq.s32.totalorder %s20, 1
      %p55 = por %p53, %p54
      %p57 = scmp.ne.s32.totalorder %s40, %s56
      %p58 = scmp.eq.s32.totalorder %s20, 0
      %p59 = por %p57, %p58
      %s60 = ssub.s32 %s22, %s29
      %p61 = scmp.eq.s32.totalorder %s60, 0
      %s63 = sadd.s32 %s62, 1
      %s64 = scalar_select %p61, %s62, %s63
      %p67 = pneg %p61
      %p68 = scmp.eq.s32.totalorder %s14, 1
      %p69 = por %p67, %p68
      %p70 = scmp.ne.s32.totalorder %s62, %s65
      %p71 = scmp.eq.s32.totalorder %s14, 0
      %p72 = por %p70, %p71
      %p73 = scmp.ne.s32.totalorder %s62, %s65
      %p74 = scmp.eq.s32.totalorder %s19, 1
      %p75 = por %p73, %p74
      %p76 = scmp.ne.s32.totalorder %s65, %s66
      %p77 = scmp.eq.s32.totalorder %s19, 0
      %p78 = por %p76, %p77
      %p79 = scmp.ne.s32.totalorder %s65, %s66
      %p80 = scmp.eq.s32.totalorder %s20, 1
      %p81 = por %p79, %p80
      %p83 = scmp.ne.s32.totalorder %s66, %s82
      %p84 = scmp.eq.s32.totalorder %s20, 0
      %p85 = por %p83, %p84
      %s86 = ssub.s32 %s21, %s33
      %p87 = scmp.eq.s32.totalorder %s86, 0
      %s89 = sadd.s32 %s88, 1
      %s90 = scalar_select %p87, %s88, %s89
      %p93 = pneg %p87
      %p94 = scmp.eq.s32.totalorder %s14, 1
      %p95 = por %p93, %p94
      %p96 = scmp.ne.s32.totalorder %s88, %s91
      %p97 = scmp.eq.s32.totalorder %s14, 0
      %p98 = por %p96, %p97
      %p99 = scmp.ne.s32.totalorder %s88, %s91
      %p100 = scmp.eq.s32.totalorder %s19, 1
      %p101 = por %p99, %p100
      %p102 = scmp.ne.s32.totalorder %s91, %s92
      %p103 = scmp.eq.s32.totalorder %s19, 0
      %p104 = por %p102, %p103
      %p105 = scmp.ne.s32.totalorder %s91, %s92
      %p106 = scmp.eq.s32.totalorder %s20, 1
      %p107 = por %p105, %p106
      %p109 = scmp.ne.s32.totalorder %s92, %s108
      %p110 = scmp.eq.s32.totalorder %s20, 0
      %p111 = por %p109, %p110
      %s112 = ssub.s32 %s21, %s33
      %s113 = ssub.s32 %s22, %s29
      %s114 = sor.u32 %s112, %s113
      %p115 = scmp.eq.s32.totalorder %s114, 0
      %s117 = sadd.s32 %s116, 1
      %s118 = scalar_select %p115, %s116, %s117
      %p121 = pneg %p115
      %p122 = scmp.eq.s32.totalorder %s14, 1
      %p123 = por %p121, %p122
      %p124 = scmp.ne.s32.totalorder %s116, %s119
      %p125 = scmp.eq.s32.totalorder %s14, 0
      %p126 = por %p124, %p125
      %p127 = scmp.ne.s32.totalorder %s116, %s119
      %p128 = scmp.eq.s32.totalorder %s19, 1
      %p129 = por %p127, %p128
      %p130 = scmp.ne.s32.totalorder %s119, %s120
      %p131 = scmp.eq.s32.totalorder %s19, 0
      %p132 = por %p130, %p131
      %p133 = scmp.ne.s32.totalorder %s119, %s120
      %p134 = scmp.eq.s32.totalorder %s20, 1
      %p135 = por %p133, %p134
      %p137 = scmp.ne.s32.totalorder %s120, %s136
      %p138 = scmp.eq.s32.totalorder %s20, 0
      %p139 = por %p137, %p138
      %s140 = ssub.s32 %s21, %s33
      %p141 = scmp.eq.s32.totalorder %s140, 0
      %s143 = sadd.s32 %s142, 1
      %s144 = scalar_select %p141, %s142, %s143
      %p147 = pneg %p141
      %p148 = scmp.eq.s32.totalorder %s14, 1
      %p149 = por %p147, %p148
      %p150 = scmp.ne.s32.totalorder %s142, %s145
      %p151 = scmp.eq.s32.totalorder %s14, 0
      %p152 = por %p150, %p151
      %p153 = scmp.ne.s32.totalorder %s142, %s145
      %p154 = scmp.eq.s32.totalorder %s19, 1
      %p155 = por %p153, %p154
      %p156 = scmp.ne.s32.totalorder %s145, %s146
      %p157 = scmp.eq.s32.totalorder %s19, 0
      %p158 = por %p156, %p157
      %p159 = scmp.ne.s32.totalorder %s145, %s146
      %p160 = scmp.eq.s32.totalorder %s20, 1
      %p161 = por %p159, %p160
      %p163 = scmp.ne.s32.totalorder %s146, %s162
      %p164 = scmp.eq.s32.totalorder %s20, 0
      %p165 = por %p163, %p164
      %p166 = scmp.le.s32.totalorder 1, %s14
      %p167 = scmp.lt.s32.totalorder %s14, 3
      %p168 = pnand %p166, %p167
      %p169 = pneg %p168
      // Predicated region
      $region9: #{sface_forward.1} parent=5 // pred_check
        _
      $region10: #{sface_forward.1} parent=5 // pred_check_branch
        %171 = sbr.rel (%p168) target = $region12
      $region11: #{sface_forward.1} parent=5 // pred_region
        %s172 = ssub.s32 %s14, 1
        // Predicated region
        $region13: #{sface_forward.1} parent=11 // pred_check
          %p173 = pneg %p78
        $region14: #{sface_forward.1} parent=11 // pred_check_branch
          %175 = sbr.rel (%p173) target = $region16
        $region15: #{sface_forward.1} parent=11 // pred_region
          %s176 = smul.u32 16, %s24
          %p177 = scmp.lt.s32.totalorder %s176, 15
          %s178 = scalar_select %p177, %s176, 15
          %s179 = smul.addr %s178, 8
          %s180 = scalar_lea.vmem %s1, %s179
          %s181 = smul.u32 16, %s24
        $region16: #{sface_forward.1} parent=11 // pred_fallthru
          _
      $region12: #{sface_forward.1} parent=5 // pred_fallthru
        _
      %p182 = scmp.lt.s32.totalorder %s14, 2
      // Predicated region
      $region17: #{sface_forward.1} parent=5 // pred_check
        %p183 = pneg %p182
      $region18: #{sface_forward.1} parent=5 // pred_check_branch
        %185 = sbr.rel (%p183) target = $region20
      $region19: #{sface_forward.1} parent=5 // pred_region
        // Predicated region
        $region21: #{sface_forward.1} parent=19 // pred_check
          %p186 = pneg %p46
        $region22: #{sface_forward.1} parent=19 // pred_check_branch
          %188 = sbr.rel (%p186) target = $region24
        $region23: #{sface_forward.1} parent=19 // pred_region
          %p189 = scmp.lt.s32.totalorder %s21, 1
          %s190 = scalar_select %p189, %s21, 1
          %s191 = smul.addr %s190, 2
          %s192 = smul.addr %s191, 8
          %s193 = scalar_lea.vmem %s0, %s192
        $region24: #{sface_forward.1} parent=19 // pred_fallthru
          _
        // Predicated region
        $region25: #{sface_forward.1} parent=19 // pred_check
          %p194 = pneg %p98
        $region26: #{sface_forward.1} parent=19 // pred_check_branch
          %196 = sbr.rel (%p194) target = $region28
        $region27: #{sface_forward.1} parent=19 // pred_region
          %p197 = scmp.lt.s32.totalorder %s21, 1
          %s198 = scalar_select %p197, %s21, 1
          %s199 = smul.addr %s198, 8
          %s200 = scalar_lea.vmem %s2, %s199
        $region28: #{sface_forward.1} parent=19 // pred_fallthru
          _
      $region20: #{sface_forward.1} parent=5 // pred_fallthru
        _
      %p201 = scmp.le.s32.totalorder 1, %s14
      %p202 = scmp.lt.s32.totalorder %s14, 3
      %p203 = pnand %p201, %p202
      %p204 = pneg %p203
      // Predicated region
      $region29: #{sface_forward.1} parent=5 // pred_check
        _
      $region30: #{sface_forward.1} parent=5 // pred_check_branch
        %206 = sbr.rel (%p203) target = $region32
      $region31: #{sface_forward.1} parent=5 // pred_region
        %s207 = ssub.s32 %s14, 1
        %p208 = scmp.lt.s32.totalorder %s23, 1
        %s209 = scalar_select %p208, %s23, 1
        %s210 = smul.addr %s209, 2
        %s211 = smul.addr %s210, 8
        %s212 = scalar_lea.vmem %s0, %s211
        %p213 = pneg %p52
        %p214 = pneg %p49
        %s215 = smul.u32 16, %s24
        %p216 = scmp.lt.s32.totalorder %s215, 15
        %s217 = scalar_select %p216, %s215, 15
        %s218 = smul.addr %s217, 8
        %s219 = scalar_lea.vmem %s1, %s218
        %p220 = pneg %p78
        %p221 = pneg %p75
        %p222 = scmp.lt.s32.totalorder %s23, 1
        %s223 = scalar_select %p222, %s23, 1
        %s224 = smul.addr %s223, 8
        %s225 = scalar_lea.vmem %s2, %s224
        %p226 = pneg %p104
        %p227 = pneg %p101
        %p228 = pneg %p132
        %p229 = pneg %p129
        %s230 = sand.u32 %s119, 1
        %s231 = scalar_lea.sflag [#allocation7], %s230
        %s232 = sand.u32 %s119, 1
        %s233 = smul.addr %s232, 128
        %s234 = scalar_lea.vmem [#allocation6], %s233
        %p235 = pneg %p158
        %p236 = pneg %p155
        %p237 = scmp.lt.s32.totalorder %s23, 1
        %s238 = scalar_select %p237, %s23, 1
        %s239 = smul.addr %s238, 8
        %s240 = scalar_lea.vmem %s4, %s239
        %p241 = scmp.lt.s32.totalorder %s23, 1
        %s242 = scalar_select %p241, %s23, 1
        %s243 = smul.addr %s242, 2
        %s244 = smul.addr %s243, 8
        %s245 = scalar_lea.vmem %s0, %s244
        %s246 = smul.u32 16, %s24
        %p247 = scmp.lt.s32.totalorder %s246, 15
        %s248 = scalar_select %p247, %s246, 15
        %s249 = smul.addr %s248, 8
        %s250 = scalar_lea.vmem %s1, %s249
        %s251 = smul.u32 16, %s24
        %p252 = scmp.lt.s32.totalorder %s23, 1
        %s253 = scalar_select %p252, %s23, 1
        %s254 = smul.addr %s253, 8
        %s255 = scalar_lea.vmem %s2, %s254
        %s256 = smul.u32 16, %s24
        %p257 = scmp.lt.s32.totalorder %s23, 1
        %s258 = scalar_select %p257, %s23, 1
        %s259 = smul.addr %s258, 8
        %s260 = scalar_lea.vmem %s4, %s259
        %p261 = scmp.eq.s32.totalorder %s24, 0
        // Predicated region
        $region33: #{sface_forward.1} parent=31 // pred_check
          %p262 = pneg %p261
        $region34: #{sface_forward.1} parent=31 // pred_check_branch
          %264 = sbr.rel (%p262) target = $region36
        $region35: #{sface_forward.1} parent=31 // pred_region
          %v265 = vld [vmem:[%s245] sm:$0xff]
          %v266 = vld [vmem:[%s245 + $0x8] sm:$0xff]
          %v267 = vmul.f32 %v265, %v265
          %v268 = vmul.f32 %v266, %v266
          %v269 = vadd.f32 %v267, %v268
          %270 = vadd.xlane.f32.xlu0 %v269
          %v271 = vpop.xlane.xlu0 %270
          %v272 = vmax.f32 %v271, 1e-24
          %v273 = vrsqrt.pop %v272
          %v274 = vmul.f32 %v265, %v273
          %v275 = vmul.f32 %v266, %v273
          %276 = vst [vmem:[#allocation2] sm:$0xff] %v274
          %277 = vst [vmem:[#allocation2 + $0x8] sm:$0xff] %v275
          %278 = vst [vmem:[#allocation3] sm:$0xff] 0.0
          %279 = vst [vmem:[#allocation4] sm:$0xff] 0.0
          %280 = vst [vmem:[#allocation5] sm:$0xff] 0.0
        $region36: #{sface_forward.1} parent=31 // pred_fallthru
          _
        %v281 = vld [vmem:[#allocation2] sm:$0xff]
        %v282 = vld [vmem:[#allocation2 + $0x8] sm:$0xff]
        %v283 = vld [vmem:[%s250] sm:$0xff]
        %v284 = vld [vmem:[%s250 + $0x8] sm:$0xff]
        %v285 = vld [vmem:[%s250 + $0x10] sm:$0xff]
        %v286 = vld [vmem:[%s250 + $0x18] sm:$0xff]
        %v287 = vld [vmem:[%s250 + $0x20] sm:$0xff]
        %v288 = vld [vmem:[%s250 + $0x28] sm:$0xff]
        %v289 = vld [vmem:[%s250 + $0x30] sm:$0xff]
        %v290 = vld [vmem:[%s250 + $0x38] sm:$0xff]
        %v291 = vld [vmem:[%s250 + $0x40] sm:$0xff]
        %v292 = vld [vmem:[%s250 + $0x48] sm:$0xff]
        %v293 = vld [vmem:[%s250 + $0x50] sm:$0xff]
        %v294 = vld [vmem:[%s250 + $0x58] sm:$0xff]
        %v295 = vld [vmem:[%s250 + $0x60] sm:$0xff]
        %v296 = vld [vmem:[%s250 + $0x68] sm:$0xff]
        %v297 = vld [vmem:[%s250 + $0x70] sm:$0xff]
        %v298 = vld [vmem:[%s250 + $0x78] sm:$0xff]
        %v299 = vld [vmem:[%s250 + $0x80] sm:$0xff]
        %v300 = vld [vmem:[%s250 + $0x88] sm:$0xff]
        %v301 = vld [vmem:[%s250 + $0x90] sm:$0xff]
        %v302 = vld [vmem:[%s250 + $0x98] sm:$0xff]
        %v303 = vld [vmem:[%s250 + $0xa0] sm:$0xff]
        %v304 = vld [vmem:[%s250 + $0xa8] sm:$0xff]
        %v305 = vld [vmem:[%s250 + $0xb0] sm:$0xff]
        %v306 = vld [vmem:[%s250 + $0xb8] sm:$0xff]
        %v307 = vld [vmem:[%s250 + $0xc0] sm:$0xff]
        %v308 = vld [vmem:[%s250 + $0xc8] sm:$0xff]
        %v309 = vld [vmem:[%s250 + $0xd0] sm:$0xff]
        %v310 = vld [vmem:[%s250 + $0xd8] sm:$0xff]
        %v311 = vld [vmem:[%s250 + $0xe0] sm:$0xff]
        %v312 = vld [vmem:[%s250 + $0xe8] sm:$0xff]
        %v313 = vld [vmem:[%s250 + $0xf0] sm:$0xff]
        %v314 = vld [vmem:[%s250 + $0xf8] sm:$0xff]
        %v315 = vld [vmem:[%s250 + $0x100] sm:$0xff]
        %v316 = vld [vmem:[%s250 + $0x108] sm:$0xff]
        %v317 = vld [vmem:[%s250 + $0x110] sm:$0xff]
        %v318 = vld [vmem:[%s250 + $0x118] sm:$0xff]
        %v319 = vld [vmem:[%s250 + $0x120] sm:$0xff]
        %v320 = vld [vmem:[%s250 + $0x128] sm:$0xff]
        %v321 = vld [vmem:[%s250 + $0x130] sm:$0xff]
        %v322 = vld [vmem:[%s250 + $0x138] sm:$0xff]
        %v323 = vld [vmem:[%s250 + $0x140] sm:$0xff]
        %v324 = vld [vmem:[%s250 + $0x148] sm:$0xff]
        %v325 = vld [vmem:[%s250 + $0x150] sm:$0xff]
        %v326 = vld [vmem:[%s250 + $0x158] sm:$0xff]
        %v327 = vld [vmem:[%s250 + $0x160] sm:$0xff]
        %v328 = vld [vmem:[%s250 + $0x168] sm:$0xff]
        %v329 = vld [vmem:[%s250 + $0x170] sm:$0xff]
        %v330 = vld [vmem:[%s250 + $0x178] sm:$0xff]
        %v331 = vld [vmem:[%s250 + $0x180] sm:$0xff]
        %v332 = vld [vmem:[%s250 + $0x188] sm:$0xff]
        %v333 = vld [vmem:[%s250 + $0x190] sm:$0xff]
        %v334 = vld [vmem:[%s250 + $0x198] sm:$0xff]
        %v335 = vld [vmem:[%s250 + $0x1a0] sm:$0xff]
        %v336 = vld [vmem:[%s250 + $0x1a8] sm:$0xff]
        %v337 = vld [vmem:[%s250 + $0x1b0] sm:$0xff]
        %v338 = vld [vmem:[%s250 + $0x1b8] sm:$0xff]
        %v339 = vld [vmem:[%s250 + $0x1c0] sm:$0xff]
        %v340 = vld [vmem:[%s250 + $0x1c8] sm:$0xff]
        %v341 = vld [vmem:[%s250 + $0x1d0] sm:$0xff]
        %v342 = vld [vmem:[%s250 + $0x1d8] sm:$0xff]
        %v343 = vld [vmem:[%s250 + $0x1e0] sm:$0xff]
        %v344 = vld [vmem:[%s250 + $0x1e8] sm:$0xff]
        %v345 = vld [vmem:[%s250 + $0x1f0] sm:$0xff]
        %v346 = vld [vmem:[%s250 + $0x1f8] sm:$0xff]
        %v347 = vld [vmem:[%s250 + $0x200] sm:$0xff]
        %v348 = vld [vmem:[%s250 + $0x208] sm:$0xff]
        %v349 = vld [vmem:[%s250 + $0x210] sm:$0xff]
        %v350 = vld [vmem:[%s250 + $0x218] sm:$0xff]
        %v351 = vld [vmem:[%s250 + $0x220] sm:$0xff]
        %v352 = vld [vmem:[%s250 + $0x228] sm:$0xff]
        %v353 = vld [vmem:[%s250 + $0x230] sm:$0xff]
        %v354 = vld [vmem:[%s250 + $0x238] sm:$0xff]
        %v355 = vld [vmem:[%s250 + $0x240] sm:$0xff]
        %v356 = vld [vmem:[%s250 + $0x248] sm:$0xff]
        %v357 = vld [vmem:[%s250 + $0x250] sm:$0xff]
        %v358 = vld [vmem:[%s250 + $0x258] sm:$0xff]
        %v359 = vld [vmem:[%s250 + $0x260] sm:$0xff]
        %v360 = vld [vmem:[%s250 + $0x268] sm:$0xff]
        %v361 = vld [vmem:[%s250 + $0x270] sm:$0xff]
        %v362 = vld [vmem:[%s250 + $0x278] sm:$0xff]
        %v363 = vld [vmem:[%s250 + $0x280] sm:$0xff]
        %v364 = vld [vmem:[%s250 + $0x288] sm:$0xff]
        %v365 = vld [vmem:[%s250 + $0x290] sm:$0xff]
        %v366 = vld [vmem:[%s250 + $0x298] sm:$0xff]
        %v367 = vld [vmem:[%s250 + $0x2a0] sm:$0xff]
        %v368 = vld [vmem:[%s250 + $0x2a8] sm:$0xff]
        %v369 = vld [vmem:[%s250 + $0x2b0] sm:$0xff]
        %v370 = vld [vmem:[%s250 + $0x2b8] sm:$0xff]
        %v371 = vld [vmem:[%s250 + $0x2c0] sm:$0xff]
        %v372 = vld [vmem:[%s250 + $0x2c8] sm:$0xff]
        %v373 = vld [vmem:[%s250 + $0x2d0] sm:$0xff]
        %v374 = vld [vmem:[%s250 + $0x2d8] sm:$0xff]
        %v375 = vld [vmem:[%s250 + $0x2e0] sm:$0xff]
        %v376 = vld [vmem:[%s250 + $0x2e8] sm:$0xff]
        %v377 = vld [vmem:[%s250 + $0x2f0] sm:$0xff]
        %v378 = vld [vmem:[%s250 + $0x2f8] sm:$0xff]
        %v379 = vld [vmem:[%s250 + $0x300] sm:$0xff]
        %v380 = vld [vmem:[%s250 + $0x308] sm:$0xff]
        %v381 = vld [vmem:[%s250 + $0x310] sm:$0xff]
        %v382 = vld [vmem:[%s250 + $0x318] sm:$0xff]
        %v383 = vld [vmem:[%s250 + $0x320] sm:$0xff]
        %v384 = vld [vmem:[%s250 + $0x328] sm:$0xff]
        %v385 = vld [vmem:[%s250 + $0x330] sm:$0xff]
        %v386 = vld [vmem:[%s250 + $0x338] sm:$0xff]
        %v387 = vld [vmem:[%s250 + $0x340] sm:$0xff]
        %v388 = vld [vmem:[%s250 + $0x348] sm:$0xff]
        %v389 = vld [vmem:[%s250 + $0x350] sm:$0xff]
        %v390 = vld [vmem:[%s250 + $0x358] sm:$0xff]
        %v391 = vld [vmem:[%s250 + $0x360] sm:$0xff]
        %v392 = vld [vmem:[%s250 + $0x368] sm:$0xff]
        %v393 = vld [vmem:[%s250 + $0x370] sm:$0xff]
        %v394 = vld [vmem:[%s250 + $0x378] sm:$0xff]
        %v395 = vld [vmem:[%s250 + $0x380] sm:$0xff]
        %v396 = vld [vmem:[%s250 + $0x388] sm:$0xff]
        %v397 = vld [vmem:[%s250 + $0x390] sm:$0xff]
        %v398 = vld [vmem:[%s250 + $0x398] sm:$0xff]
        %v399 = vld [vmem:[%s250 + $0x3a0] sm:$0xff]
        %v400 = vld [vmem:[%s250 + $0x3a8] sm:$0xff]
        %v401 = vld [vmem:[%s250 + $0x3b0] sm:$0xff]
        %v402 = vld [vmem:[%s250 + $0x3b8] sm:$0xff]
        %v403 = vld [vmem:[%s250 + $0x3c0] sm:$0xff]
        %v404 = vld [vmem:[%s250 + $0x3c8] sm:$0xff]
        %v405 = vld [vmem:[%s250 + $0x3d0] sm:$0xff]
        %v406 = vld [vmem:[%s250 + $0x3d8] sm:$0xff]
        %v407 = vld [vmem:[%s250 + $0x3e0] sm:$0xff]
        %v408 = vld [vmem:[%s250 + $0x3e8] sm:$0xff]
        %v409 = vld [vmem:[%s250 + $0x3f0] sm:$0xff]
        %v410 = vld [vmem:[%s250 + $0x3f8] sm:$0xff]
        %v411 = vld [vmem:[%s250 + $0x400] sm:$0xff]
        %v412 = vld [vmem:[%s250 + $0x408] sm:$0xff]
        %v413 = vld [vmem:[%s250 + $0x410] sm:$0xff]
        %v414 = vld [vmem:[%s250 + $0x418] sm:$0xff]
        %v415 = vld [vmem:[%s250 + $0x420] sm:$0xff]
        %v416 = vld [vmem:[%s250 + $0x428] sm:$0xff]
        %v417 = vld [vmem:[%s250 + $0x430] sm:$0xff]
        %v418 = vld [vmem:[%s250 + $0x438] sm:$0xff]
        %v419 = vld [vmem:[%s250 + $0x440] sm:$0xff]
        %v420 = vld [vmem:[%s250 + $0x448] sm:$0xff]
        %v421 = vld [vmem:[%s250 + $0x450] sm:$0xff]
        %v422 = vld [vmem:[%s250 + $0x458] sm:$0xff]
        %v423 = vld [vmem:[%s250 + $0x460] sm:$0xff]
        %v424 = vld [vmem:[%s250 + $0x468] sm:$0xff]
        %v425 = vld [vmem:[%s250 + $0x470] sm:$0xff]
        %v426 = vld [vmem:[%s250 + $0x478] sm:$0xff]
        %v427 = vld [vmem:[%s250 + $0x480] sm:$0xff]
        %v428 = vld [vmem:[%s250 + $0x488] sm:$0xff]
        %v429 = vld [vmem:[%s250 + $0x490] sm:$0xff]
        %v430 = vld [vmem:[%s250 + $0x498] sm:$0xff]
        %v431 = vld [vmem:[%s250 + $0x4a0] sm:$0xff]
        %v432 = vld [vmem:[%s250 + $0x4a8] sm:$0xff]
        %v433 = vld [vmem:[%s250 + $0x4b0] sm:$0xff]
        %v434 = vld [vmem:[%s250 + $0x4b8] sm:$0xff]
        %v435 = vld [vmem:[%s250 + $0x4c0] sm:$0xff]
        %v436 = vld [vmem:[%s250 + $0x4c8] sm:$0xff]
        %v437 = vld [vmem:[%s250 + $0x4d0] sm:$0xff]
        %v438 = vld [vmem:[%s250 + $0x4d8] sm:$0xff]
        %v439 = vld [vmem:[%s250 + $0x4e0] sm:$0xff]
        %v440 = vld [vmem:[%s250 + $0x4e8] sm:$0xff]
        %v441 = vld [vmem:[%s250 + $0x4f0] sm:$0xff]
        %v442 = vld [vmem:[%s250 + $0x4f8] sm:$0xff]
        %v443 = vld [vmem:[%s250 + $0x500] sm:$0xff]
        %v444 = vld [vmem:[%s250 + $0x508] sm:$0xff]
        %v445 = vld [vmem:[%s250 + $0x510] sm:$0xff]
        %v446 = vld [vmem:[%s250 + $0x518] sm:$0xff]
        %v447 = vld [vmem:[%s250 + $0x520] sm:$0xff]
        %v448 = vld [vmem:[%s250 + $0x528] sm:$0xff]
        %v449 = vld [vmem:[%s250 + $0x530] sm:$0xff]
        %v450 = vld [vmem:[%s250 + $0x538] sm:$0xff]
        %v451 = vld [vmem:[%s250 + $0x540] sm:$0xff]
        %v452 = vld [vmem:[%s250 + $0x548] sm:$0xff]
        %v453 = vld [vmem:[%s250 + $0x550] sm:$0xff]
        %v454 = vld [vmem:[%s250 + $0x558] sm:$0xff]
        %v455 = vld [vmem:[%s250 + $0x560] sm:$0xff]
        %v456 = vld [vmem:[%s250 + $0x568] sm:$0xff]
        %v457 = vld [vmem:[%s250 + $0x570] sm:$0xff]
        %v458 = vld [vmem:[%s250 + $0x578] sm:$0xff]
        %v459 = vld [vmem:[%s250 + $0x580] sm:$0xff]
        %v460 = vld [vmem:[%s250 + $0x588] sm:$0xff]
        %v461 = vld [vmem:[%s250 + $0x590] sm:$0xff]
        %v462 = vld [vmem:[%s250 + $0x598] sm:$0xff]
        %v463 = vld [vmem:[%s250 + $0x5a0] sm:$0xff]
        %v464 = vld [vmem:[%s250 + $0x5a8] sm:$0xff]
        %v465 = vld [vmem:[%s250 + $0x5b0] sm:$0xff]
        %v466 = vld [vmem:[%s250 + $0x5b8] sm:$0xff]
        %v467 = vld [vmem:[%s250 + $0x5c0] sm:$0xff]
        %v468 = vld [vmem:[%s250 + $0x5c8] sm:$0xff]
        %v469 = vld [vmem:[%s250 + $0x5d0] sm:$0xff]
        %v470 = vld [vmem:[%s250 + $0x5d8] sm:$0xff]
        %v471 = vld [vmem:[%s250 + $0x5e0] sm:$0xff]
        %v472 = vld [vmem:[%s250 + $0x5e8] sm:$0xff]
        %v473 = vld [vmem:[%s250 + $0x5f0] sm:$0xff]
        %v474 = vld [vmem:[%s250 + $0x5f8] sm:$0xff]
        %v475 = vld [vmem:[%s250 + $0x600] sm:$0xff]
        %v476 = vld [vmem:[%s250 + $0x608] sm:$0xff]
        %v477 = vld [vmem:[%s250 + $0x610] sm:$0xff]
        %v478 = vld [vmem:[%s250 + $0x618] sm:$0xff]
        %v479 = vld [vmem:[%s250 + $0x620] sm:$0xff]
        %v480 = vld [vmem:[%s250 + $0x628] sm:$0xff]
        %v481 = vld [vmem:[%s250 + $0x630] sm:$0xff]
        %v482 = vld [vmem:[%s250 + $0x638] sm:$0xff]
        %v483 = vld [vmem:[%s250 + $0x640] sm:$0xff]
        %v484 = vld [vmem:[%s250 + $0x648] sm:$0xff]
        %v485 = vld [vmem:[%s250 + $0x650] sm:$0xff]
        %v486 = vld [vmem:[%s250 + $0x658] sm:$0xff]
        %v487 = vld [vmem:[%s250 + $0x660] sm:$0xff]
        %v488 = vld [vmem:[%s250 + $0x668] sm:$0xff]
        %v489 = vld [vmem:[%s250 + $0x670] sm:$0xff]
        %v490 = vld [vmem:[%s250 + $0x678] sm:$0xff]
        %v491 = vld [vmem:[%s250 + $0x680] sm:$0xff]
        %v492 = vld [vmem:[%s250 + $0x688] sm:$0xff]
        %v493 = vld [vmem:[%s250 + $0x690] sm:$0xff]
        %v494 = vld [vmem:[%s250 + $0x698] sm:$0xff]
        %v495 = vld [vmem:[%s250 + $0x6a0] sm:$0xff]
        %v496 = vld [vmem:[%s250 + $0x6a8] sm:$0xff]
        %v497 = vld [vmem:[%s250 + $0x6b0] sm:$0xff]
        %v498 = vld [vmem:[%s250 + $0x6b8] sm:$0xff]
        %v499 = vld [vmem:[%s250 + $0x6c0] sm:$0xff]
        %v500 = vld [vmem:[%s250 + $0x6c8] sm:$0xff]
        %v501 = vld [vmem:[%s250 + $0x6d0] sm:$0xff]
        %v502 = vld [vmem:[%s250 + $0x6d8] sm:$0xff]
        %v503 = vld [vmem:[%s250 + $0x6e0] sm:$0xff]
        %v504 = vld [vmem:[%s250 + $0x6e8] sm:$0xff]
        %v505 = vld [vmem:[%s250 + $0x6f0] sm:$0xff]
        %v506 = vld [vmem:[%s250 + $0x6f8] sm:$0xff]
        %v507 = vld [vmem:[%s250 + $0x700] sm:$0xff]
        %v508 = vld [vmem:[%s250 + $0x708] sm:$0xff]
        %v509 = vld [vmem:[%s250 + $0x710] sm:$0xff]
        %v510 = vld [vmem:[%s250 + $0x718] sm:$0xff]
        %v511 = vld [vmem:[%s250 + $0x720] sm:$0xff]
        %v512 = vld [vmem:[%s250 + $0x728] sm:$0xff]
        %v513 = vld [vmem:[%s250 + $0x730] sm:$0xff]
        %v514 = vld [vmem:[%s250 + $0x738] sm:$0xff]
        %v515 = vld [vmem:[%s250 + $0x740] sm:$0xff]
        %v516 = vld [vmem:[%s250 + $0x748] sm:$0xff]
        %v517 = vld [vmem:[%s250 + $0x750] sm:$0xff]
        %v518 = vld [vmem:[%s250 + $0x758] sm:$0xff]
        %v519 = vld [vmem:[%s250 + $0x760] sm:$0xff]
        %v520 = vld [vmem:[%s250 + $0x768] sm:$0xff]
        %v521 = vld [vmem:[%s250 + $0x770] sm:$0xff]
        %v522 = vld [vmem:[%s250 + $0x778] sm:$0xff]
        %v523 = vld [vmem:[%s250 + $0x780] sm:$0xff]
        %v524 = vld [vmem:[%s250 + $0x788] sm:$0xff]
        %v525 = vld [vmem:[%s250 + $0x790] sm:$0xff]
        %v526 = vld [vmem:[%s250 + $0x798] sm:$0xff]
        %v527 = vld [vmem:[%s250 + $0x7a0] sm:$0xff]
        %v528 = vld [vmem:[%s250 + $0x7a8] sm:$0xff]
        %v529 = vld [vmem:[%s250 + $0x7b0] sm:$0xff]
        %v530 = vld [vmem:[%s250 + $0x7b8] sm:$0xff]
        %v531 = vld [vmem:[%s250 + $0x7c0] sm:$0xff]
        %v532 = vld [vmem:[%s250 + $0x7c8] sm:$0xff]
        %v533 = vld [vmem:[%s250 + $0x7d0] sm:$0xff]
        %v534 = vld [vmem:[%s250 + $0x7d8] sm:$0xff]
        %v535 = vld [vmem:[%s250 + $0x7e0] sm:$0xff]
        %v536 = vld [vmem:[%s250 + $0x7e8] sm:$0xff]
        %v537 = vld [vmem:[%s250 + $0x7f0] sm:$0xff]
        %v538 = vld [vmem:[%s250 + $0x7f8] sm:$0xff]
        %v539 = vld [vmem:[%s250 + $0x800] sm:$0xff]
        %v540 = vld [vmem:[%s250 + $0x808] sm:$0xff]
        %v541 = vld [vmem:[%s250 + $0x810] sm:$0xff]
        %v542 = vld [vmem:[%s250 + $0x818] sm:$0xff]
        %v543 = vld [vmem:[%s250 + $0x820] sm:$0xff]
        %v544 = vld [vmem:[%s250 + $0x828] sm:$0xff]
        %v545 = vld [vmem:[%s250 + $0x830] sm:$0xff]
        %v546 = vld [vmem:[%s250 + $0x838] sm:$0xff]
        %v547 = vld [vmem:[%s250 + $0x840] sm:$0xff]
        %v548 = vld [vmem:[%s250 + $0x848] sm:$0xff]
        %v549 = vld [vmem:[%s250 + $0x850] sm:$0xff]
        %v550 = vld [vmem:[%s250 + $0x858] sm:$0xff]
        %v551 = vld [vmem:[%s250 + $0x860] sm:$0xff]
        %v552 = vld [vmem:[%s250 + $0x868] sm:$0xff]
        %v553 = vld [vmem:[%s250 + $0x870] sm:$0xff]
        %v554 = vld [vmem:[%s250 + $0x878] sm:$0xff]
        %v555 = vld [vmem:[%s250 + $0x880] sm:$0xff]
        %v556 = vld [vmem:[%s250 + $0x888] sm:$0xff]
        %v557 = vld [vmem:[%s250 + $0x890] sm:$0xff]
        %v558 = vld [vmem:[%s250 + $0x898] sm:$0xff]
        %v559 = vld [vmem:[%s250 + $0x8a0] sm:$0xff]
        %v560 = vld [vmem:[%s250 + $0x8a8] sm:$0xff]
        %v561 = vld [vmem:[%s250 + $0x8b0] sm:$0xff]
        %v562 = vld [vmem:[%s250 + $0x8b8] sm:$0xff]
        %v563 = vld [vmem:[%s250 + $0x8c0] sm:$0xff]
        %v564 = vld [vmem:[%s250 + $0x8c8] sm:$0xff]
        %v565 = vld [vmem:[%s250 + $0x8d0] sm:$0xff]
        %v566 = vld [vmem:[%s250 + $0x8d8] sm:$0xff]
        %v567 = vld [vmem:[%s250 + $0x8e0] sm:$0xff]
        %v568 = vld [vmem:[%s250 + $0x8e8] sm:$0xff]
        %v569 = vld [vmem:[%s250 + $0x8f0] sm:$0xff]
        %v570 = vld [vmem:[%s250 + $0x8f8] sm:$0xff]
        %v571 = vld [vmem:[%s250 + $0x900] sm:$0xff]
        %v572 = vld [vmem:[%s250 + $0x908] sm:$0xff]
        %v573 = vld [vmem:[%s250 + $0x910] sm:$0xff]
        %v574 = vld [vmem:[%s250 + $0x918] sm:$0xff]
        %v575 = vld [vmem:[%s250 + $0x920] sm:$0xff]
        %v576 = vld [vmem:[%s250 + $0x928] sm:$0xff]
        %v577 = vld [vmem:[%s250 + $0x930] sm:$0xff]
        %v578 = vld [vmem:[%s250 + $0x938] sm:$0xff]
        %v579 = vld [vmem:[%s250 + $0x940] sm:$0xff]
        %v580 = vld [vmem:[%s250 + $0x948] sm:$0xff]
        %v581 = vld [vmem:[%s250 + $0x950] sm:$0xff]
        %v582 = vld [vmem:[%s250 + $0x958] sm:$0xff]
        %v583 = vld [vmem:[%s250 + $0x960] sm:$0xff]
        %v584 = vld [vmem:[%s250 + $0x968] sm:$0xff]
        %v585 = vld [vmem:[%s250 + $0x970] sm:$0xff]
        %v586 = vld [vmem:[%s250 + $0x978] sm:$0xff]
        %v587 = vld [vmem:[%s250 + $0x980] sm:$0xff]
        %v588 = vld [vmem:[%s250 + $0x988] sm:$0xff]
        %v589 = vld [vmem:[%s250 + $0x990] sm:$0xff]
        %v590 = vld [vmem:[%s250 + $0x998] sm:$0xff]
        %v591 = vld [vmem:[%s250 + $0x9a0] sm:$0xff]
        %v592 = vld [vmem:[%s250 + $0x9a8] sm:$0xff]
        %v593 = vld [vmem:[%s250 + $0x9b0] sm:$0xff]
        %v594 = vld [vmem:[%s250 + $0x9b8] sm:$0xff]
        %v595 = vld [vmem:[%s250 + $0x9c0] sm:$0xff]
        %v596 = vld [vmem:[%s250 + $0x9c8] sm:$0xff]
        %v597 = vld [vmem:[%s250 + $0x9d0] sm:$0xff]
        %v598 = vld [vmem:[%s250 + $0x9d8] sm:$0xff]
        %v599 = vld [vmem:[%s250 + $0x9e0] sm:$0xff]
        %v600 = vld [vmem:[%s250 + $0x9e8] sm:$0xff]
        %v601 = vld [vmem:[%s250 + $0x9f0] sm:$0xff]
        %v602 = vld [vmem:[%s250 + $0x9f8] sm:$0xff]
        %v603 = vld [vmem:[%s250 + $0xa00] sm:$0xff]
        %v604 = vld [vmem:[%s250 + $0xa08] sm:$0xff]
        %v605 = vld [vmem:[%s250 + $0xa10] sm:$0xff]
        %v606 = vld [vmem:[%s250 + $0xa18] sm:$0xff]
        %v607 = vld [vmem:[%s250 + $0xa20] sm:$0xff]
        %v608 = vld [vmem:[%s250 + $0xa28] sm:$0xff]
        %v609 = vld [vmem:[%s250 + $0xa30] sm:$0xff]
        %v610 = vld [vmem:[%s250 + $0xa38] sm:$0xff]
        %v611 = vld [vmem:[%s250 + $0xa40] sm:$0xff]
        %v612 = vld [vmem:[%s250 + $0xa48] sm:$0xff]
        %v613 = vld [vmem:[%s250 + $0xa50] sm:$0xff]
        %v614 = vld [vmem:[%s250 + $0xa58] sm:$0xff]
        %v615 = vld [vmem:[%s250 + $0xa60] sm:$0xff]
        %v616 = vld [vmem:[%s250 + $0xa68] sm:$0xff]
        %v617 = vld [vmem:[%s250 + $0xa70] sm:$0xff]
        %v618 = vld [vmem:[%s250 + $0xa78] sm:$0xff]
        %v619 = vld [vmem:[%s250 + $0xa80] sm:$0xff]
        %v620 = vld [vmem:[%s250 + $0xa88] sm:$0xff]
        %v621 = vld [vmem:[%s250 + $0xa90] sm:$0xff]
        %v622 = vld [vmem:[%s250 + $0xa98] sm:$0xff]
        %v623 = vld [vmem:[%s250 + $0xaa0] sm:$0xff]
        %v624 = vld [vmem:[%s250 + $0xaa8] sm:$0xff]
        %v625 = vld [vmem:[%s250 + $0xab0] sm:$0xff]
        %v626 = vld [vmem:[%s250 + $0xab8] sm:$0xff]
        %v627 = vld [vmem:[%s250 + $0xac0] sm:$0xff]
        %v628 = vld [vmem:[%s250 + $0xac8] sm:$0xff]
        %v629 = vld [vmem:[%s250 + $0xad0] sm:$0xff]
        %v630 = vld [vmem:[%s250 + $0xad8] sm:$0xff]
        %v631 = vld [vmem:[%s250 + $0xae0] sm:$0xff]
        %v632 = vld [vmem:[%s250 + $0xae8] sm:$0xff]
        %v633 = vld [vmem:[%s250 + $0xaf0] sm:$0xff]
        %v634 = vld [vmem:[%s250 + $0xaf8] sm:$0xff]
        %v635 = vld [vmem:[%s250 + $0xb00] sm:$0xff]
        %v636 = vld [vmem:[%s250 + $0xb08] sm:$0xff]
        %v637 = vld [vmem:[%s250 + $0xb10] sm:$0xff]
        %v638 = vld [vmem:[%s250 + $0xb18] sm:$0xff]
        %v639 = vld [vmem:[%s250 + $0xb20] sm:$0xff]
        %v640 = vld [vmem:[%s250 + $0xb28] sm:$0xff]
        %v641 = vld [vmem:[%s250 + $0xb30] sm:$0xff]
        %v642 = vld [vmem:[%s250 + $0xb38] sm:$0xff]
        %v643 = vld [vmem:[%s250 + $0xb40] sm:$0xff]
        %v644 = vld [vmem:[%s250 + $0xb48] sm:$0xff]
        %v645 = vld [vmem:[%s250 + $0xb50] sm:$0xff]
        %v646 = vld [vmem:[%s250 + $0xb58] sm:$0xff]
        %v647 = vld [vmem:[%s250 + $0xb60] sm:$0xff]
        %v648 = vld [vmem:[%s250 + $0xb68] sm:$0xff]
        %v649 = vld [vmem:[%s250 + $0xb70] sm:$0xff]
        %v650 = vld [vmem:[%s250 + $0xb78] sm:$0xff]
        %v651 = vld [vmem:[%s250 + $0xb80] sm:$0xff]
        %v652 = vld [vmem:[%s250 + $0xb88] sm:$0xff]
        %v653 = vld [vmem:[%s250 + $0xb90] sm:$0xff]
        %v654 = vld [vmem:[%s250 + $0xb98] sm:$0xff]
        %v655 = vld [vmem:[%s250 + $0xba0] sm:$0xff]
        %v656 = vld [vmem:[%s250 + $0xba8] sm:$0xff]
        %v657 = vld [vmem:[%s250 + $0xbb0] sm:$0xff]
        %v658 = vld [vmem:[%s250 + $0xbb8] sm:$0xff]
        %v659 = vld [vmem:[%s250 + $0xbc0] sm:$0xff]
        %v660 = vld [vmem:[%s250 + $0xbc8] sm:$0xff]
        %v661 = vld [vmem:[%s250 + $0xbd0] sm:$0xff]
        %v662 = vld [vmem:[%s250 + $0xbd8] sm:$0xff]
        %v663 = vld [vmem:[%s250 + $0xbe0] sm:$0xff]
        %v664 = vld [vmem:[%s250 + $0xbe8] sm:$0xff]
        %v665 = vld [vmem:[%s250 + $0xbf0] sm:$0xff]
        %v666 = vld [vmem:[%s250 + $0xbf8] sm:$0xff]
        %v667 = vld [vmem:[%s250 + $0xc00] sm:$0xff]
        %v668 = vld [vmem:[%s250 + $0xc08] sm:$0xff]
        %v669 = vld [vmem:[%s250 + $0xc10] sm:$0xff]
        %v670 = vld [vmem:[%s250 + $0xc18] sm:$0xff]
        %v671 = vld [vmem:[%s250 + $0xc20] sm:$0xff]
        %v672 = vld [vmem:[%s250 + $0xc28] sm:$0xff]
        %v673 = vld [vmem:[%s250 + $0xc30] sm:$0xff]
        %v674 = vld [vmem:[%s250 + $0xc38] sm:$0xff]
        %v675 = vld [vmem:[%s250 + $0xc40] sm:$0xff]
        %v676 = vld [vmem:[%s250 + $0xc48] sm:$0xff]
        %v677 = vld [vmem:[%s250 + $0xc50] sm:$0xff]
        %v678 = vld [vmem:[%s250 + $0xc58] sm:$0xff]
        %v679 = vld [vmem:[%s250 + $0xc60] sm:$0xff]
        %v680 = vld [vmem:[%s250 + $0xc68] sm:$0xff]
        %v681 = vld [vmem:[%s250 + $0xc70] sm:$0xff]
        %v682 = vld [vmem:[%s250 + $0xc78] sm:$0xff]
        %v683 = vld [vmem:[%s250 + $0xc80] sm:$0xff]
        %v684 = vld [vmem:[%s250 + $0xc88] sm:$0xff]
        %v685 = vld [vmem:[%s250 + $0xc90] sm:$0xff]
        %v686 = vld [vmem:[%s250 + $0xc98] sm:$0xff]
        %v687 = vld [vmem:[%s250 + $0xca0] sm:$0xff]
        %v688 = vld [vmem:[%s250 + $0xca8] sm:$0xff]
        %v689 = vld [vmem:[%s250 + $0xcb0] sm:$0xff]
        %v690 = vld [vmem:[%s250 + $0xcb8] sm:$0xff]
        %v691 = vld [vmem:[%s250 + $0xcc0] sm:$0xff]
        %v692 = vld [vmem:[%s250 + $0xcc8] sm:$0xff]
        %v693 = vld [vmem:[%s250 + $0xcd0] sm:$0xff]
        %v694 = vld [vmem:[%s250 + $0xcd8] sm:$0xff]
        %v695 = vld [vmem:[%s250 + $0xce0] sm:$0xff]
        %v696 = vld [vmem:[%s250 + $0xce8] sm:$0xff]
        %v697 = vld [vmem:[%s250 + $0xcf0] sm:$0xff]
        %v698 = vld [vmem:[%s250 + $0xcf8] sm:$0xff]
        %v699 = vld [vmem:[%s250 + $0xd00] sm:$0xff]
        %v700 = vld [vmem:[%s250 + $0xd08] sm:$0xff]
        %v701 = vld [vmem:[%s250 + $0xd10] sm:$0xff]
        %v702 = vld [vmem:[%s250 + $0xd18] sm:$0xff]
        %v703 = vld [vmem:[%s250 + $0xd20] sm:$0xff]
        %v704 = vld [vmem:[%s250 + $0xd28] sm:$0xff]
        %v705 = vld [vmem:[%s250 + $0xd30] sm:$0xff]
        %v706 = vld [vmem:[%s250 + $0xd38] sm:$0xff]
        %v707 = vld [vmem:[%s250 + $0xd40] sm:$0xff]
        %v708 = vld [vmem:[%s250 + $0xd48] sm:$0xff]
        %v709 = vld [vmem:[%s250 + $0xd50] sm:$0xff]
        %v710 = vld [vmem:[%s250 + $0xd58] sm:$0xff]
        %v711 = vld [vmem:[%s250 + $0xd60] sm:$0xff]
        %v712 = vld [vmem:[%s250 + $0xd68] sm:$0xff]
        %v713 = vld [vmem:[%s250 + $0xd70] sm:$0xff]
        %v714 = vld [vmem:[%s250 + $0xd78] sm:$0xff]
        %v715 = vld [vmem:[%s250 + $0xd80] sm:$0xff]
        %v716 = vld [vmem:[%s250 + $0xd88] sm:$0xff]
        %v717 = vld [vmem:[%s250 + $0xd90] sm:$0xff]
        %v718 = vld [vmem:[%s250 + $0xd98] sm:$0xff]
        %v719 = vld [vmem:[%s250 + $0xda0] sm:$0xff]
        %v720 = vld [vmem:[%s250 + $0xda8] sm:$0xff]
        %v721 = vld [vmem:[%s250 + $0xdb0] sm:$0xff]
        %v722 = vld [vmem:[%s250 + $0xdb8] sm:$0xff]
        %v723 = vld [vmem:[%s250 + $0xdc0] sm:$0xff]
        %v724 = vld [vmem:[%s250 + $0xdc8] sm:$0xff]
        %v725 = vld [vmem:[%s250 + $0xdd0] sm:$0xff]
        %v726 = vld [vmem:[%s250 + $0xdd8] sm:$0xff]
        %v727 = vld [vmem:[%s250 + $0xde0] sm:$0xff]
        %v728 = vld [vmem:[%s250 + $0xde8] sm:$0xff]
        %v729 = vld [vmem:[%s250 + $0xdf0] sm:$0xff]
        %v730 = vld [vmem:[%s250 + $0xdf8] sm:$0xff]
        %v731 = vld [vmem:[%s250 + $0xe00] sm:$0xff]
        %v732 = vld [vmem:[%s250 + $0xe08] sm:$0xff]
        %v733 = vld [vmem:[%s250 + $0xe10] sm:$0xff]
        %v734 = vld [vmem:[%s250 + $0xe18] sm:$0xff]
        %v735 = vld [vmem:[%s250 + $0xe20] sm:$0xff]
        %v736 = vld [vmem:[%s250 + $0xe28] sm:$0xff]
        %v737 = vld [vmem:[%s250 + $0xe30] sm:$0xff]
        %v738 = vld [vmem:[%s250 + $0xe38] sm:$0xff]
        %v739 = vld [vmem:[%s250 + $0xe40] sm:$0xff]
        %v740 = vld [vmem:[%s250 + $0xe48] sm:$0xff]
        %v741 = vld [vmem:[%s250 + $0xe50] sm:$0xff]
        %v742 = vld [vmem:[%s250 + $0xe58] sm:$0xff]
        %v743 = vld [vmem:[%s250 + $0xe60] sm:$0xff]
        %v744 = vld [vmem:[%s250 + $0xe68] sm:$0xff]
        %v745 = vld [vmem:[%s250 + $0xe70] sm:$0xff]
        %v746 = vld [vmem:[%s250 + $0xe78] sm:$0xff]
        %v747 = vld [vmem:[%s250 + $0xe80] sm:$0xff]
        %v748 = vld [vmem:[%s250 + $0xe88] sm:$0xff]
        %v749 = vld [vmem:[%s250 + $0xe90] sm:$0xff]
        %v750 = vld [vmem:[%s250 + $0xe98] sm:$0xff]
        %v751 = vld [vmem:[%s250 + $0xea0] sm:$0xff]
        %v752 = vld [vmem:[%s250 + $0xea8] sm:$0xff]
        %v753 = vld [vmem:[%s250 + $0xeb0] sm:$0xff]
        %v754 = vld [vmem:[%s250 + $0xeb8] sm:$0xff]
        %v755 = vld [vmem:[%s250 + $0xec0] sm:$0xff]
        %v756 = vld [vmem:[%s250 + $0xec8] sm:$0xff]
        %v757 = vld [vmem:[%s250 + $0xed0] sm:$0xff]
        %v758 = vld [vmem:[%s250 + $0xed8] sm:$0xff]
        %v759 = vld [vmem:[%s250 + $0xee0] sm:$0xff]
        %v760 = vld [vmem:[%s250 + $0xee8] sm:$0xff]
        %v761 = vld [vmem:[%s250 + $0xef0] sm:$0xff]
        %v762 = vld [vmem:[%s250 + $0xef8] sm:$0xff]
        %v763 = vld [vmem:[%s250 + $0xf00] sm:$0xff]
        %v764 = vld [vmem:[%s250 + $0xf08] sm:$0xff]
        %v765 = vld [vmem:[%s250 + $0xf10] sm:$0xff]
        %v766 = vld [vmem:[%s250 + $0xf18] sm:$0xff]
        %v767 = vld [vmem:[%s250 + $0xf20] sm:$0xff]
        %v768 = vld [vmem:[%s250 + $0xf28] sm:$0xff]
        %v769 = vld [vmem:[%s250 + $0xf30] sm:$0xff]
        %v770 = vld [vmem:[%s250 + $0xf38] sm:$0xff]
        %v771 = vld [vmem:[%s250 + $0xf40] sm:$0xff]
        %v772 = vld [vmem:[%s250 + $0xf48] sm:$0xff]
        %v773 = vld [vmem:[%s250 + $0xf50] sm:$0xff]
        %v774 = vld [vmem:[%s250 + $0xf58] sm:$0xff]
        %v775 = vld [vmem:[%s250 + $0xf60] sm:$0xff]
        %v776 = vld [vmem:[%s250 + $0xf68] sm:$0xff]
        %v777 = vld [vmem:[%s250 + $0xf70] sm:$0xff]
        %v778 = vld [vmem:[%s250 + $0xf78] sm:$0xff]
        %v779 = vld [vmem:[%s250 + $0xf80] sm:$0xff]
        %v780 = vld [vmem:[%s250 + $0xf88] sm:$0xff]
        %v781 = vld [vmem:[%s250 + $0xf90] sm:$0xff]
        %v782 = vld [vmem:[%s250 + $0xf98] sm:$0xff]
        %v783 = vld [vmem:[%s250 + $0xfa0] sm:$0xff]
        %v784 = vld [vmem:[%s250 + $0xfa8] sm:$0xff]
        %v785 = vld [vmem:[%s250 + $0xfb0] sm:$0xff]
        %v786 = vld [vmem:[%s250 + $0xfb8] sm:$0xff]
        %v787 = vld [vmem:[%s250 + $0xfc0] sm:$0xff]
        %v788 = vld [vmem:[%s250 + $0xfc8] sm:$0xff]
        %v789 = vld [vmem:[%s250 + $0xfd0] sm:$0xff]
        %v790 = vld [vmem:[%s250 + $0xfd8] sm:$0xff]
        %v791 = vld [vmem:[%s250 + $0xfe0] sm:$0xff]
        %v792 = vld [vmem:[%s250 + $0xfe8] sm:$0xff]
        %v793 = vld [vmem:[%s250 + $0xff0] sm:$0xff]
        %v794 = vld [vmem:[%s250 + $0xff8] sm:$0xff]
        %795 = vmatprep.subr.mxu0 %v284
        %796 = vmatpush1.msra.mxu0 %v283
        %797 = vmatprep.subr.mxu0 %v300
        %798 = vmatpush1.msra.mxu0 %v299
        %799 = vmatprep.subr.mxu0 %v316
        %800 = vmatpush1.msra.mxu0 %v315
        %801 = vmatprep.subr.mxu0 %v332
        %802 = vmatpush1.msra.mxu0 %v331
        %803 = vmatprep.subr.mxu0 %v348
        %804 = vmatpush1.msra.mxu0 %v347
        %805 = vmatprep.subr.mxu0 %v364
        %806 = vmatpush1.msra.mxu0 %v363
        %807 = vmatprep.subr.mxu0 %v380
        %808 = vmatpush1.msra.mxu0 %v379
        %809 = vmatprep.subr.mxu0 %v396
        %810 = vmatpush1.msra.mxu0 %v395
        %811 = vmatprep.subr.mxu0 %v412
        %812 = vmatpush1.msra.mxu0 %v411
        %813 = vmatprep.subr.mxu0 %v428
        %814 = vmatpush1.msra.mxu0 %v427
        %815 = vmatprep.subr.mxu0 %v444
        %816 = vmatpush1.msra.mxu0 %v443
        %817 = vmatprep.subr.mxu0 %v460
        %818 = vmatpush1.msra.mxu0 %v459
        %819 = vmatprep.subr.mxu0 %v476
        %820 = vmatpush1.msra.mxu0 %v475
        %821 = vmatprep.subr.mxu0 %v492
        %822 = vmatpush1.msra.mxu0 %v491
        %823 = vmatprep.subr.mxu0 %v508
        %824 = vmatpush1.msra.mxu0 %v507
        %825 = vmatprep.subr.mxu0 %v524
        %826 = vmatpush1.msra.mxu0 %v523
        %827 = vmatprep.subr.mxu0 %v540
        %828 = vmatpush1.msra.mxu0 %v539
        %829 = vmatprep.subr.mxu0 %v556
        %830 = vmatpush1.msra.mxu0 %v555
        %831 = vmatprep.subr.mxu0 %v572
        %832 = vmatpush1.msra.mxu0 %v571
        %833 = vmatprep.subr.mxu0 %v588
        %834 = vmatpush1.msra.mxu0 %v587
        %835 = vmatprep.subr.mxu0 %v604
        %836 = vmatpush1.msra.mxu0 %v603
        %837 = vmatprep.subr.mxu0 %v620
        %838 = vmatpush1.msra.mxu0 %v619
        %839 = vmatprep.subr.mxu0 %v636
        %840 = vmatpush1.msra.mxu0 %v635
        %841 = vmatprep.subr.mxu0 %v652
        %842 = vmatpush1.msra.mxu0 %v651
        %843 = vmatprep.subr.mxu0 %v668
        %844 = vmatpush1.msra.mxu0 %v667
        %845 = vmatprep.subr.mxu0 %v684
        %846 = vmatpush1.msra.mxu0 %v683
        %847 = vmatprep.subr.mxu0 %v700
        %848 = vmatpush1.msra.mxu0 %v699
        %849 = vmatprep.subr.mxu0 %v716
        %850 = vmatpush1.msra.mxu0 %v715
        %851 = vmatprep.subr.mxu0 %v732
        %852 = vmatpush1.msra.mxu0 %v731
        %853 = vmatprep.subr.mxu0 %v748
        %854 = vmatpush1.msra.mxu0 %v747
        %855 = vmatprep.subr.mxu0 %v764
        %856 = vmatpush1.msra.mxu0 %v763
        %857 = vmatprep.subr.mxu0 %v780
        %858 = vmatpush1.msra.mxu0 %v779
        %859 = vmatprep.mubr.f32.mxu0 %v282
        %860 = vmatmul.mubr.f32.gmra.mrb[0].mxu0 %v281
        %v861 = vpop.f32.mrb[0].mxu0
        %v862 = vadd.f32 0.0, %v861
        %v863 = vpop.f32.mrb[0].mxu0
        %v864 = vadd.f32 0.0, %v863
        %865 = vdwg.mxu0
        %866 = vmatprep.subr.mxu0 %v286
        %867 = vmatpush1.msra.mxu0 %v285
        %868 = vmatprep.subr.mxu0 %v302
        %869 = vmatpush1.msra.mxu0 %v301
        %870 = vmatprep.subr.mxu0 %v318
        %871 = vmatpush1.msra.mxu0 %v317
        %872 = vmatprep.subr.mxu0 %v334
        %873 = vmatpush1.msra.mxu0 %v333
        %874 = vmatprep.subr.mxu0 %v350
        %875 = vmatpush1.msra.mxu0 %v349
        %876 = vmatprep.subr.mxu0 %v366
        %877 = vmatpush1.msra.mxu0 %v365
        %878 = vmatprep.subr.mxu0 %v382
        %879 = vmatpush1.msra.mxu0 %v381
        %880 = vmatprep.subr.mxu0 %v398
        %881 = vmatpush1.msra.mxu0 %v397
        %882 = vmatprep.subr.mxu0 %v414
        %883 = vmatpush1.msra.mxu0 %v413
        %884 = vmatprep.subr.mxu0 %v430
        %885 = vmatpush1.msra.mxu0 %v429
        %886 = vmatprep.subr.mxu0 %v446
        %887 = vmatpush1.msra.mxu0 %v445
        %888 = vmatprep.subr.mxu0 %v462
        %889 = vmatpush1.msra.mxu0 %v461
        %890 = vmatprep.subr.mxu0 %v478
        %891 = vmatpush1.msra.mxu0 %v477
        %892 = vmatprep.subr.mxu0 %v494
        %893 = vmatpush1.msra.mxu0 %v493
        %894 = vmatprep.subr.mxu0 %v510
        %895 = vmatpush1.msra.mxu0 %v509
        %896 = vmatprep.subr.mxu0 %v526
        %897 = vmatpush1.msra.mxu0 %v525
        %898 = vmatprep.subr.mxu0 %v542
        %899 = vmatpush1.msra.mxu0 %v541
        %900 = vmatprep.subr.mxu0 %v558
        %901 = vmatpush1.msra.mxu0 %v557
        %902 = vmatprep.subr.mxu0 %v574
        %903 = vmatpush1.msra.mxu0 %v573
        %904 = vmatprep.subr.mxu0 %v590
        %905 = vmatpush1.msra.mxu0 %v589
        %906 = vmatprep.subr.mxu0 %v606
        %907 = vmatpush1.msra.mxu0 %v605
        %908 = vmatprep.subr.mxu0 %v622
        %909 = vmatpush1.msra.mxu0 %v621
        %910 = vmatprep.subr.mxu0 %v638
        %911 = vmatpush1.msra.mxu0 %v637
        %912 = vmatprep.subr.mxu0 %v654
        %913 = vmatpush1.msra.mxu0 %v653
        %914 = vmatprep.subr.mxu0 %v670
        %915 = vmatpush1.msra.mxu0 %v669
        %916 = vmatprep.subr.mxu0 %v686
        %917 = vmatpush1.msra.mxu0 %v685
        %918 = vmatprep.subr.mxu0 %v702
        %919 = vmatpush1.msra.mxu0 %v701
        %920 = vmatprep.subr.mxu0 %v718
        %921 = vmatpush1.msra.mxu0 %v717
        %922 = vmatprep.subr.mxu0 %v734
        %923 = vmatpush1.msra.mxu0 %v733
        %924 = vmatprep.subr.mxu0 %v750
        %925 = vmatpush1.msra.mxu0 %v749
        %926 = vmatprep.subr.mxu0 %v766
        %927 = vmatpush1.msra.mxu0 %v765
        %928 = vmatprep.subr.mxu0 %v782
        %929 = vmatpush1.msra.mxu0 %v781
        %930 = vmatprep.mubr.f32.mxu0 %v282
        %931 = vmatmul.mubr.f32.gmra.mrb[0].mxu0 %v281
        %v932 = vpop.f32.mrb[0].mxu0
        %v933 = vadd.f32 0.0, %v932
        %v934 = vpop.f32.mrb[0].mxu0
        %v935 = vadd.f32 0.0, %v934
        %936 = vdwg.mxu0
        %937 = vmatprep.subr.mxu0 %v288
        %938 = vmatpush1.msra.mxu0 %v287
        %939 = vmatprep.subr.mxu0 %v304
        %940 = vmatpush1.msra.mxu0 %v303
        %941 = vmatprep.subr.mxu0 %v320
        %942 = vmatpush1.msra.mxu0 %v319
        %943 = vmatprep.subr.mxu0 %v336
        %944 = vmatpush1.msra.mxu0 %v335
        %945 = vmatprep.subr.mxu0 %v352
        %946 = vmatpush1.msra.mxu0 %v351
        %947 = vmatprep.subr.mxu0 %v368
        %948 = vmatpush1.msra.mxu0 %v367
        %949 = vmatprep.subr.mxu0 %v384
        %950 = vmatpush1.msra.mxu0 %v383
        %951 = vmatprep.subr.mxu0 %v400
        %952 = vmatpush1.msra.mxu0 %v399
        %953 = vmatprep.subr.mxu0 %v416
        %954 = vmatpush1.msra.mxu0 %v415
        %955 = vmatprep.subr.mxu0 %v432
        %956 = vmatpush1.msra.mxu0 %v431
        %957 = vmatprep.subr.mxu0 %v448
        %958 = vmatpush1.msra.mxu0 %v447
        %959 = vmatprep.subr.mxu0 %v464
        %960 = vmatpush1.msra.mxu0 %v463
        %961 = vmatprep.subr.mxu0 %v480
        %962 = vmatpush1.msra.mxu0 %v479
        %963 = vmatprep.subr.mxu0 %v496
        %964 = vmatpush1.msra.mxu0 %v495
        %965 = vmatprep.subr.mxu0 %v512
        %966 = vmatpush1.msra.mxu0 %v511
        %967 = vmatprep.subr.mxu0 %v528
        %968 = vmatpush1.msra.mxu0 %v527
        %969 = vmatprep.subr.mxu0 %v544
        %970 = vmatpush1.msra.mxu0 %v543
        %971 = vmatprep.subr.mxu0 %v560
        %972 = vmatpush1.msra.mxu0 %v559
        %973 = vmatprep.subr.mxu0 %v576
        %974 = vmatpush1.msra.mxu0 %v575
        %975 = vmatprep.subr.mxu0 %v592
        %976 = vmatpush1.msra.mxu0 %v591
        %977 = vmatprep.subr.mxu0 %v608
        %978 = vmatpush1.msra.mxu0 %v607
        %979 = vmatprep.subr.mxu0 %v624
        %980 = vmatpush1.msra.mxu0 %v623
        %981 = vmatprep.subr.mxu0 %v640
        %982 = vmatpush1.msra.mxu0 %v639
        %983 = vmatprep.subr.mxu0 %v656
        %984 = vmatpush1.msra.mxu0 %v655
        %985 = vmatprep.subr.mxu0 %v672
        %986 = vmatpush1.msra.mxu0 %v671
        %987 = vmatprep.subr.mxu0 %v688
        %988 = vmatpush1.msra.mxu0 %v687
        %989 = vmatprep.subr.mxu0 %v704
        %990 = vmatpush1.msra.mxu0 %v703
        %991 = vmatprep.subr.mxu0 %v720
        %992 = vmatpush1.msra.mxu0 %v719
        %993 = vmatprep.subr.mxu0 %v736
        %994 = vmatpush1.msra.mxu0 %v735
        %995 = vmatprep.subr.mxu0 %v752
        %996 = vmatpush1.msra.mxu0 %v751
        %997 = vmatprep.subr.mxu0 %v768
        %998 = vmatpush1.msra.mxu0 %v767
        %999 = vmatprep.subr.mxu0 %v784
        %1000 = vmatpush1.msra.mxu0 %v783
        %1001 = vmatprep.mubr.f32.mxu0 %v282
        %1002 = vmatmul.mubr.f32.gmra.mrb[0].mxu0 %v281
        %v1003 = vpop.f32.mrb[0].mxu0
        %v1004 = vadd.f32 0.0, %v1003
        %v1005 = vpop.f32.mrb[0].mxu0
        %v1006 = vadd.f32 0.0, %v1005
        %1007 = vdwg.mxu0
        %1008 = vmatprep.subr.mxu0 %v290
        %1009 = vmatpush1.msra.mxu0 %v289
        %1010 = vmatprep.subr.mxu0 %v306
        %1011 = vmatpush1.msra.mxu0 %v305
        %1012 = vmatprep.subr.mxu0 %v322
        %1013 = vmatpush1.msra.mxu0 %v321
        %1014 = vmatprep.subr.mxu0 %v338
        %1015 = vmatpush1.msra.mxu0 %v337
        %1016 = vmatprep.subr.mxu0 %v354
        %1017 = vmatpush1.msra.mxu0 %v353
        %1018 = vmatprep.subr.mxu0 %v370
        %1019 = vmatpush1.msra.mxu0 %v369
        %1020 = vmatprep.subr.mxu0 %v386
        %1021 = vmatpush1.msra.mxu0 %v385
        %1022 = vmatprep.subr.mxu0 %v402
        %1023 = vmatpush1.msra.mxu0 %v401
        %1024 = vmatprep.subr.mxu0 %v418
        %1025 = vmatpush1.msra.mxu0 %v417
        %1026 = vmatprep.subr.mxu0 %v434
        %1027 = vmatpush1.msra.mxu0 %v433
        %1028 = vmatprep.subr.mxu0 %v450
        %1029 = vmatpush1.msra.mxu0 %v449
        %1030 = vmatprep.subr.mxu0 %v466
        %1031 = vmatpush1.msra.mxu0 %v465
        %1032 = vmatprep.subr.mxu0 %v482
        %1033 = vmatpush1.msra.mxu0 %v481
        %1034 = vmatprep.subr.mxu0 %v498
        %1035 = vmatpush1.msra.mxu0 %v497
        %1036 = vmatprep.subr.mxu0 %v514
        %1037 = vmatpush1.msra.mxu0 %v513
        %1038 = vmatprep.subr.mxu0 %v530
        %1039 = vmatpush1.msra.mxu0 %v529
        %1040 = vmatprep.subr.mxu0 %v546
        %1041 = vmatpush1.msra.mxu0 %v545
        %1042 = vmatprep.subr.mxu0 %v562
        %1043 = vmatpush1.msra.mxu0 %v561
        %1044 = vmatprep.subr.mxu0 %v578
        %1045 = vmatpush1.msra.mxu0 %v577
        %1046 = vmatprep.subr.mxu0 %v594
        %1047 = vmatpush1.msra.mxu0 %v593
        %1048 = vmatprep.subr.mxu0 %v610
        %1049 = vmatpush1.msra.mxu0 %v609
        %1050 = vmatprep.subr.mxu0 %v626
        %1051 = vmatpush1.msra.mxu0 %v625
        %1052 = vmatprep.subr.mxu0 %v642
        %1053 = vmatpush1.msra.mxu0 %v641
        %1054 = vmatprep.subr.mxu0 %v658
        %1055 = vmatpush1.msra.mxu0 %v657
        %1056 = vmatprep.subr.mxu0 %v674
        %1057 = vmatpush1.msra.mxu0 %v673
        %1058 = vmatprep.subr.mxu0 %v690
        %1059 = vmatpush1.msra.mxu0 %v689
        %1060 = vmatprep.subr.mxu0 %v706
        %1061 = vmatpush1.msra.mxu0 %v705
        %1062 = vmatprep.subr.mxu0 %v722
        %1063 = vmatpush1.msra.mxu0 %v721
        %1064 = vmatprep.subr.mxu0 %v738
        %1065 = vmatpush1.msra.mxu0 %v737
        %1066 = vmatprep.subr.mxu0 %v754
        %1067 = vmatpush1.msra.mxu0 %v753
        %1068 = vmatprep.subr.mxu0 %v770
        %1069 = vmatpush1.msra.mxu0 %v769
        %1070 = vmatprep.subr.mxu0 %v786
        %1071 = vmatpush1.msra.mxu0 %v785
        %1072 = vmatprep.mubr.f32.mxu0 %v282
        %1073 = vmatmul.mubr.f32.gmra.mrb[0].mxu0 %v281
        %v1074 = vpop.f32.mrb[0].mxu0
        %v1075 = vadd.f32 0.0, %v1074
        %v1076 = vpop.f32.mrb[0].mxu0
        %v1077 = vadd.f32 0.0, %v1076
        %1078 = vdwg.mxu0
        %1079 = vmatprep.subr.mxu0 %v292
        %1080 = vmatpush1.msra.mxu0 %v291
        %1081 = vmatprep.subr.mxu0 %v308
        %1082 = vmatpush1.msra.mxu0 %v307
        %1083 = vmatprep.subr.mxu0 %v324
        %1084 = vmatpush1.msra.mxu0 %v323
        %1085 = vmatprep.subr.mxu0 %v340
        %1086 = vmatpush1.msra.mxu0 %v339
        %1087 = vmatprep.subr.mxu0 %v356
        %1088 = vmatpush1.msra.mxu0 %v355
        %1089 = vmatprep.subr.mxu0 %v372
        %1090 = vmatpush1.msra.mxu0 %v371
        %1091 = vmatprep.subr.mxu0 %v388
        %1092 = vmatpush1.msra.mxu0 %v387
        %1093 = vmatprep.subr.mxu0 %v404
        %1094 = vmatpush1.msra.mxu0 %v403
        %1095 = vmatprep.subr.mxu0 %v420
        %1096 = vmatpush1.msra.mxu0 %v419
        %1097 = vmatprep.subr.mxu0 %v436
        %1098 = vmatpush1.msra.mxu0 %v435
        %1099 = vmatprep.subr.mxu0 %v452
        %1100 = vmatpush1.msra.mxu0 %v451
        %1101 = vmatprep.subr.mxu0 %v468
        %1102 = vmatpush1.msra.mxu0 %v467
        %1103 = vmatprep.subr.mxu0 %v484
        %1104 = vmatpush1.msra.mxu0 %v483
        %1105 = vmatprep.subr.mxu0 %v500
        %1106 = vmatpush1.msra.mxu0 %v499
        %1107 = vmatprep.subr.mxu0 %v516
        %1108 = vmatpush1.msra.mxu0 %v515
        %1109 = vmatprep.subr.mxu0 %v532
        %1110 = vmatpush1.msra.mxu0 %v531
        %1111 = vmatprep.subr.mxu0 %v548
        %1112 = vmatpush1.msra.mxu0 %v547
        %1113 = vmatprep.subr.mxu0 %v564
        %1114 = vmatpush1.msra.mxu0 %v563
        %1115 = vmatprep.subr.mxu0 %v580
        %1116 = vmatpush1.msra.mxu0 %v579
        %1117 = vmatprep.subr.mxu0 %v596
        %1118 = vmatpush1.msra.mxu0 %v595
        %1119 = vmatprep.subr.mxu0 %v612
        %1120 = vmatpush1.msra.mxu0 %v611
        %1121 = vmatprep.subr.mxu0 %v628
        %1122 = vmatpush1.msra.mxu0 %v627
        %1123 = vmatprep.subr.mxu0 %v644
        %1124 = vmatpush1.msra.mxu0 %v643
        %1125 = vmatprep.subr.mxu0 %v660
        %1126 = vmatpush1.msra.mxu0 %v659
        %1127 = vmatprep.subr.mxu0 %v676
        %1128 = vmatpush1.msra.mxu0 %v675
        %1129 = vmatprep.subr.mxu0 %v692
        %1130 = vmatpush1.msra.mxu0 %v691
        %1131 = vmatprep.subr.mxu0 %v708
        %1132 = vmatpush1.msra.mxu0 %v707
        %1133 = vmatprep.subr.mxu0 %v724
        %1134 = vmatpush1.msra.mxu0 %v723
        %1135 = vmatprep.subr.mxu0 %v740
        %1136 = vmatpush1.msra.mxu0 %v739
        %1137 = vmatprep.subr.mxu0 %v756
        %1138 = vmatpush1.msra.mxu0 %v755
        %1139 = vmatprep.subr.mxu0 %v772
        %1140 = vmatpush1.msra.mxu0 %v771
        %1141 = vmatprep.subr.mxu0 %v788
        %1142 = vmatpush1.msra.mxu0 %v787
        %1143 = vmatprep.mubr.f32.mxu0 %v282
        %1144 = vmatmul.mubr.f32.gmra.mrb[0].mxu0 %v281
        %v1145 = vpop.f32.mrb[0].mxu0
        %v1146 = vadd.f32 0.0, %v1145
        %v1147 = vpop.f32.mrb[0].mxu0
        %v1148 = vadd.f32 0.0, %v1147
        %1149 = vdwg.mxu0
        %1150 = vmatprep.subr.mxu0 %v294
        %1151 = vmatpush1.msra.mxu0 %v293
        %1152 = vmatprep.subr.mxu0 %v310
        %1153 = vmatpush1.msra.mxu0 %v309
        %1154 = vmatprep.subr.mxu0 %v326
        %1155 = vmatpush1.msra.mxu0 %v325
        %1156 = vmatprep.subr.mxu0 %v342
        %1157 = vmatpush1.msra.mxu0 %v341
        %1158 = vmatprep.subr.mxu0 %v358
        %1159 = vmatpush1.msra.mxu0 %v357
        %1160 = vmatprep.subr.mxu0 %v374
        %1161 = vmatpush1.msra.mxu0 %v373
        %1162 = vmatprep.subr.mxu0 %v390
        %1163 = vmatpush1.msra.mxu0 %v389
        %1164 = vmatprep.subr.mxu0 %v406
        %1165 = vmatpush1.msra.mxu0 %v405
        %1166 = vmatprep.subr.mxu0 %v422
        %1167 = vmatpush1.msra.mxu0 %v421
        %1168 = vmatprep.subr.mxu0 %v438
        %1169 = vmatpush1.msra.mxu0 %v437
        %1170 = vmatprep.subr.mxu0 %v454
        %1171 = vmatpush1.msra.mxu0 %v453
        %1172 = vmatprep.subr.mxu0 %v470
        %1173 = vmatpush1.msra.mxu0 %v469
        %1174 = vmatprep.subr.mxu0 %v486
        %1175 = vmatpush1.msra.mxu0 %v485
        %1176 = vmatprep.subr.mxu0 %v502
        %1177 = vmatpush1.msra.mxu0 %v501
        %1178 = vmatprep.subr.mxu0 %v518
        %1179 = vmatpush1.msra.mxu0 %v517
        %1180 = vmatprep.subr.mxu0 %v534
        %1181 = vmatpush1.msra.mxu0 %v533
        %1182 = vmatprep.subr.mxu0 %v550
        %1183 = vmatpush1.msra.mxu0 %v549
        %1184 = vmatprep.subr.mxu0 %v566
        %1185 = vmatpush1.msra.mxu0 %v565
        %1186 = vmatprep.subr.mxu0 %v582
        %1187 = vmatpush1.msra.mxu0 %v581
        %1188 = vmatprep.subr.mxu0 %v598
        %1189 = vmatpush1.msra.mxu0 %v597
        %1190 = vmatprep.subr.mxu0 %v614
        %1191 = vmatpush1.msra.mxu0 %v613
        %1192 = vmatprep.subr.mxu0 %v630
        %1193 = vmatpush1.msra.mxu0 %v629
        %1194 = vmatprep.subr.mxu0 %v646
        %1195 = vmatpush1.msra.mxu0 %v645
        %1196 = vmatprep.subr.mxu0 %v662
        %1197 = vmatpush1.msra.mxu0 %v661
        %1198 = vmatprep.subr.mxu0 %v678
        %1199 = vmatpush1.msra.mxu0 %v677
        %1200 = vmatprep.subr.mxu0 %v694
        %1201 = vmatpush1.msra.mxu0 %v693
        %1202 = vmatprep.subr.mxu0 %v710
        %1203 = vmatpush1.msra.mxu0 %v709
        %1204 = vmatprep.subr.mxu0 %v726
        %1205 = vmatpush1.msra.mxu0 %v725
        %1206 = vmatprep.subr.mxu0 %v742
        %1207 = vmatpush1.msra.mxu0 %v741
        %1208 = vmatprep.subr.mxu0 %v758
        %1209 = vmatpush1.msra.mxu0 %v757
        %1210 = vmatprep.subr.mxu0 %v774
        %1211 = vmatpush1.msra.mxu0 %v773
        %1212 = vmatprep.subr.mxu0 %v790
        %1213 = vmatpush1.msra.mxu0 %v789
        %1214 = vmatprep.mubr.f32.mxu0 %v282
        %1215 = vmatmul.mubr.f32.gmra.mrb[0].mxu0 %v281
        %v1216 = vpop.f32.mrb[0].mxu0
        %v1217 = vadd.f32 0.0, %v1216
        %v1218 = vpop.f32.mrb[0].mxu0
        %v1219 = vadd.f32 0.0, %v1218
        %1220 = vdwg.mxu0
        %1221 = vmatprep.subr.mxu0 %v296
        %1222 = vmatpush1.msra.mxu0 %v295
        %1223 = vmatprep.subr.mxu0 %v312
        %1224 = vmatpush1.msra.mxu0 %v311
        %1225 = vmatprep.subr.mxu0 %v328
        %1226 = vmatpush1.msra.mxu0 %v327
        %1227 = vmatprep.subr.mxu0 %v344
        %1228 = vmatpush1.msra.mxu0 %v343
        %1229 = vmatprep.subr.mxu0 %v360
        %1230 = vmatpush1.msra.mxu0 %v359
        %1231 = vmatprep.subr.mxu0 %v376
        %1232 = vmatpush1.msra.mxu0 %v375
        %1233 = vmatprep.subr.mxu0 %v392
        %1234 = vmatpush1.msra.mxu0 %v391
        %1235 = vmatprep.subr.mxu0 %v408
        %1236 = vmatpush1.msra.mxu0 %v407
        %1237 = vmatprep.subr.mxu0 %v424
        %1238 = vmatpush1.msra.mxu0 %v423
        %1239 = vmatprep.subr.mxu0 %v440
        %1240 = vmatpush1.msra.mxu0 %v439
        %1241 = vmatprep.subr.mxu0 %v456
        %1242 = vmatpush1.msra.mxu0 %v455
        %1243 = vmatprep.subr.mxu0 %v472
        %1244 = vmatpush1.msra.mxu0 %v471
        %1245 = vmatprep.subr.mxu0 %v488
        %1246 = vmatpush1.msra.mxu0 %v487
        %1247 = vmatprep.subr.mxu0 %v504
        %1248 = vmatpush1.msra.mxu0 %v503
        %1249 = vmatprep.subr.mxu0 %v520
        %1250 = vmatpush1.msra.mxu0 %v519
        %1251 = vmatprep.subr.mxu0 %v536
        %1252 = vmatpush1.msra.mxu0 %v535
        %1253 = vmatprep.subr.mxu0 %v552
        %1254 = vmatpush1.msra.mxu0 %v551
        %1255 = vmatprep.subr.mxu0 %v568
        %1256 = vmatpush1.msra.mxu0 %v567
        %1257 = vmatprep.subr.mxu0 %v584
        %1258 = vmatpush1.msra.mxu0 %v583
        %1259 = vmatprep.subr.mxu0 %v600
        %1260 = vmatpush1.msra.mxu0 %v599
        %1261 = vmatprep.subr.mxu0 %v616
        %1262 = vmatpush1.msra.mxu0 %v615
        %1263 = vmatprep.subr.mxu0 %v632
        %1264 = vmatpush1.msra.mxu0 %v631
        %1265 = vmatprep.subr.mxu0 %v648
        %1266 = vmatpush1.msra.mxu0 %v647
        %1267 = vmatprep.subr.mxu0 %v664
        %1268 = vmatpush1.msra.mxu0 %v663
        %1269 = vmatprep.subr.mxu0 %v680
        %1270 = vmatpush1.msra.mxu0 %v679
        %1271 = vmatprep.subr.mxu0 %v696
        %1272 = vmatpush1.msra.mxu0 %v695
        %1273 = vmatprep.subr.mxu0 %v712
        %1274 = vmatpush1.msra.mxu0 %v711
        %1275 = vmatprep.subr.mxu0 %v728
        %1276 = vmatpush1.msra.mxu0 %v727
        %1277 = vmatprep.subr.mxu0 %v744
        %1278 = vmatpush1.msra.mxu0 %v743
        %1279 = vmatprep.subr.mxu0 %v760
        %1280 = vmatpush1.msra.mxu0 %v759
        %1281 = vmatprep.subr.mxu0 %v776
        %1282 = vmatpush1.msra.mxu0 %v775
        %1283 = vmatprep.subr.mxu0 %v792
        %1284 = vmatpush1.msra.mxu0 %v791
        %1285 = vmatprep.mubr.f32.mxu0 %v282
        %1286 = vmatmul.mubr.f32.gmra.mrb[0].mxu0 %v281
        %v1287 = vpop.f32.mrb[0].mxu0
        %v1288 = vadd.f32 0.0, %v1287
        %v1289 = vpop.f32.mrb[0].mxu0
        %v1290 = vadd.f32 0.0, %v1289
        %1291 = vdwg.mxu0
        %1292 = vmatprep.subr.mxu0 %v298
        %1293 = vmatpush1.msra.mxu0 %v297
        %1294 = vmatprep.subr.mxu0 %v314
        %1295 = vmatpush1.msra.mxu0 %v313
        %1296 = vmatprep.subr.mxu0 %v330
        %1297 = vmatpush1.msra.mxu0 %v329
        %1298 = vmatprep.subr.mxu0 %v346
        %1299 = vmatpush1.msra.mxu0 %v345
        %1300 = vmatprep.subr.mxu0 %v362
        %1301 = vmatpush1.msra.mxu0 %v361
        %1302 = vmatprep.subr.mxu0 %v378
        %1303 = vmatpush1.msra.mxu0 %v377
        %1304 = vmatprep.subr.mxu0 %v394
        %1305 = vmatpush1.msra.mxu0 %v393
        %1306 = vmatprep.subr.mxu0 %v410
        %1307 = vmatpush1.msra.mxu0 %v409
        %1308 = vmatprep.subr.mxu0 %v426
        %1309 = vmatpush1.msra.mxu0 %v425
        %1310 = vmatprep.subr.mxu0 %v442
        %1311 = vmatpush1.msra.mxu0 %v441
        %1312 = vmatprep.subr.mxu0 %v458
        %1313 = vmatpush1.msra.mxu0 %v457
        %1314 = vmatprep.subr.mxu0 %v474
        %1315 = vmatpush1.msra.mxu0 %v473
        %1316 = vmatprep.subr.mxu0 %v490
        %1317 = vmatpush1.msra.mxu0 %v489
        %1318 = vmatprep.subr.mxu0 %v506
        %1319 = vmatpush1.msra.mxu0 %v505
        %1320 = vmatprep.subr.mxu0 %v522
        %1321 = vmatpush1.msra.mxu0 %v521
        %1322 = vmatprep.subr.mxu0 %v538
        %1323 = vmatpush1.msra.mxu0 %v537
        %1324 = vmatprep.subr.mxu0 %v554
        %1325 = vmatpush1.msra.mxu0 %v553
        %1326 = vmatprep.subr.mxu0 %v570
        %1327 = vmatpush1.msra.mxu0 %v569
        %1328 = vmatprep.subr.mxu0 %v586
        %1329 = vmatpush1.msra.mxu0 %v585
        %1330 = vmatprep.subr.mxu0 %v602
        %1331 = vmatpush1.msra.mxu0 %v601
        %1332 = vmatprep.subr.mxu0 %v618
        %1333 = vmatpush1.msra.mxu0 %v617
        %1334 = vmatprep.subr.mxu0 %v634
        %1335 = vmatpush1.msra.mxu0 %v633
        %1336 = vmatprep.subr.mxu0 %v650
        %1337 = vmatpush1.msra.mxu0 %v649
        %1338 = vmatprep.subr.mxu0 %v666
        %1339 = vmatpush1.msra.mxu0 %v665
        %1340 = vmatprep.subr.mxu0 %v682
        %1341 = vmatpush1.msra.mxu0 %v681
        %1342 = vmatprep.subr.mxu0 %v698
        %1343 = vmatpush1.msra.mxu0 %v697
        %1344 = vmatprep.subr.mxu0 %v714
        %1345 = vmatpush1.msra.mxu0 %v713
        %1346 = vmatprep.subr.mxu0 %v730
        %1347 = vmatpush1.msra.mxu0 %v729
        %1348 = vmatprep.subr.mxu0 %v746
        %1349 = vmatpush1.msra.mxu0 %v745
        %1350 = vmatprep.subr.mxu0 %v762
        %1351 = vmatpush1.msra.mxu0 %v761
        %1352 = vmatprep.subr.mxu0 %v778
        %1353 = vmatpush1.msra.mxu0 %v777
        %1354 = vmatprep.subr.mxu0 %v794
        %1355 = vmatpush1.msra.mxu0 %v793
        %1356 = vmatprep.mubr.f32.mxu0 %v282
        %1357 = vmatmul.mubr.f32.gmra.mrb[0].mxu0 %v281
        %v1358 = vpop.f32.mrb[0].mxu0
        %v1359 = vadd.f32 0.0, %v1358
        %v1360 = vpop.f32.mrb[0].mxu0
        %v1361 = vadd.f32 0.0, %v1360
        %1362 = vdwg.mxu0
        %v1363 = vmul.f32 %v862, 64.0
        %v1364 = vmul.f32 %v864, 64.0
        %v1365 = vmul.f32 %v933, 64.0
        %v1366 = vmul.f32 %v935, 64.0
        %v1367 = vmul.f32 %v1004, 64.0
        %v1368 = vmul.f32 %v1006, 64.0
        %v1369 = vmul.f32 %v1075, 64.0
        %v1370 = vmul.f32 %v1077, 64.0
        %v1371 = vmul.f32 %v1146, 64.0
        %v1372 = vmul.f32 %v1148, 64.0
        %v1373 = vmul.f32 %v1217, 64.0
        %v1374 = vmul.f32 %v1219, 64.0
        %v1375 = vmul.f32 %v1288, 64.0
        %v1376 = vmul.f32 %v1290, 64.0
        %v1377 = vmul.f32 %v1359, 64.0
        %v1378 = vmul.f32 %v1361, 64.0
        %1379 = vst [vmem:[%s234] sm:$0xff] %v1363
        %1380 = vst [vmem:[%s234 + $0x8] sm:$0xff] %v1364
        %1381 = vst [vmem:[%s234 + $0x10] sm:$0xff] %v1365
        %1382 = vst [vmem:[%s234 + $0x18] sm:$0xff] %v1366
        %1383 = vst [vmem:[%s234 + $0x20] sm:$0xff] %v1367
        %1384 = vst [vmem:[%s234 + $0x28] sm:$0xff] %v1368
        %1385 = vst [vmem:[%s234 + $0x30] sm:$0xff] %v1369
        %1386 = vst [vmem:[%s234 + $0x38] sm:$0xff] %v1370
        %1387 = vst [vmem:[%s234 + $0x40] sm:$0xff] %v1371
        %1388 = vst [vmem:[%s234 + $0x48] sm:$0xff] %v1372
        %1389 = vst [vmem:[%s234 + $0x50] sm:$0xff] %v1373
        %1390 = vst [vmem:[%s234 + $0x58] sm:$0xff] %v1374
        %1391 = vst [vmem:[%s234 + $0x60] sm:$0xff] %v1375
        %1392 = vst [vmem:[%s234 + $0x68] sm:$0xff] %v1376
        %1393 = vst [vmem:[%s234 + $0x70] sm:$0xff] %v1377
        %1394 = vst [vmem:[%s234 + $0x78] sm:$0xff] %v1378
        %v1395 = vlaneseq
        %v1396 = vand.u32 %v1395, 127
        %v1397 = vadd.s32 %v1396, 128
        %v1398 = vadd.s32 %v1396, 256
        %v1399 = vadd.s32 %v1396, 384
        %v1400 = vadd.s32 %v1396, 512
        %v1401 = vadd.s32 %v1396, 640
        %v1402 = vadd.s32 %v1396, 768
        %v1403 = vadd.s32 %v1396, 896
        %v1404 = vadd.s32 %v1396, 1024
        %v1405 = vadd.s32 %v1396, 1152
        %v1406 = vadd.s32 %v1396, 1280
        %v1407 = vadd.s32 %v1396, 1408
        %v1408 = vadd.s32 %v1396, 1536
        %v1409 = vadd.s32 %v1396, 1664
        %v1410 = vadd.s32 %v1396, 1792
        %v1411 = vadd.s32 %v1396, 1920
        %s1412 = smul.u32 %s24, 2048
        %v1413 = vstv %s1412
        %v1414 = vadd.s32 %v1396, %v1413
        %v1415 = vadd.s32 %v1397, %v1413
        %v1416 = vadd.s32 %v1398, %v1413
        %v1417 = vadd.s32 %v1399, %v1413
        %v1418 = vadd.s32 %v1400, %v1413
        %v1419 = vadd.s32 %v1401, %v1413
        %v1420 = vadd.s32 %v1402, %v1413
        %v1421 = vadd.s32 %v1403, %v1413
        %v1422 = vadd.s32 %v1404, %v1413
        %v1423 = vadd.s32 %v1405, %v1413
        %v1424 = vadd.s32 %v1406, %v1413
        %v1425 = vadd.s32 %v1407, %v1413
        %v1426 = vadd.s32 %v1408, %v1413
        %v1427 = vadd.s32 %v1409, %v1413
        %v1428 = vadd.s32 %v1410, %v1413
        %v1429 = vadd.s32 %v1411, %v1413
        %v1430 = vld [vmem:[%s255] sm:$0xff]
        %1431 = vset.pattern.permute.xlu0 0
        %1432 = vperm.xlu0 %1431, %v1430
        %v1433 = vpop.permute.xlu0 %1432
        %vm1434 = vcmp.eq.s32.totalorder %v1414, %v1433
        %vm1435 = vcmp.eq.s32.totalorder %v1415, %v1433
        %vm1436 = vcmp.eq.s32.totalorder %v1416, %v1433
        %vm1437 = vcmp.eq.s32.totalorder %v1417, %v1433
        %vm1438 = vcmp.eq.s32.totalorder %v1418, %v1433
        %vm1439 = vcmp.eq.s32.totalorder %v1419, %v1433
        %vm1440 = vcmp.eq.s32.totalorder %v1420, %v1433
        %vm1441 = vcmp.eq.s32.totalorder %v1421, %v1433
        %vm1442 = vcmp.eq.s32.totalorder %v1422, %v1433
        %vm1443 = vcmp.eq.s32.totalorder %v1423, %v1433
        %vm1444 = vcmp.eq.s32.totalorder %v1424, %v1433
        %vm1445 = vcmp.eq.s32.totalorder %v1425, %v1433
        %vm1446 = vcmp.eq.s32.totalorder %v1426, %v1433
        %vm1447 = vcmp.eq.s32.totalorder %v1427, %v1433
        %vm1448 = vcmp.eq.s32.totalorder %v1428, %v1433
        %vm1449 = vcmp.eq.s32.totalorder %v1429, %v1433
        %v1450 = vsel %vm1434, 0.0, %v862
        %v1451 = vsel %vm1435, 0.0, %v864
        %v1452 = vsel %vm1436, 0.0, %v933
        %v1453 = vsel %vm1437, 0.0, %v935
        %v1454 = vsel %vm1438, 0.0, %v1004
        %v1455 = vsel %vm1439, 0.0, %v1006
        %v1456 = vsel %vm1440, 0.0, %v1075
        %v1457 = vsel %vm1441, 0.0, %v1077
        %v1458 = vsel %vm1442, 0.0, %v1146
        %v1459 = vsel %vm1443, 0.0, %v1148
        %v1460 = vsel %vm1444, 0.0, %v1217
        %v1461 = vsel %vm1445, 0.0, %v1219
        %v1462 = vsel %vm1446, 0.0, %v1288
        %v1463 = vsel %vm1447, 0.0, %v1290
        %v1464 = vsel %vm1448, 0.0, %v1359
        %v1465 = vsel %vm1449, 0.0, %v1361
        %v1466 = vsub.f32 %v862, %v1450
        %v1467 = vsub.f32 %v864, %v1451
        %v1468 = vsub.f32 %v933, %v1452
        %v1469 = vsub.f32 %v935, %v1453
        %v1470 = vsub.f32 %v1004, %v1454
        %v1471 = vsub.f32 %v1006, %v1455
        %v1472 = vsub.f32 %v1075, %v1456
        %v1473 = vsub.f32 %v1077, %v1457
        %v1474 = vsub.f32 %v1146, %v1458
        %v1475 = vsub.f32 %v1148, %v1459
        %v1476 = vsub.f32 %v1217, %v1460
        %v1477 = vsub.f32 %v1219, %v1461
        %v1478 = vsub.f32 %v1288, %v1462
        %v1479 = vsub.f32 %v1290, %v1463
        %v1480 = vsub.f32 %v1359, %v1464
        %v1481 = vsub.f32 %v1361, %v1465
        %v1482 = vmax.f32 %v1450, -1.0
        %v1483 = vmax.f32 %v1451, -1.0
        %v1484 = vmax.f32 %v1452, -1.0
        %v1485 = vmax.f32 %v1453, -1.0
        %v1486 = vmax.f32 %v1454, -1.0
        %v1487 = vmax.f32 %v1455, -1.0
        %v1488 = vmax.f32 %v1456, -1.0
        %v1489 = vmax.f32 %v1457, -1.0
        %v1490 = vmax.f32 %v1458, -1.0
        %v1491 = vmax.f32 %v1459, -1.0
        %v1492 = vmax.f32 %v1460, -1.0
        %v1493 = vmax.f32 %v1461, -1.0
        %v1494 = vmax.f32 %v1462, -1.0
        %v1495 = vmax.f32 %v1463, -1.0
        %v1496 = vmax.f32 %v1464, -1.0
        %v1497 = vmax.f32 %v1465, -1.0
        %v1498 = vmin.f32 %v1482, 1.0
        %v1499 = vmin.f32 %v1483, 1.0
        %v1500 = vmin.f32 %v1484, 1.0
        %v1501 = vmin.f32 %v1485, 1.0
        %v1502 = vmin.f32 %v1486, 1.0
        %v1503 = vmin.f32 %v1487, 1.0
        %v1504 = vmin.f32 %v1488, 1.0
        %v1505 = vmin.f32 %v1489, 1.0
        %v1506 = vmin.f32 %v1490, 1.0
        %v1507 = vmin.f32 %v1491, 1.0
        %v1508 = vmin.f32 %v1492, 1.0
        %v1509 = vmin.f32 %v1493, 1.0
        %v1510 = vmin.f32 %v1494, 1.0
        %v1511 = vmin.f32 %v1495, 1.0
        %v1512 = vmin.f32 %v1496, 1.0
        %v1513 = vmin.f32 %v1497, 1.0
        %v1514 = vand.u32 2147483647, %v1498
        %v1515 = vand.u32 2147483647, %v1499
        %v1516 = vand.u32 2147483647, %v1500
        %v1517 = vand.u32 2147483647, %v1501
        %v1518 = vand.u32 2147483647, %v1502
        %v1519 = vand.u32 2147483647, %v1503
        %v1520 = vand.u32 2147483647, %v1504
        %v1521 = vand.u32 2147483647, %v1505
        %v1522 = vand.u32 2147483647, %v1506
        %v1523 = vand.u32 2147483647, %v1507
        %v1524 = vand.u32 2147483647, %v1508
        %v1525 = vand.u32 2147483647, %v1509
        %v1526 = vand.u32 2147483647, %v1510
        %v1527 = vand.u32 2147483647, %v1511
        %v1528 = vand.u32 2147483647, %v1512
        %v1529 = vand.u32 2147483647, %v1513
        %vm1530 = vcmp.gt.f32.partialorder %v1514, 0.5
        %vm1531 = vcmp.gt.f32.partialorder %v1515, 0.5
        %vm1532 = vcmp.gt.f32.partialorder %v1516, 0.5
        %vm1533 = vcmp.gt.f32.partialorder %v1517, 0.5
        %vm1534 = vcmp.gt.f32.partialorder %v1518, 0.5
        %vm1535 = vcmp.gt.f32.partialorder %v1519, 0.5
        %vm1536 = vcmp.gt.f32.partialorder %v1520, 0.5
        %vm1537 = vcmp.gt.f32.partialorder %v1521, 0.5
        %vm1538 = vcmp.gt.f32.partialorder %v1522, 0.5
        %vm1539 = vcmp.gt.f32.partialorder %v1523, 0.5
        %vm1540 = vcmp.gt.f32.partialorder %v1524, 0.5
        %vm1541 = vcmp.gt.f32.partialorder %v1525, 0.5
        %vm1542 = vcmp.gt.f32.partialorder %v1526, 0.5
        %vm1543 = vcmp.gt.f32.partialorder %v1527, 0.5
        %vm1544 = vcmp.gt.f32.partialorder %v1528, 0.5
        %vm1545 = vcmp.gt.f32.partialorder %v1529, 0.5
        %v1546 = vsub.f32 1.0, %v1514
        %v1547 = vsub.f32 1.0, %v1515
        %v1548 = vsub.f32 1.0, %v1516
        %v1549 = vsub.f32 1.0, %v1517
        %v1550 = vsub.f32 1.0, %v1518
        %v1551 = vsub.f32 1.0, %v1519
        %v1552 = vsub.f32 1.0, %v1520
        %v1553 = vsub.f32 1.0, %v1521
        %v1554 = vsub.f32 1.0, %v1522
        %v1555 = vsub.f32 1.0, %v1523
        %v1556 = vsub.f32 1.0, %v1524
        %v1557 = vsub.f32 1.0, %v1525
        %v1558 = vsub.f32 1.0, %v1526
        %v1559 = vsub.f32 1.0, %v1527
        %v1560 = vsub.f32 1.0, %v1528
        %v1561 = vsub.f32 1.0, %v1529
        %v1562 = vmul.f32 %v1546, 0.5
        %v1563 = vmul.f32 %v1547, 0.5
        %v1564 = vmul.f32 %v1548, 0.5
        %v1565 = vmul.f32 %v1549, 0.5
        %v1566 = vmul.f32 %v1550, 0.5
        %v1567 = vmul.f32 %v1551, 0.5
        %v1568 = vmul.f32 %v1552, 0.5
        %v1569 = vmul.f32 %v1553, 0.5
        %v1570 = vmul.f32 %v1554, 0.5
        %v1571 = vmul.f32 %v1555, 0.5
        %v1572 = vmul.f32 %v1556, 0.5
        %v1573 = vmul.f32 %v1557, 0.5
        %v1574 = vmul.f32 %v1558, 0.5
        %v1575 = vmul.f32 %v1559, 0.5
        %v1576 = vmul.f32 %v1560, 0.5
        %v1577 = vmul.f32 %v1561, 0.5
        %v1578 = vmul.f32 %v1514, %v1514
        %v1579 = vmul.f32 %v1515, %v1515
        %v1580 = vmul.f32 %v1516, %v1516
        %v1581 = vmul.f32 %v1517, %v1517
        %v1582 = vmul.f32 %v1518, %v1518
        %v1583 = vmul.f32 %v1519, %v1519
        %v1584 = vmul.f32 %v1520, %v1520
        %v1585 = vmul.f32 %v1521, %v1521
        %v1586 = vmul.f32 %v1522, %v1522
        %v1587 = vmul.f32 %v1523, %v1523
        %v1588 = vmul.f32 %v1524, %v1524
        %v1589 = vmul.f32 %v1525, %v1525
        %v1590 = vmul.f32 %v1526, %v1526
        %v1591 = vmul.f32 %v1527, %v1527
        %v1592 = vmul.f32 %v1528, %v1528
        %v1593 = vmul.f32 %v1529, %v1529
        %v1594 = vsel %vm1530, %v1562, %v1578
        %v1595 = vsel %vm1531, %v1563, %v1579
        %v1596 = vsel %vm1532, %v1564, %v1580
        %v1597 = vsel %vm1533, %v1565, %v1581
        %v1598 = vsel %vm1534, %v1566, %v1582
        %v1599 = vsel %vm1535, %v1567, %v1583
        %v1600 = vsel %vm1536, %v1568, %v1584
        %v1601 = vsel %vm1537, %v1569, %v1585
        %v1602 = vsel %vm1538, %v1570, %v1586
        %v1603 = vsel %vm1539, %v1571, %v1587
        %v1604 = vsel %vm1540, %v1572, %v1588
        %v1605 = vsel %vm1541, %v1573, %v1589
        %v1606 = vsel %vm1542, %v1574, %v1590
        %v1607 = vsel %vm1543, %v1575, %v1591
        %v1608 = vsel %vm1544, %v1576, %v1592
        %v1609 = vsel %vm1545, %v1577, %v1593
        %v1610 = vrsqrt.pop %v1594
        %v1611 = vmul.f32 %v1594, %v1610
        %vm1612 = vcmp.eq.f32.partialorder %v1594, inf
        %v1613 = vsel %vm1612, %v1594, %v1611
        %vm1614 = vcmp.eq.f32.partialorder %v1594, 0.0
        %v1615 = vand.u32 %v1594, 2147483648
        %v1616 = vsel %vm1614, %v1615, %v1613
        %v1617 = vrsqrt.pop %v1595
        %v1618 = vmul.f32 %v1595, %v1617
        %vm1619 = vcmp.eq.f32.partialorder %v1595, inf
        %v1620 = vsel %vm1619, %v1595, %v1618
        %vm1621 = vcmp.eq.f32.partialorder %v1595, 0.0
        %v1622 = vand.u32 %v1595, 2147483648
        %v1623 = vsel %vm1621, %v1622, %v1620
        %v1624 = vrsqrt.pop %v1596
        %v1625 = vmul.f32 %v1596, %v1624
        %vm1626 = vcmp.eq.f32.partialorder %v1596, inf
        %v1627 = vsel %vm1626, %v1596, %v1625
        %vm1628 = vcmp.eq.f32.partialorder %v1596, 0.0
        %v1629 = vand.u32 %v1596, 2147483648
        %v1630 = vsel %vm1628, %v1629, %v1627
        %v1631 = vrsqrt.pop %v1597
        %v1632 = vmul.f32 %v1597, %v1631
        %vm1633 = vcmp.eq.f32.partialorder %v1597, inf
        %v1634 = vsel %vm1633, %v1597, %v1632
        %vm1635 = vcmp.eq.f32.partialorder %v1597, 0.0
        %v1636 = vand.u32 %v1597, 2147483648
        %v1637 = vsel %vm1635, %v1636, %v1634
        %v1638 = vrsqrt.pop %v1598
        %v1639 = vmul.f32 %v1598, %v1638
        %vm1640 = vcmp.eq.f32.partialorder %v1598, inf
        %v1641 = vsel %vm1640, %v1598, %v1639
        %vm1642 = vcmp.eq.f32.partialorder %v1598, 0.0
        %v1643 = vand.u32 %v1598, 2147483648
        %v1644 = vsel %vm1642, %v1643, %v1641
        %v1645 = vrsqrt.pop %v1599
        %v1646 = vmul.f32 %v1599, %v1645
        %vm1647 = vcmp.eq.f32.partialorder %v1599, inf
        %v1648 = vsel %vm1647, %v1599, %v1646
        %vm1649 = vcmp.eq.f32.partialorder %v1599, 0.0
        %v1650 = vand.u32 %v1599, 2147483648
        %v1651 = vsel %vm1649, %v1650, %v1648
        %v1652 = vrsqrt.pop %v1600
        %v1653 = vmul.f32 %v1600, %v1652
        %vm1654 = vcmp.eq.f32.partialorder %v1600, inf
        %v1655 = vsel %vm1654, %v1600, %v1653
        %vm1656 = vcmp.eq.f32.partialorder %v1600, 0.0
        %v1657 = vand.u32 %v1600, 2147483648
        %v1658 = vsel %vm1656, %v1657, %v1655
        %v1659 = vrsqrt.pop %v1601
        %v1660 = vmul.f32 %v1601, %v1659
        %vm1661 = vcmp.eq.f32.partialorder %v1601, inf
        %v1662 = vsel %vm1661, %v1601, %v1660
        %vm1663 = vcmp.eq.f32.partialorder %v1601, 0.0
        %v1664 = vand.u32 %v1601, 2147483648
        %v1665 = vsel %vm1663, %v1664, %v1662
        %v1666 = vrsqrt.pop %v1602
        %v1667 = vmul.f32 %v1602, %v1666
        %vm1668 = vcmp.eq.f32.partialorder %v1602, inf
        %v1669 = vsel %vm1668, %v1602, %v1667
        %vm1670 = vcmp.eq.f32.partialorder %v1602, 0.0
        %v1671 = vand.u32 %v1602, 2147483648
        %v1672 = vsel %vm1670, %v1671, %v1669
        %v1673 = vrsqrt.pop %v1603
        %v1674 = vmul.f32 %v1603, %v1673
        %vm1675 = vcmp.eq.f32.partialorder %v1603, inf
        %v1676 = vsel %vm1675, %v1603, %v1674
        %vm1677 = vcmp.eq.f32.partialorder %v1603, 0.0
        %v1678 = vand.u32 %v1603, 2147483648
        %v1679 = vsel %vm1677, %v1678, %v1676
        %v1680 = vrsqrt.pop %v1604
        %v1681 = vmul.f32 %v1604, %v1680
        %vm1682 = vcmp.eq.f32.partialorder %v1604, inf
        %v1683 = vsel %vm1682, %v1604, %v1681
        %vm1684 = vcmp.eq.f32.partialorder %v1604, 0.0
        %v1685 = vand.u32 %v1604, 2147483648
        %v1686 = vsel %vm1684, %v1685, %v1683
        %v1687 = vrsqrt.pop %v1605
        %v1688 = vmul.f32 %v1605, %v1687
        %vm1689 = vcmp.eq.f32.partialorder %v1605, inf
        %v1690 = vsel %vm1689, %v1605, %v1688
        %vm1691 = vcmp.eq.f32.partialorder %v1605, 0.0
        %v1692 = vand.u32 %v1605, 2147483648
        %v1693 = vsel %vm1691, %v1692, %v1690
        %v1694 = vrsqrt.pop %v1606
        %v1695 = vmul.f32 %v1606, %v1694
        %vm1696 = vcmp.eq.f32.partialorder %v1606, inf
        %v1697 = vsel %vm1696, %v1606, %v1695
        %vm1698 = vcmp.eq.f32.partialorder %v1606, 0.0
        %v1699 = vand.u32 %v1606, 2147483648
        %v1700 = vsel %vm1698, %v1699, %v1697
        %v1701 = vrsqrt.pop %v1607
        %v1702 = vmul.f32 %v1607, %v1701
        %vm1703 = vcmp.eq.f32.partialorder %v1607, inf
        %v1704 = vsel %vm1703, %v1607, %v1702
        %vm1705 = vcmp.eq.f32.partialorder %v1607, 0.0
        %v1706 = vand.u32 %v1607, 2147483648
        %v1707 = vsel %vm1705, %v1706, %v1704
        %v1708 = vrsqrt.pop %v1608
        %v1709 = vmul.f32 %v1608, %v1708
        %vm1710 = vcmp.eq.f32.partialorder %v1608, inf
        %v1711 = vsel %vm1710, %v1608, %v1709
        %vm1712 = vcmp.eq.f32.partialorder %v1608, 0.0
        %v1713 = vand.u32 %v1608, 2147483648
        %v1714 = vsel %vm1712, %v1713, %v1711
        %v1715 = vrsqrt.pop %v1609
        %v1716 = vmul.f32 %v1609, %v1715
        %vm1717 = vcmp.eq.f32.partialorder %v1609, inf
        %v1718 = vsel %vm1717, %v1609, %v1716
        %vm1719 = vcmp.eq.f32.partialorder %v1609, 0.0
        %v1720 = vand.u32 %v1609, 2147483648
        %v1721 = vsel %vm1719, %v1720, %v1718
        %v1722 = vsel %vm1530, %v1616, %v1514
        %v1723 = vsel %vm1531, %v1623, %v1515
        %v1724 = vsel %vm1532, %v1630, %v1516
        %v1725 = vsel %vm1533, %v1637, %v1517
        %v1726 = vsel %vm1534, %v1644, %v1518
        %v1727 = vsel %vm1535, %v1651, %v1519
        %v1728 = vsel %vm1536, %v1658, %v1520
        %v1729 = vsel %vm1537, %v1665, %v1521
        %v1730 = vsel %vm1538, %v1672, %v1522
        %v1731 = vsel %vm1539, %v1679, %v1523
        %v1732 = vsel %vm1540, %v1686, %v1524
        %v1733 = vsel %vm1541, %v1693, %v1525
        %v1734 = vsel %vm1542, %v1700, %v1526
        %v1735 = vsel %vm1543, %v1707, %v1527
        %v1736 = vsel %vm1544, %v1714, %v1528
        %v1737 = vsel %vm1545, %v1721, %v1529
        %v1738 = vmul.f32 %v1594, 0.0421632
        %v1739 = vmul.f32 %v1595, 0.0421632
        %v1740 = vmul.f32 %v1596, 0.0421632
        %v1741 = vmul.f32 %v1597, 0.0421632
        %v1742 = vmul.f32 %v1598, 0.0421632
        %v1743 = vmul.f32 %v1599, 0.0421632
        %v1744 = vmul.f32 %v1600, 0.0421632
        %v1745 = vmul.f32 %v1601, 0.0421632
        %v1746 = vmul.f32 %v1602, 0.0421632
        %v1747 = vmul.f32 %v1603, 0.0421632
        %v1748 = vmul.f32 %v1604, 0.0421632
        %v1749 = vmul.f32 %v1605, 0.0421632
        %v1750 = vmul.f32 %v1606, 0.0421632
        %v1751 = vmul.f32 %v1607, 0.0421632
        %v1752 = vmul.f32 %v1608, 0.0421632
        %v1753 = vmul.f32 %v1609, 0.0421632
        %v1754 = vadd.f32 %v1738, 0.024181312
        %v1755 = vadd.f32 %v1739, 0.024181312
        %v1756 = vadd.f32 %v1740, 0.024181312
        %v1757 = vadd.f32 %v1741, 0.024181312
        %v1758 = vadd.f32 %v1742, 0.024181312
        %v1759 = vadd.f32 %v1743, 0.024181312
        %v1760 = vadd.f32 %v1744, 0.024181312
        %v1761 = vadd.f32 %v1745, 0.024181312
        %v1762 = vadd.f32 %v1746, 0.024181312
        %v1763 = vadd.f32 %v1747, 0.024181312
        %v1764 = vadd.f32 %v1748, 0.024181312
        %v1765 = vadd.f32 %v1749, 0.024181312
        %v1766 = vadd.f32 %v1750, 0.024181312
        %v1767 = vadd.f32 %v1751, 0.024181312
        %v1768 = vadd.f32 %v1752, 0.024181312
        %v1769 = vadd.f32 %v1753, 0.024181312
        %v1770 = vmul.f32 %v1754, %v1594
        %v1771 = vmul.f32 %v1755, %v1595
        %v1772 = vmul.f32 %v1756, %v1596
        %v1773 = vmul.f32 %v1757, %v1597
        %v1774 = vmul.f32 %v1758, %v1598
        %v1775 = vmul.f32 %v1759, %v1599
        %v1776 = vmul.f32 %v1760, %v1600
        %v1777 = vmul.f32 %v1761, %v1601
        %v1778 = vmul.f32 %v1762, %v1602
        %v1779 = vmul.f32 %v1763, %v1603
        %v1780 = vmul.f32 %v1764, %v1604
        %v1781 = vmul.f32 %v1765, %v1605
        %v1782 = vmul.f32 %v1766, %v1606
        %v1783 = vmul.f32 %v1767, %v1607
        %v1784 = vmul.f32 %v1768, %v1608
        %v1785 = vmul.f32 %v1769, %v1609
        %v1786 = vadd.f32 %v1770, 0.045470025
        %v1787 = vadd.f32 %v1771, 0.045470025
        %v1788 = vadd.f32 %v1772, 0.045470025
        %v1789 = vadd.f32 %v1773, 0.045470025
        %v1790 = vadd.f32 %v1774, 0.045470025
        %v1791 = vadd.f32 %v1775, 0.045470025
        %v1792 = vadd.f32 %v1776, 0.045470025
        %v1793 = vadd.f32 %v1777, 0.045470025
        %v1794 = vadd.f32 %v1778, 0.045470025
        %v1795 = vadd.f32 %v1779, 0.045470025
        %v1796 = vadd.f32 %v1780, 0.045470025
        %v1797 = vadd.f32 %v1781, 0.045470025
        %v1798 = vadd.f32 %v1782, 0.045470025
        %v1799 = vadd.f32 %v1783, 0.045470025
        %v1800 = vadd.f32 %v1784, 0.045470025
        %v1801 = vadd.f32 %v1785, 0.045470025
        %v1802 = vmul.f32 %v1786, %v1594
        %v1803 = vmul.f32 %v1787, %v1595
        %v1804 = vmul.f32 %v1788, %v1596
        %v1805 = vmul.f32 %v1789, %v1597
        %v1806 = vmul.f32 %v1790, %v1598
        %v1807 = vmul.f32 %v1791, %v1599
        %v1808 = vmul.f32 %v1792, %v1600
        %v1809 = vmul.f32 %v1793, %v1601
        %v1810 = vmul.f32 %v1794, %v1602
        %v1811 = vmul.f32 %v1795, %v1603
        %v1812 = vmul.f32 %v1796, %v1604
        %v1813 = vmul.f32 %v1797, %v1605
        %v1814 = vmul.f32 %v1798, %v1606
        %v1815 = vmul.f32 %v1799, %v1607
        %v1816 = vmul.f32 %v1800, %v1608
        %v1817 = vmul.f32 %v1801, %v1609
        %v1818 = vadd.f32 %v1802, 0.074953005
        %v1819 = vadd.f32 %v1803, 0.074953005
        %v1820 = vadd.f32 %v1804, 0.074953005
        %v1821 = vadd.f32 %v1805, 0.074953005
        %v1822 = vadd.f32 %v1806, 0.074953005
        %v1823 = vadd.f32 %v1807, 0.074953005
        %v1824 = vadd.f32 %v1808, 0.074953005
        %v1825 = vadd.f32 %v1809, 0.074953005
        %v1826 = vadd.f32 %v1810, 0.074953005
        %v1827 = vadd.f32 %v1811, 0.074953005
        %v1828 = vadd.f32 %v1812, 0.074953005
        %v1829 = vadd.f32 %v1813, 0.074953005
        %v1830 = vadd.f32 %v1814, 0.074953005
        %v1831 = vadd.f32 %v1815, 0.074953005
        %v1832 = vadd.f32 %v1816, 0.074953005
        %v1833 = vadd.f32 %v1817, 0.074953005
        %v1834 = vmul.f32 %v1818, %v1594
        %v1835 = vmul.f32 %v1819, %v1595
        %v1836 = vmul.f32 %v1820, %v1596
        %v1837 = vmul.f32 %v1821, %v1597
        %v1838 = vmul.f32 %v1822, %v1598
        %v1839 = vmul.f32 %v1823, %v1599
        %v1840 = vmul.f32 %v1824, %v1600
        %v1841 = vmul.f32 %v1825, %v1601
        %v1842 = vmul.f32 %v1826, %v1602
        %v1843 = vmul.f32 %v1827, %v1603
        %v1844 = vmul.f32 %v1828, %v1604
        %v1845 = vmul.f32 %v1829, %v1605
        %v1846 = vmul.f32 %v1830, %v1606
        %v1847 = vmul.f32 %v1831, %v1607
        %v1848 = vmul.f32 %v1832, %v1608
        %v1849 = vmul.f32 %v1833, %v1609
        %v1850 = vadd.f32 %v1834, 0.16666752
        %v1851 = vadd.f32 %v1835, 0.16666752
        %v1852 = vadd.f32 %v1836, 0.16666752
        %v1853 = vadd.f32 %v1837, 0.16666752
        %v1854 = vadd.f32 %v1838, 0.16666752
        %v1855 = vadd.f32 %v1839, 0.16666752
        %v1856 = vadd.f32 %v1840, 0.16666752
        %v1857 = vadd.f32 %v1841, 0.16666752
        %v1858 = vadd.f32 %v1842, 0.16666752
        %v1859 = vadd.f32 %v1843, 0.16666752
        %v1860 = vadd.f32 %v1844, 0.16666752
        %v1861 = vadd.f32 %v1845, 0.16666752
        %v1862 = vadd.f32 %v1846, 0.16666752
        %v1863 = vadd.f32 %v1847, 0.16666752
        %v1864 = vadd.f32 %v1848, 0.16666752
        %v1865 = vadd.f32 %v1849, 0.16666752
        %v1866 = vmul.f32 %v1722, %v1594
        %v1867 = vmul.f32 %v1723, %v1595
        %v1868 = vmul.f32 %v1724, %v1596
        %v1869 = vmul.f32 %v1725, %v1597
        %v1870 = vmul.f32 %v1726, %v1598
        %v1871 = vmul.f32 %v1727, %v1599
        %v1872 = vmul.f32 %v1728, %v1600
        %v1873 = vmul.f32 %v1729, %v1601
        %v1874 = vmul.f32 %v1730, %v1602
        %v1875 = vmul.f32 %v1731, %v1603
        %v1876 = vmul.f32 %v1732, %v1604
        %v1877 = vmul.f32 %v1733, %v1605
        %v1878 = vmul.f32 %v1734, %v1606
        %v1879 = vmul.f32 %v1735, %v1607
        %v1880 = vmul.f32 %v1736, %v1608
        %v1881 = vmul.f32 %v1737, %v1609
        %v1882 = vmul.f32 %v1866, %v1850
        %v1883 = vmul.f32 %v1867, %v1851
        %v1884 = vmul.f32 %v1868, %v1852
        %v1885 = vmul.f32 %v1869, %v1853
        %v1886 = vmul.f32 %v1870, %v1854
        %v1887 = vmul.f32 %v1871, %v1855
        %v1888 = vmul.f32 %v1872, %v1856
        %v1889 = vmul.f32 %v1873, %v1857
        %v1890 = vmul.f32 %v1874, %v1858
        %v1891 = vmul.f32 %v1875, %v1859
        %v1892 = vmul.f32 %v1876, %v1860
        %v1893 = vmul.f32 %v1877, %v1861
        %v1894 = vmul.f32 %v1878, %v1862
        %v1895 = vmul.f32 %v1879, %v1863
        %v1896 = vmul.f32 %v1880, %v1864
        %v1897 = vmul.f32 %v1881, %v1865
        %v1898 = vadd.f32 %v1722, %v1882
        %v1899 = vadd.f32 %v1723, %v1883
        %v1900 = vadd.f32 %v1724, %v1884
        %v1901 = vadd.f32 %v1725, %v1885
        %v1902 = vadd.f32 %v1726, %v1886
        %v1903 = vadd.f32 %v1727, %v1887
        %v1904 = vadd.f32 %v1728, %v1888
        %v1905 = vadd.f32 %v1729, %v1889
        %v1906 = vadd.f32 %v1730, %v1890
        %v1907 = vadd.f32 %v1731, %v1891
        %v1908 = vadd.f32 %v1732, %v1892
        %v1909 = vadd.f32 %v1733, %v1893
        %v1910 = vadd.f32 %v1734, %v1894
        %v1911 = vadd.f32 %v1735, %v1895
        %v1912 = vadd.f32 %v1736, %v1896
        %v1913 = vadd.f32 %v1737, %v1897
        %v1914 = vmul.f32 %v1898, 2.0
        %v1915 = vmul.f32 %v1899, 2.0
        %v1916 = vmul.f32 %v1900, 2.0
        %v1917 = vmul.f32 %v1901, 2.0
        %v1918 = vmul.f32 %v1902, 2.0
        %v1919 = vmul.f32 %v1903, 2.0
        %v1920 = vmul.f32 %v1904, 2.0
        %v1921 = vmul.f32 %v1905, 2.0
        %v1922 = vmul.f32 %v1906, 2.0
        %v1923 = vmul.f32 %v1907, 2.0
        %v1924 = vmul.f32 %v1908, 2.0
        %v1925 = vmul.f32 %v1909, 2.0
        %v1926 = vmul.f32 %v1910, 2.0
        %v1927 = vmul.f32 %v1911, 2.0
        %v1928 = vmul.f32 %v1912, 2.0
        %v1929 = vmul.f32 %v1913, 2.0
        %v1930 = vsub.f32 1.5707964, %v1914
        %v1931 = vsub.f32 1.5707964, %v1915
        %v1932 = vsub.f32 1.5707964, %v1916
        %v1933 = vsub.f32 1.5707964, %v1917
        %v1934 = vsub.f32 1.5707964, %v1918
        %v1935 = vsub.f32 1.5707964, %v1919
        %v1936 = vsub.f32 1.5707964, %v1920
        %v1937 = vsub.f32 1.5707964, %v1921
        %v1938 = vsub.f32 1.5707964, %v1922
        %v1939 = vsub.f32 1.5707964, %v1923
        %v1940 = vsub.f32 1.5707964, %v1924
        %v1941 = vsub.f32 1.5707964, %v1925
        %v1942 = vsub.f32 1.5707964, %v1926
        %v1943 = vsub.f32 1.5707964, %v1927
        %v1944 = vsub.f32 1.5707964, %v1928
        %v1945 = vsub.f32 1.5707964, %v1929
        %v1946 = vsel %vm1530, %v1930, %v1898
        %v1947 = vsel %vm1531, %v1931, %v1899
        %v1948 = vsel %vm1532, %v1932, %v1900
        %v1949 = vsel %vm1533, %v1933, %v1901
        %v1950 = vsel %vm1534, %v1934, %v1902
        %v1951 = vsel %vm1535, %v1935, %v1903
        %v1952 = vsel %vm1536, %v1936, %v1904
        %v1953 = vsel %vm1537, %v1937, %v1905
        %v1954 = vsel %vm1538, %v1938, %v1906
        %v1955 = vsel %vm1539, %v1939, %v1907
        %v1956 = vsel %vm1540, %v1940, %v1908
        %v1957 = vsel %vm1541, %v1941, %v1909
        %v1958 = vsel %vm1542, %v1942, %v1910
        %v1959 = vsel %vm1543, %v1943, %v1911
        %v1960 = vsel %vm1544, %v1944, %v1912
        %v1961 = vsel %vm1545, %v1945, %v1913
        %vm1962 = vcmp.lt.f32.partialorder %v1498, 0.0
        %vm1963 = vcmp.lt.f32.partialorder %v1499, 0.0
        %vm1964 = vcmp.lt.f32.partialorder %v1500, 0.0
        %vm1965 = vcmp.lt.f32.partialorder %v1501, 0.0
        %vm1966 = vcmp.lt.f32.partialorder %v1502, 0.0
        %vm1967 = vcmp.lt.f32.partialorder %v1503, 0.0
        %vm1968 = vcmp.lt.f32.partialorder %v1504, 0.0
        %vm1969 = vcmp.lt.f32.partialorder %v1505, 0.0
        %vm1970 = vcmp.lt.f32.partialorder %v1506, 0.0
        %vm1971 = vcmp.lt.f32.partialorder %v1507, 0.0
        %vm1972 = vcmp.lt.f32.partialorder %v1508, 0.0
        %vm1973 = vcmp.lt.f32.partialorder %v1509, 0.0
        %vm1974 = vcmp.lt.f32.partialorder %v1510, 0.0
        %vm1975 = vcmp.lt.f32.partialorder %v1511, 0.0
        %vm1976 = vcmp.lt.f32.partialorder %v1512, 0.0
        %vm1977 = vcmp.lt.f32.partialorder %v1513, 0.0
        %v1978 = vsub.f32 0.0, %v1946
        %v1979 = vsub.f32 0.0, %v1947
        %v1980 = vsub.f32 0.0, %v1948
        %v1981 = vsub.f32 0.0, %v1949
        %v1982 = vsub.f32 0.0, %v1950
        %v1983 = vsub.f32 0.0, %v1951
        %v1984 = vsub.f32 0.0, %v1952
        %v1985 = vsub.f32 0.0, %v1953
        %v1986 = vsub.f32 0.0, %v1954
        %v1987 = vsub.f32 0.0, %v1955
        %v1988 = vsub.f32 0.0, %v1956
        %v1989 = vsub.f32 0.0, %v1957
        %v1990 = vsub.f32 0.0, %v1958
        %v1991 = vsub.f32 0.0, %v1959
        %v1992 = vsub.f32 0.0, %v1960
        %v1993 = vsub.f32 0.0, %v1961
        %v1994 = vsel %vm1962, %v1978, %v1946
        %v1995 = vsel %vm1963, %v1979, %v1947
        %v1996 = vsel %vm1964, %v1980, %v1948
        %v1997 = vsel %vm1965, %v1981, %v1949
        %v1998 = vsel %vm1966, %v1982, %v1950
        %v1999 = vsel %vm1967, %v1983, %v1951
        %v2000 = vsel %vm1968, %v1984, %v1952
        %v2001 = vsel %vm1969, %v1985, %v1953
        %v2002 = vsel %vm1970, %v1986, %v1954
        %v2003 = vsel %vm1971, %v1987, %v1955
        %v2004 = vsel %vm1972, %v1988, %v1956
        %v2005 = vsel %vm1973, %v1989, %v1957
        %v2006 = vsel %vm1974, %v1990, %v1958
        %v2007 = vsel %vm1975, %v1991, %v1959
        %v2008 = vsel %vm1976, %v1992, %v1960
        %v2009 = vsel %vm1977, %v1993, %v1961
        %v2010 = vsub.f32 1.5707964, %v1994
        %v2011 = vsub.f32 1.5707964, %v1995
        %v2012 = vsub.f32 1.5707964, %v1996
        %v2013 = vsub.f32 1.5707964, %v1997
        %v2014 = vsub.f32 1.5707964, %v1998
        %v2015 = vsub.f32 1.5707964, %v1999
        %v2016 = vsub.f32 1.5707964, %v2000
        %v2017 = vsub.f32 1.5707964, %v2001
        %v2018 = vsub.f32 1.5707964, %v2002
        %v2019 = vsub.f32 1.5707964, %v2003
        %v2020 = vsub.f32 1.5707964, %v2004
        %v2021 = vsub.f32 1.5707964, %v2005
        %v2022 = vsub.f32 1.5707964, %v2006
        %v2023 = vsub.f32 1.5707964, %v2007
        %v2024 = vsub.f32 1.5707964, %v2008
        %v2025 = vsub.f32 1.5707964, %v2009
        %v2026 = vsub.f32 %v2010, 1.22
        %v2027 = vsub.f32 %v2011, 1.22
        %v2028 = vsub.f32 %v2012, 1.22
        %v2029 = vsub.f32 %v2013, 1.22
        %v2030 = vsub.f32 %v2014, 1.22
        %v2031 = vsub.f32 %v2015, 1.22
        %v2032 = vsub.f32 %v2016, 1.22
        %v2033 = vsub.f32 %v2017, 1.22
        %v2034 = vsub.f32 %v2018, 1.22
        %v2035 = vsub.f32 %v2019, 1.22
        %v2036 = vsub.f32 %v2020, 1.22
        %v2037 = vsub.f32 %v2021, 1.22
        %v2038 = vsub.f32 %v2022, 1.22
        %v2039 = vsub.f32 %v2023, 1.22
        %v2040 = vsub.f32 %v2024, 1.22
        %v2041 = vsub.f32 %v2025, 1.22
        %v2042 = vmul.f32 %v2026, 80.0
        %v2043 = vmul.f32 %v2027, 80.0
        %v2044 = vmul.f32 %v2028, 80.0
        %v2045 = vmul.f32 %v2029, 80.0
        %v2046 = vmul.f32 %v2030, 80.0
        %v2047 = vmul.f32 %v2031, 80.0
        %v2048 = vmul.f32 %v2032, 80.0
        %v2049 = vmul.f32 %v2033, 80.0
        %v2050 = vmul.f32 %v2034, 80.0
        %v2051 = vmul.f32 %v2035, 80.0
        %v2052 = vmul.f32 %v2036, 80.0
        %v2053 = vmul.f32 %v2037, 80.0
        %v2054 = vmul.f32 %v2038, 80.0
        %v2055 = vmul.f32 %v2039, 80.0
        %v2056 = vmul.f32 %v2040, 80.0
        %v2057 = vmul.f32 %v2041, 80.0
        %v2058 = vmin.f32 %v2042, 30.0
        %v2059 = vmin.f32 %v2043, 30.0
        %v2060 = vmin.f32 %v2044, 30.0
        %v2061 = vmin.f32 %v2045, 30.0
        %v2062 = vmin.f32 %v2046, 30.0
        %v2063 = vmin.f32 %v2047, 30.0
        %v2064 = vmin.f32 %v2048, 30.0
        %v2065 = vmin.f32 %v2049, 30.0
        %v2066 = vmin.f32 %v2050, 30.0
        %v2067 = vmin.f32 %v2051, 30.0
        %v2068 = vmin.f32 %v2052, 30.0
        %v2069 = vmin.f32 %v2053, 30.0
        %v2070 = vmin.f32 %v2054, 30.0
        %v2071 = vmin.f32 %v2055, 30.0
        %v2072 = vmin.f32 %v2056, 30.0
        %v2073 = vmin.f32 %v2057, 30.0
        %v2074 = vmul.f32 %v2058, 1.442695
        %v2075 = vpow.pop %v2074
        %v2076 = vmul.f32 %v2059, 1.442695
        %v2077 = vpow.pop %v2076
        %v2078 = vmul.f32 %v2060, 1.442695
        %v2079 = vpow.pop %v2078
        %v2080 = vmul.f32 %v2061, 1.442695
        %v2081 = vpow.pop %v2080
        %v2082 = vmul.f32 %v2062, 1.442695
        %v2083 = vpow.pop %v2082
        %v2084 = vmul.f32 %v2063, 1.442695
        %v2085 = vpow.pop %v2084
        %v2086 = vmul.f32 %v2064, 1.442695
        %v2087 = vpow.pop %v2086
        %v2088 = vmul.f32 %v2065, 1.442695
        %v2089 = vpow.pop %v2088
        %v2090 = vmul.f32 %v2066, 1.442695
        %v2091 = vpow.pop %v2090
        %v2092 = vmul.f32 %v2067, 1.442695
        %v2093 = vpow.pop %v2092
        %v2094 = vmul.f32 %v2068, 1.442695
        %v2095 = vpow.pop %v2094
        %v2096 = vmul.f32 %v2069, 1.442695
        %v2097 = vpow.pop %v2096
        %v2098 = vmul.f32 %v2070, 1.442695
        %v2099 = vpow.pop %v2098
        %v2100 = vmul.f32 %v2071, 1.442695
        %v2101 = vpow.pop %v2100
        %v2102 = vmul.f32 %v2072, 1.442695
        %v2103 = vpow.pop %v2102
        %v2104 = vmul.f32 %v2073, 1.442695
        %v2105 = vpow.pop %v2104
        %v2106 = vadd.f32 %v2075, 1.0
        %v2107 = vadd.f32 %v2077, 1.0
        %v2108 = vadd.f32 %v2079, 1.0
        %v2109 = vadd.f32 %v2081, 1.0
        %v2110 = vadd.f32 %v2083, 1.0
        %v2111 = vadd.f32 %v2085, 1.0
        %v2112 = vadd.f32 %v2087, 1.0
        %v2113 = vadd.f32 %v2089, 1.0
        %v2114 = vadd.f32 %v2091, 1.0
        %v2115 = vadd.f32 %v2093, 1.0
        %v2116 = vadd.f32 %v2095, 1.0
        %v2117 = vadd.f32 %v2097, 1.0
        %v2118 = vadd.f32 %v2099, 1.0
        %v2119 = vadd.f32 %v2101, 1.0
        %v2120 = vadd.f32 %v2103, 1.0
        %v2121 = vadd.f32 %v2105, 1.0
        %v2122 = vrcp.pop %v2106
        %v2123 = vrcp.pop %v2107
        %v2124 = vrcp.pop %v2108
        %v2125 = vrcp.pop %v2109
        %v2126 = vrcp.pop %v2110
        %v2127 = vrcp.pop %v2111
        %v2128 = vrcp.pop %v2112
        %v2129 = vrcp.pop %v2113
        %v2130 = vrcp.pop %v2114
        %v2131 = vrcp.pop %v2115
        %v2132 = vrcp.pop %v2116
        %v2133 = vrcp.pop %v2117
        %v2134 = vrcp.pop %v2118
        %v2135 = vrcp.pop %v2119
        %v2136 = vrcp.pop %v2120
        %v2137 = vrcp.pop %v2121
        %v2138 = vmul.f32 %v2122, %v1450
        %v2139 = vmul.f32 %v2123, %v1451
        %v2140 = vmul.f32 %v2124, %v1452
        %v2141 = vmul.f32 %v2125, %v1453
        %v2142 = vmul.f32 %v2126, %v1454
        %v2143 = vmul.f32 %v2127, %v1455
        %v2144 = vmul.f32 %v2128, %v1456
        %v2145 = vmul.f32 %v2129, %v1457
        %v2146 = vmul.f32 %v2130, %v1458
        %v2147 = vmul.f32 %v2131, %v1459
        %v2148 = vmul.f32 %v2132, %v1460
        %v2149 = vmul.f32 %v2133, %v1461
        %v2150 = vmul.f32 %v2134, %v1462
        %v2151 = vmul.f32 %v2135, %v1463
        %v2152 = vmul.f32 %v2136, %v1464
        %v2153 = vmul.f32 %v2137, %v1465
        %v2154 = vld [vmem:[#allocation3] sm:$0xff]
        %v2155 = vld [vmem:[#allocation4] sm:$0xff]
        %v2156 = vld [vmem:[#allocation5] sm:$0xff]
        %v2157 = vadd.f32 %v2154, %v1466
        %v2158 = vadd.f32 %v2155, %v2138
        %v2159 = vadd.f32 %v2156, %v1450
        %v2160 = vadd.f32 %v2157, %v1467
        %v2161 = vadd.f32 %v2158, %v2139
        %v2162 = vadd.f32 %v2159, %v1451
        %v2163 = vadd.f32 %v2160, %v1468
        %v2164 = vadd.f32 %v2161, %v2140
        %v2165 = vadd.f32 %v2162, %v1452
        %v2166 = vadd.f32 %v2163, %v1469
        %v2167 = vadd.f32 %v2164, %v2141
        %v2168 = vadd.f32 %v2165, %v1453
        %v2169 = vadd.f32 %v2166, %v1470
        %v2170 = vadd.f32 %v2167, %v2142
        %v2171 = vadd.f32 %v2168, %v1454
        %v2172 = vadd.f32 %v2169, %v1471
        %v2173 = vadd.f32 %v2170, %v2143
        %v2174 = vadd.f32 %v2171, %v1455
        %v2175 = vadd.f32 %v2172, %v1472
        %v2176 = vadd.f32 %v2173, %v2144
        %v2177 = vadd.f32 %v2174, %v1456
        %v2178 = vadd.f32 %v2175, %v1473
        %v2179 = vadd.f32 %v2176, %v2145
        %v2180 = vadd.f32 %v2177, %v1457
        %v2181 = vadd.f32 %v2178, %v1474
        %v2182 = vadd.f32 %v2179, %v2146
        %v2183 = vadd.f32 %v2180, %v1458
        %v2184 = vadd.f32 %v2181, %v1475
        %v2185 = vadd.f32 %v2182, %v2147
        %v2186 = vadd.f32 %v2183, %v1459
        %v2187 = vadd.f32 %v2184, %v1476
        %v2188 = vadd.f32 %v2185, %v2148
        %v2189 = vadd.f32 %v2186, %v1460
        %v2190 = vadd.f32 %v2187, %v1477
        %v2191 = vadd.f32 %v2188, %v2149
        %v2192 = vadd.f32 %v2189, %v1461
        %v2193 = vadd.f32 %v2190, %v1478
        %v2194 = vadd.f32 %v2191, %v2150
        %v2195 = vadd.f32 %v2192, %v1462
        %v2196 = vadd.f32 %v2193, %v1479
        %v2197 = vadd.f32 %v2194, %v2151
        %v2198 = vadd.f32 %v2195, %v1463
        %v2199 = vadd.f32 %v2196, %v1480
        %v2200 = vadd.f32 %v2197, %v2152
        %v2201 = vadd.f32 %v2198, %v1464
        %v2202 = vadd.f32 %v2199, %v1481
        %v2203 = vadd.f32 %v2200, %v2153
        %v2204 = vadd.f32 %v2201, %v1465
        %2205 = vst [vmem:[#allocation3] sm:$0xff] %v2202
        %2206 = vst [vmem:[#allocation4] sm:$0xff] %v2203
        %2207 = vst [vmem:[#allocation5] sm:$0xff] %v2204
        // Predicated region
        $region37: #{sface_forward.1} parent=31 // pred_check
          %p2208 = pneg %p261
        $region38: #{sface_forward.1} parent=31 // pred_check_branch
          %2210 = sbr.rel (%p2208) target = $region40
        $region39: #{sface_forward.1} parent=31 // pred_region
          %v2211 = vld [vmem:[#allocation3] sm:$0xff]
          %2212 = vadd.xlane.f32.xlu0 %v2211
          %v2213 = vpop.xlane.xlu0 %2212
          %v2214 = vld [vmem:[#allocation4] sm:$0xff]
          %2215 = vadd.xlane.f32.xlu0 %v2214
          %v2216 = vpop.xlane.xlu0 %2215
          %v2217 = vmul.f32 %v2216, 64.0
          %v2218 = vld [vmem:[#allocation5] sm:$0xff]
          %2219 = vadd.xlane.f32.xlu0 %v2218
          %v2220 = vpop.xlane.xlu0 %2219
          %v2221 = vmax.f32 %v2213, -1.0
          %v2222 = vmin.f32 %v2221, 1.0
          %v2223 = vand.u32 2147483647, %v2222
          %vm2224 = vcmp.gt.f32.partialorder %v2223, 0.5
          %v2225 = vsub.f32 1.0, %v2223
          %v2226 = vmul.f32 %v2225, 0.5
          %v2227 = vmul.f32 %v2223, %v2223
          %v2228 = vsel %vm2224, %v2226, %v2227
          %v2229 = vrsqrt.pop %v2228
          %v2230 = vmul.f32 %v2228, %v2229
          %vm2231 = vcmp.eq.f32.partialorder %v2228, inf
          %v2232 = vsel %vm2231, %v2228, %v2230
          %vm2233 = vcmp.eq.f32.partialorder %v2228, 0.0
          %v2234 = vand.u32 %v2228, 2147483648
          %v2235 = vsel %vm2233, %v2234, %v2232
          %v2236 = vsel %vm2224, %v2235, %v2223
          %v2237 = vmul.f32 %v2228, 0.0421632
          %v2238 = vadd.f32 %v2237, 0.024181312
          %v2239 = vmul.f32 %v2238, %v2228
          %v2240 = vadd.f32 %v2239, 0.045470025
          %v2241 = vmul.f32 %v2240, %v2228
          %v2242 = vadd.f32 %v2241, 0.074953005
          %v2243 = vmul.f32 %v2242, %v2228
          %v2244 = vadd.f32 %v2243, 0.16666752
          %v2245 = vmul.f32 %v2236, %v2228
          %v2246 = vmul.f32 %v2245, %v2244
          %v2247 = vadd.f32 %v2236, %v2246
          %v2248 = vmul.f32 %v2247, 2.0
          %v2249 = vsub.f32 1.5707964, %v2248
          %v2250 = vsel %vm2224, %v2249, %v2247
          %vm2251 = vcmp.lt.f32.partialorder %v2222, 0.0
          %v2252 = vsub.f32 0.0, %v2250
          %v2253 = vsel %vm2251, %v2252, %v2250
          %v2254 = vsub.f32 1.5707964, %v2253
          %v2255 = vsub.f32 %v2254, 0.8
          %v2256 = vmul.f32 %v2255, -80.0
          %v2257 = vmul.f32 %v2256, 1.442695
          %v2258 = vpow.pop %v2257
          %v2259 = vadd.f32 %v2258, 1.0
          %v2260 = vrcp.pop %v2259
          %v2261 = vmul.f32 1.0, %v2260
          %v2262 = vsub.f32 0.0, %v2261
          %v2263 = vmul.f32 %v2213, 64.0
          %v2264 = vmul.f32 %v2262, %v2263
          %vm2265 = vcmp.eq.s32.totalorder %v1396, 0
          %v2266 = vsel %vm2265, %v2264, 0.0
          %vm2267 = vcmp.eq.s32.totalorder %v1396, 1
          %v2268 = vsel %vm2267, %v2217, 0.0
          %v2269 = vadd.f32 %v2266, %v2268
          %vm2270 = vcmp.eq.s32.totalorder %v1396, 2
          %v2271 = vsel %vm2270, %v2213, 0.0
          %v2272 = vadd.f32 %v2269, %v2271
          %vm2273 = vcmp.eq.s32.totalorder %v1396, 3
          %v2274 = vsel %vm2273, %v2220, 0.0
          %v2275 = vadd.f32 %v2272, %v2274
          %2276 = vst [vmem:[%s260] sm:$0xff] %v2275
        $region40: #{sface_forward.1} parent=31 // pred_fallthru
          _
        %s2277 = sand.u32 %s119, 1
        %s2278 = scalar_lea.sflag [#allocation7], %s2277
        %s2279 = sand.u32 %s119, 1
        %s2280 = smul.addr %s2279, 128
        %s2281 = scalar_lea.vmem [#allocation6], %s2280
        %p2282 = scmp.lt.s32.totalorder %s23, 1
        %s2283 = scalar_select %p2282, %s23, 1
        %s2284 = smul.addr %s2283, 8
        %s2285 = scalar_lea.vmem %s4, %s2284
        // Predicated region
        $region41: #{sface_forward.1} parent=31 // pred_check
          %p2286 = pneg %p129
        $region42: #{sface_forward.1} parent=31 // pred_check_branch
          %2288 = sbr.rel (%p2286) target = $region44
        $region43: #{sface_forward.1} parent=31 // pred_region
          %s2289 = smul.u32 16, %s24
          %s2291 = ssub.s32 2048, 2048
          %2292 = vsyncadd %s2278, %s2291
          %s2293 = smul.addr %s23, 16
          %s2294 = sadd.s32 %s2289, %s2293
          %s2295 = smul.addr %s2294, 128
          %s2296 = scalar_lea.hbm %s3, %s2295
          %s2298 = sshll.u32 %s2281, 4
          %s2299 = int_to_ptr.vmem [resolvable:$true] %s2298
          %2301 = dma.vmem_to_hbm [thread:$0]  %s2299, 2048, %s2296, %s2278
        $region44: #{sface_forward.1} parent=31 // pred_fallthru
          _
        // Predicated region
        $region45: #{sface_forward.1} parent=31 // pred_check
          %p2302 = pneg %p155
        $region46: #{sface_forward.1} parent=31 // pred_check_branch
          %2304 = sbr.rel (%p2302) target = $region48
        $region47: #{sface_forward.1} parent=31 // pred_region
          _
        $region48: #{sface_forward.1} parent=31 // pred_fallthru
          _
      $region32: #{sface_forward.1} parent=5 // pred_fallthru
        _
      %p2305 = scmp.le.s32.totalorder 2, %s14
      // Predicated region
      $region49: #{sface_forward.1} parent=5 // pred_check
        %p2306 = pneg %p2305
      $region50: #{sface_forward.1} parent=5 // pred_check_branch
        %2308 = sbr.rel (%p2306) target = $region52
      $region51: #{sface_forward.1} parent=5 // pred_region
        %s2309 = ssub.s32 %s14, 2
        // Predicated region
        $region53: #{sface_forward.1} parent=51 // pred_check
          %p2310 = pneg %p135
        $region54: #{sface_forward.1} parent=51 // pred_check_branch
          %2312 = sbr.rel (%p2310) target = $region56
        $region55: #{sface_forward.1} parent=51 // pred_region
          %s2313 = sand.u32 %s120, 1
          %s2314 = scalar_lea.sflag [#allocation7], %s2313
          %s2315 = sand.u32 %s120, 1
          %s2316 = smul.addr %s2315, 128
          %s2317 = scalar_lea.vmem [#allocation6], %s2316
          %2318 = dma.done %s2314, 2048
        $region56: #{sface_forward.1} parent=51 // pred_fallthru
          _
        // Predicated region
        $region57: #{sface_forward.1} parent=51 // pred_check
          %p2319 = pneg %p161
        $region58: #{sface_forward.1} parent=51 // pred_check_branch
          %2321 = sbr.rel (%p2319) target = $region60
        $region59: #{sface_forward.1} parent=51 // pred_region
          %p2322 = scmp.lt.s32.totalorder %s25, 1
          %s2323 = scalar_select %p2322, %s25, 1
          %s2324 = smul.addr %s2323, 8
          %s2325 = scalar_lea.vmem %s4, %s2324
        $region60: #{sface_forward.1} parent=51 // pred_fallthru
          _
      $region52: #{sface_forward.1} parent=5 // pred_fallthru
        _
    $region6: #{sface_forward.1} parent=1 // loop_footer
      %s18 = sadd.s32 1, %s14
    $region7: #{sface_forward.1} parent=1 // loop_footer_branch
      %13 = sbr.rel target = $region3
    $region8: #{sface_forward.1} parent=1 // loop_exit
      _
    %2326 = vsyncpa [#allocation7], 1
    %s2327 = scalar_lea.sflag [#allocation7], 1
    %2328 = vsyncpa %s2327, 1

</llo_original>
